<compile_context>
chip_gen: v7x
topology: tpu7x:2x2x1
jax: 0.10.0
libtpu: 0.0.40
codegen_flags: <defaults>
</compile_context>

<pallas_src>
import functools
import math

import jax
import jax.numpy as jnp
from jax.experimental import pallas as pl
from jax.experimental.pallas import tpu as pltpu


def t2_mha_kernel(xq_ref, xk_ref, xv_ref, wq_ref, wk_ref, wv_ref, o_ref,
                  *, bd_tile, seq_len, n_heads, d_k, d_v, scale):
    T = seq_len

    # Residual / LayerNorm inputs stay in f32.
    xq = xq_ref[...]                                  # (bd_tile*T, d_model) f32
    xk = xk_ref[...]
    xv = xv_ref[...]

    # One wide MXU matmul per projection (M = bd_tile*T). bf16 operands, f32 acc.
    q_all = jnp.dot(xq.astype(jnp.bfloat16), wq_ref[...],
                    preferred_element_type=jnp.float32)   # (bd_tile*T, H*d_k)
    k_all = jnp.dot(xk.astype(jnp.bfloat16), wk_ref[...],
                    preferred_element_type=jnp.float32)   # (bd_tile*T, H*d_k)
    v_all = jnp.dot(xv.astype(jnp.bfloat16), wv_ref[...],
                    preferred_element_type=jnp.float32)   # (bd_tile*T, H*d_v)

    # Static unroll over samples in this block and heads (tiny at these shapes).
    for b in range(bd_tile):
        r0, r1 = b * T, (b + 1) * T
        res = xq[r0:r1, :]                               # (T, d_model) f32 residual
        head_outs = []
        for h in range(n_heads):
            q_h = q_all[r0:r1, h * d_k:(h + 1) * d_k]    # (T, d_k)
            k_h = k_all[r0:r1, h * d_k:(h + 1) * d_k]    # (T, d_k)
            v_h = v_all[r0:r1, h * d_v:(h + 1) * d_v]    # (T, d_v)

            # scores[i, j] = <q_i, k_j> / sqrt(d_k)   (A @ B^T form)
            s = jax.lax.dot_general(q_h.astype(jnp.bfloat16),
                                    k_h.astype(jnp.bfloat16),
                                    (((1,), (1,)), ((), ())),
                                    preferred_element_type=jnp.float32) * scale

            # PyTorch Softmax(dim=3) on the 5-D scores = the *query* axis,
            # i.e. axis 0 of this (Tq, Tk) tile.
            s = s - jnp.max(s, axis=0, keepdims=True)
            e = jnp.exp(s)
            attn = e * pl.reciprocal(jnp.sum(e, axis=0, keepdims=True), approx=True)

            ctx = jnp.dot(attn.astype(jnp.bfloat16), v_h.astype(jnp.bfloat16),
                          preferred_element_type=jnp.float32)    # (T, d_v)

            # residual add (d_v == d_model) + LayerNorm(d_model): gamma=1, beta=0, eps=1e-5
            y = ctx + res
            mu = jnp.mean(y, axis=-1, keepdims=True)
            var = jnp.mean(jnp.square(y - mu), axis=-1, keepdims=True)
            head_outs.append((y - mu) * jax.lax.rsqrt(var + 1e-5))

        # Lane-dense store: (T, n_heads*d_model) slab per sample (128 lanes here).
        o_ref[r0:r1, :] = jnp.concatenate(head_outs, axis=-1).astype(o_ref.dtype)


def _pick_num_blocks(BD, T):
    # Two balanced steps so v7x's second TensorCore gets work; fall back to one
    # step if the split would violate the (8, 128) sublane constraint.
    if BD >= 2 and BD % 2 == 0 and ((BD // 2) * T) % 8 == 0:
        return 2
    return 1


def t2_multi_head_attention(input_Q, input_K, input_V, attn_mask,
                            w_q, w_k, w_v, *, num_of_d, n_heads, d_k, d_v):
    """
    input_Q/K/V: (B, num_of_d, T, d_model)
    w_q, w_k:    (d_model, n_heads * d_k)
    w_v:         (d_model, n_heads * d_v)   with d_v == d_model
    returns:     (B, num_of_d, n_heads, T, d_model)
    """
    if attn_mask is not None:
        # TODO(synk): masked_fill_ path (attn_mask) not implemented; module is used with attn_mask=None.
        raise NotImplementedError("attn_mask is not supported by this kernel")

    B, D, T, d_model = input_Q.shape
    assert D == num_of_d
    assert d_v == d_model, "residual add in the PyTorch forward requires d_v == d_model"

    BD = B * D
    num_blocks = _pick_num_blocks(BD, T)
    bd_tile = BD // num_blocks
    rows_per_block = bd_tile * T

    # Contiguous (free) reshapes only — no wrapper-side transposes on inputs.
    xq = input_Q.reshape(BD * T, d_model)
    xk = input_K.reshape(BD * T, d_model)
    xv = input_V.reshape(BD * T, d_model)

    # bf16 weights: halves weight DMA bytes and feeds the MXU at its native rate.
    wq_b = w_q.astype(jnp.bfloat16)
    wk_b = w_k.astype(jnp.bfloat16)
    wv_b = w_v.astype(jnp.bfloat16)

    kernel = functools.partial(t2_mha_kernel, bd_tile=bd_tile, seq_len=T,
                               n_heads=n_heads, d_k=d_k, d_v=d_v,
                               scale=1.0 / math.sqrt(d_k))

    out = pl.pallas_call(
        kernel,
        out_shape=jax.ShapeDtypeStruct((BD * T, n_heads * d_model), jnp.float32),
        grid_spec=pltpu.PrefetchScalarGridSpec(
            num_scalar_prefetch=0,
            grid=(num_blocks,),
            in_specs=[
                pl.BlockSpec((rows_per_block, d_model), lambda i: (i, 0)),       # x_q
                pl.BlockSpec((rows_per_block, d_model), lambda i: (i, 0)),       # x_k
                pl.BlockSpec((rows_per_block, d_model), lambda i: (i, 0)),       # x_v
                pl.BlockSpec((d_model, n_heads * d_k), lambda i: (0, 0)),        # W_Q
                pl.BlockSpec((d_model, n_heads * d_k), lambda i: (0, 0)),        # W_K
                pl.BlockSpec((d_model, n_heads * d_v), lambda i: (0, 0)),        # W_V
            ],
            out_specs=pl.BlockSpec((rows_per_block, n_heads * d_model),
                                   lambda i: (i, 0)),
        ),
        compiler_params=pltpu.CompilerParams(
            dimension_semantics=("parallel",)),
    )(xq, xk, xv, wq_b, wk_b, wv_b)

    # (BD*T, H*d_model) -> (B, D, T, H, d_model) -> (B, D, H, T, d_model).
    # The (T, H) axis swap is done once here, wrapper-side, as the review suggests.
    out = out.reshape(B, D, T, n_heads, d_model)
    return jnp.transpose(out, (0, 1, 3, 2, 4))


def _reference(input_Q, input_K, input_V, w_q, w_k, w_v,
               *, num_of_d, n_heads, d_k, d_v):
    """Pure-JAX (all-f32) replica of the PyTorch forward, for verification."""
    B, D, T, d_model = input_Q.shape

    def proj(x, w, d):
        y = jnp.einsum('bdtc,co->bdto', x, w)                     # Linear, no bias
        y = y.reshape(B, num_of_d, -1, n_heads, d)                # .view(...)
        return jnp.transpose(y, (0, 1, 3, 2, 4))                  # .transpose(2, 3)

    Q = proj(input_Q, w_q, d_k)                                   # (B, D, H, T, d_k)
    K = proj(input_K, w_k, d_k)
    V = proj(input_V, w_v, d_v)

    scores = jnp.einsum('bdhik,bdhjk->bdhij', Q, K) / math.sqrt(d_k)
    attn = jax.nn.softmax(scores, axis=3)                         # dim=3 (query axis)
    context = jnp.einsum('bdhij,bdhjv->bdhiv', attn, V)           # (B, D, H, T, d_v)

    mr = input_Q[:, :, None, :, :]                                # unsqueeze(2).repeat -> broadcast
    y = context + mr
    mu = jnp.mean(y, axis=-1, keepdims=True)
    var = jnp.mean(jnp.square(y - mu), axis=-1, keepdims=True)
    return (y - mu) / jnp.sqrt(var + 1e-5)                        # LayerNorm, gamma=1 beta=0


if __name__ == "__main__":
    # Small deterministic shapes consistent with the module.
    B, num_of_d, T = 2, 3, 8
    d_model, n_heads, d_k = 32, 4, 8
    d_v = d_model   # required by the residual add in the PyTorch forward

    key = jax.random.PRNGKey(0)
    k1, k2, k3, k4, k5, k6 = jax.random.split(key, 6)

    input_Q = jax.random.normal(k1, (B, num_of_d, T, d_model), jnp.float32)
    input_K = jax.random.normal(k2, (B, num_of_d, T, d_model), jnp.float32)
    input_V = jax.random.normal(k3, (B, num_of_d, T, d_model), jnp.float32)

    w_q = 0.1 * jax.random.normal(k4, (d_model, n_heads * d_k), jnp.float32)
    w_k = 0.1 * jax.random.normal(k5, (d_model, n_heads * d_k), jnp.float32)
    w_v = 0.1 * jax.random.normal(k6, (d_model, n_heads * d_v), jnp.float32)

    out = t2_multi_head_attention(input_Q, input_K, input_V, None,
                                  w_q, w_k, w_v,
                                  num_of_d=num_of_d, n_heads=n_heads,
                                  d_k=d_k, d_v=d_v)
    out = jax.block_until_ready(out)

    ref = _reference(input_Q, input_K, input_V, w_q, w_k, w_v,
                     num_of_d=num_of_d, n_heads=n_heads, d_k=d_k, d_v=d_v)

    assert out.shape == (B, num_of_d, n_heads, T, d_model)
    # Tolerance accounts for bf16 MXU operands + approx reciprocal (f32 accumulation
    # and f32 softmax / LayerNorm math are preserved).
    max_err = float(jnp.max(jnp.abs(out - ref)))
    assert jnp.allclose(out, ref, atol=3e-2, rtol=3e-2), max_err

    print("KERNEL_OK")
</pallas_src>

<mosaic_0001>
module attributes {stable_mosaic.version = 11 : i64} {
  func.func @t2_mha_kernel(%arg0: i32, %arg1: memref<24x32xf32, #tpu.memory_space<vmem>>, %arg2: memref<24x32xf32, #tpu.memory_space<vmem>>, %arg3: memref<24x32xf32, #tpu.memory_space<vmem>>, %arg4: memref<32x32xbf16, #tpu.memory_space<vmem>>, %arg5: memref<32x32xbf16, #tpu.memory_space<vmem>>, %arg6: memref<32x128xbf16, #tpu.memory_space<vmem>>, %arg7: memref<24x128xf32, #tpu.memory_space<vmem>>) attributes {dimension_semantics = [#tpu.dimension_semantics<parallel>], iteration_bounds = array<i64: 2>, scalar_prefetch = 0 : i64, scratch_operands = 0 : i64, tpu.core_type = #tpu.core_type<tc>, window_params = [{transform_indices = @transform_0, window_bounds = array<i64: 24, 32>}, {transform_indices = @transform_1, window_bounds = array<i64: 24, 32>}, {transform_indices = @transform_2, window_bounds = array<i64: 24, 32>}, {pipeline_mode = #tpu.pipeline_mode<synchronous>, transform_indices = @transform_3, window_bounds = array<i64: 32, 32>}, {pipeline_mode = #tpu.pipeline_mode<synchronous>, transform_indices = @transform_4, window_bounds = array<i64: 32, 32>}, {pipeline_mode = #tpu.pipeline_mode<synchronous>, transform_indices = @transform_5, window_bounds = array<i64: 32, 128>}, {transform_indices = @transform_6, window_bounds = array<i64: 24, 128>}]} {
    %c0 = arith.constant 0 : index
    %c0_0 = arith.constant 0 : index
    %0 = vector.load %arg1[%c0, %c0_0] : memref<24x32xf32, #tpu.memory_space<vmem>>, vector<24x32xf32>
    %c0_1 = arith.constant 0 : index
    %c0_2 = arith.constant 0 : index
    %1 = vector.load %arg2[%c0_1, %c0_2] : memref<24x32xf32, #tpu.memory_space<vmem>>, vector<24x32xf32>
    %c0_3 = arith.constant 0 : index
    %c0_4 = arith.constant 0 : index
    %2 = vector.load %arg3[%c0_3, %c0_4] : memref<24x32xf32, #tpu.memory_space<vmem>>, vector<24x32xf32>
    %3 = arith.truncf %0 : vector<24x32xf32> to vector<24x32xbf16>
    %c0_5 = arith.constant 0 : index
    %c0_6 = arith.constant 0 : index
    %4 = vector.load %arg4[%c0_5, %c0_6] : memref<32x32xbf16, #tpu.memory_space<vmem>>, vector<32x32xbf16>
    %cst = arith.constant dense<0.000000e+00> : vector<24x32xf32>
    %5 = tpu.matmul %3, %4, %cst {dimension_numbers = #tpu.dot_dimension_numbers<[1], [0], [0], [1], [0, 0, 1, 1], [], []>} : vector<24x32xbf16>, vector<32x32xbf16>, vector<24x32xf32> -> vector<24x32xf32>
    %6 = arith.truncf %1 : vector<24x32xf32> to vector<24x32xbf16>
    %c0_7 = arith.constant 0 : index
    %c0_8 = arith.constant 0 : index
    %7 = vector.load %arg5[%c0_7, %c0_8] : memref<32x32xbf16, #tpu.memory_space<vmem>>, vector<32x32xbf16>
    %cst_9 = arith.constant dense<0.000000e+00> : vector<24x32xf32>
    %8 = tpu.matmul %6, %7, %cst_9 {dimension_numbers = #tpu.dot_dimension_numbers<[1], [0], [0], [1], [0, 0, 1, 1], [], []>} : vector<24x32xbf16>, vector<32x32xbf16>, vector<24x32xf32> -> vector<24x32xf32>
    %9 = arith.truncf %2 : vector<24x32xf32> to vector<24x32xbf16>
    %c0_10 = arith.constant 0 : index
    %c0_11 = arith.constant 0 : index
    %10 = vector.load %arg6[%c0_10, %c0_11] : memref<32x128xbf16, #tpu.memory_space<vmem>>, vector<32x128xbf16>
    %cst_12 = arith.constant dense<0.000000e+00> : vector<24x128xf32>
    %11 = tpu.matmul %9, %10, %cst_12 {dimension_numbers = #tpu.dot_dimension_numbers<[1], [0], [0], [1], [0, 0, 1, 1], [], []>} : vector<24x32xbf16>, vector<32x128xbf16>, vector<24x128xf32> -> vector<24x128xf32>
    %12 = vector.extract_strided_slice %0 {offsets = [0, 0], sizes = [8, 32], strides = [1, 1]} : vector<24x32xf32> to vector<8x32xf32>
    %13 = vector.extract_strided_slice %5 {offsets = [0, 0], sizes = [8, 8], strides = [1, 1]} : vector<24x32xf32> to vector<8x8xf32>
    %14 = vector.extract_strided_slice %8 {offsets = [0, 0], sizes = [8, 8], strides = [1, 1]} : vector<24x32xf32> to vector<8x8xf32>
    %15 = vector.extract_strided_slice %11 {offsets = [0, 0], sizes = [8, 32], strides = [1, 1]} : vector<24x128xf32> to vector<8x32xf32>
    %16 = arith.truncf %13 : vector<8x8xf32> to vector<8x8xbf16>
    %17 = arith.truncf %14 : vector<8x8xf32> to vector<8x8xbf16>
    %cst_13 = arith.constant dense<0.000000e+00> : vector<8x8xf32>
    %18 = tpu.matmul %16, %17, %cst_13 {dimension_numbers = #tpu.dot_dimension_numbers<[1], [1], [0], [0], [0, 0, 1, 0], [], []>} : vector<8x8xbf16>, vector<8x8xbf16>, vector<8x8xf32> -> vector<8x8xf32>
    %cst_14 = arith.constant 0.353553385 : f32
    %19 = vector.broadcast %cst_14 : f32 to vector<8x8xf32>
    %20 = arith.mulf %18, %19 : vector<8x8xf32>
    %cst_15 = arith.constant dense<0xFF800000> : vector<8xf32>
    %21 = vector.multi_reduction <maximumf>, %20, %cst_15 [0] : vector<8x8xf32> to vector<8xf32>
    %22 = vector.shape_cast %21 : vector<8xf32> to vector<1x8xf32>
    %23 = vector.broadcast %22 : vector<1x8xf32> to vector<8x8xf32>
    %24 = arith.subf %20, %23 : vector<8x8xf32>
    %25 = math.exp %24 : vector<8x8xf32>
    %cst_16 = arith.constant dense<0.000000e+00> : vector<8xf32>
    %26 = vector.multi_reduction <add>, %25, %cst_16 [0] : vector<8x8xf32> to vector<8xf32>
    %27 = vector.shape_cast %26 : vector<8xf32> to vector<1x8xf32>
    %28 = tpu.reciprocal %27 {approx = true} : vector<1x8xf32> -> vector<1x8xf32>
    %29 = vector.broadcast %28 : vector<1x8xf32> to vector<8x8xf32>
    %30 = arith.mulf %25, %29 : vector<8x8xf32>
    %31 = arith.truncf %30 : vector<8x8xf32> to vector<8x8xbf16>
    %32 = arith.truncf %15 : vector<8x32xf32> to vector<8x32xbf16>
    %cst_17 = arith.constant dense<0.000000e+00> : vector<8x32xf32>
    %33 = tpu.matmul %31, %32, %cst_17 {dimension_numbers = #tpu.dot_dimension_numbers<[1], [0], [0], [1], [0, 0, 1, 1], [], []>} : vector<8x8xbf16>, vector<8x32xbf16>, vector<8x32xf32> -> vector<8x32xf32>
    %34 = arith.addf %33, %12 : vector<8x32xf32>
    %cst_18 = arith.constant dense<0.000000e+00> : vector<8xf32>
    %35 = vector.multi_reduction <add>, %34, %cst_18 [1] : vector<8x32xf32> to vector<8xf32>
    %36 = vector.shape_cast %35 : vector<8xf32> to vector<8x1xf32>
    %cst_19 = arith.constant 3.200000e+01 : f32
    %37 = vector.broadcast %cst_19 : f32 to vector<8x1xf32>
    %38 = arith.divf %36, %37 : vector<8x1xf32>
    %39 = vector.broadcast %38 : vector<8x1xf32> to vector<8x32xf32>
    %40 = arith.subf %34, %39 : vector<8x32xf32>
    %41 = arith.mulf %40, %40 : vector<8x32xf32>
    %cst_20 = arith.constant dense<0.000000e+00> : vector<8xf32>
    %42 = vector.multi_reduction <add>, %41, %cst_20 [1] : vector<8x32xf32> to vector<8xf32>
    %43 = vector.shape_cast %42 : vector<8xf32> to vector<8x1xf32>
    %cst_21 = arith.constant 3.200000e+01 : f32
    %44 = vector.broadcast %cst_21 : f32 to vector<8x1xf32>
    %45 = arith.divf %43, %44 : vector<8x1xf32>
    %46 = vector.broadcast %38 : vector<8x1xf32> to vector<8x32xf32>
    %47 = arith.subf %34, %46 : vector<8x32xf32>
    %cst_22 = arith.constant 9.99999974E-6 : f32
    %48 = vector.broadcast %cst_22 : f32 to vector<8x1xf32>
    %49 = arith.addf %45, %48 : vector<8x1xf32>
    %50 = math.rsqrt %49 : vector<8x1xf32>
    %51 = vector.broadcast %50 : vector<8x1xf32> to vector<8x32xf32>
    %52 = arith.mulf %47, %51 : vector<8x32xf32>
    %53 = vector.extract_strided_slice %5 {offsets = [0, 8], sizes = [8, 8], strides = [1, 1]} : vector<24x32xf32> to vector<8x8xf32>
    %54 = vector.extract_strided_slice %8 {offsets = [0, 8], sizes = [8, 8], strides = [1, 1]} : vector<24x32xf32> to vector<8x8xf32>
    %55 = vector.extract_strided_slice %11 {offsets = [0, 32], sizes = [8, 32], strides = [1, 1]} : vector<24x128xf32> to vector<8x32xf32>
    %56 = arith.truncf %53 : vector<8x8xf32> to vector<8x8xbf16>
    %57 = arith.truncf %54 : vector<8x8xf32> to vector<8x8xbf16>
    %cst_23 = arith.constant dense<0.000000e+00> : vector<8x8xf32>
    %58 = tpu.matmul %56, %57, %cst_23 {dimension_numbers = #tpu.dot_dimension_numbers<[1], [1], [0], [0], [0, 0, 1, 0], [], []>} : vector<8x8xbf16>, vector<8x8xbf16>, vector<8x8xf32> -> vector<8x8xf32>
    %cst_24 = arith.constant 0.353553385 : f32
    %59 = vector.broadcast %cst_24 : f32 to vector<8x8xf32>
    %60 = arith.mulf %58, %59 : vector<8x8xf32>
    %cst_25 = arith.constant dense<0xFF800000> : vector<8xf32>
    %61 = vector.multi_reduction <maximumf>, %60, %cst_25 [0] : vector<8x8xf32> to vector<8xf32>
    %62 = vector.shape_cast %61 : vector<8xf32> to vector<1x8xf32>
    %63 = vector.broadcast %62 : vector<1x8xf32> to vector<8x8xf32>
    %64 = arith.subf %60, %63 : vector<8x8xf32>
    %65 = math.exp %64 : vector<8x8xf32>
    %cst_26 = arith.constant dense<0.000000e+00> : vector<8xf32>
    %66 = vector.multi_reduction <add>, %65, %cst_26 [0] : vector<8x8xf32> to vector<8xf32>
    %67 = vector.shape_cast %66 : vector<8xf32> to vector<1x8xf32>
    %68 = tpu.reciprocal %67 {approx = true} : vector<1x8xf32> -> vector<1x8xf32>
    %69 = vector.broadcast %68 : vector<1x8xf32> to vector<8x8xf32>
    %70 = arith.mulf %65, %69 : vector<8x8xf32>
    %71 = arith.truncf %70 : vector<8x8xf32> to vector<8x8xbf16>
    %72 = arith.truncf %55 : vector<8x32xf32> to vector<8x32xbf16>
    %cst_27 = arith.constant dense<0.000000e+00> : vector<8x32xf32>
    %73 = tpu.matmul %71, %72, %cst_27 {dimension_numbers = #tpu.dot_dimension_numbers<[1], [0], [0], [1], [0, 0, 1, 1], [], []>} : vector<8x8xbf16>, vector<8x32xbf16>, vector<8x32xf32> -> vector<8x32xf32>
    %74 = arith.addf %73, %12 : vector<8x32xf32>
    %cst_28 = arith.constant dense<0.000000e+00> : vector<8xf32>
    %75 = vector.multi_reduction <add>, %74, %cst_28 [1] : vector<8x32xf32> to vector<8xf32>
    %76 = vector.shape_cast %75 : vector<8xf32> to vector<8x1xf32>
    %cst_29 = arith.constant 3.200000e+01 : f32
    %77 = vector.broadcast %cst_29 : f32 to vector<8x1xf32>
    %78 = arith.divf %76, %77 : vector<8x1xf32>
    %79 = vector.broadcast %78 : vector<8x1xf32> to vector<8x32xf32>
    %80 = arith.subf %74, %79 : vector<8x32xf32>
    %81 = arith.mulf %80, %80 : vector<8x32xf32>
    %cst_30 = arith.constant dense<0.000000e+00> : vector<8xf32>
    %82 = vector.multi_reduction <add>, %81, %cst_30 [1] : vector<8x32xf32> to vector<8xf32>
    %83 = vector.shape_cast %82 : vector<8xf32> to vector<8x1xf32>
    %cst_31 = arith.constant 3.200000e+01 : f32
    %84 = vector.broadcast %cst_31 : f32 to vector<8x1xf32>
    %85 = arith.divf %83, %84 : vector<8x1xf32>
    %86 = vector.broadcast %78 : vector<8x1xf32> to vector<8x32xf32>
    %87 = arith.subf %74, %86 : vector<8x32xf32>
    %cst_32 = arith.constant 9.99999974E-6 : f32
    %88 = vector.broadcast %cst_32 : f32 to vector<8x1xf32>
    %89 = arith.addf %85, %88 : vector<8x1xf32>
    %90 = math.rsqrt %89 : vector<8x1xf32>
    %91 = vector.broadcast %90 : vector<8x1xf32> to vector<8x32xf32>
    %92 = arith.mulf %87, %91 : vector<8x32xf32>
    %93 = vector.extract_strided_slice %5 {offsets = [0, 16], sizes = [8, 8], strides = [1, 1]} : vector<24x32xf32> to vector<8x8xf32>
    %94 = vector.extract_strided_slice %8 {offsets = [0, 16], sizes = [8, 8], strides = [1, 1]} : vector<24x32xf32> to vector<8x8xf32>
    %95 = vector.extract_strided_slice %11 {offsets = [0, 64], sizes = [8, 32], strides = [1, 1]} : vector<24x128xf32> to vector<8x32xf32>
    %96 = arith.truncf %93 : vector<8x8xf32> to vector<8x8xbf16>
    %97 = arith.truncf %94 : vector<8x8xf32> to vector<8x8xbf16>
    %cst_33 = arith.constant dense<0.000000e+00> : vector<8x8xf32>
    %98 = tpu.matmul %96, %97, %cst_33 {dimension_numbers = #tpu.dot_dimension_numbers<[1], [1], [0], [0], [0, 0, 1, 0], [], []>} : vector<8x8xbf16>, vector<8x8xbf16>, vector<8x8xf32> -> vector<8x8xf32>
    %cst_34 = arith.constant 0.353553385 : f32
    %99 = vector.broadcast %cst_34 : f32 to vector<8x8xf32>
    %100 = arith.mulf %98, %99 : vector<8x8xf32>
    %cst_35 = arith.constant dense<0xFF800000> : vector<8xf32>
    %101 = vector.multi_reduction <maximumf>, %100, %cst_35 [0] : vector<8x8xf32> to vector<8xf32>
    %102 = vector.shape_cast %101 : vector<8xf32> to vector<1x8xf32>
    %103 = vector.broadcast %102 : vector<1x8xf32> to vector<8x8xf32>
    %104 = arith.subf %100, %103 : vector<8x8xf32>
    %105 = math.exp %104 : vector<8x8xf32>
    %cst_36 = arith.constant dense<0.000000e+00> : vector<8xf32>
    %106 = vector.multi_reduction <add>, %105, %cst_36 [0] : vector<8x8xf32> to vector<8xf32>
    %107 = vector.shape_cast %106 : vector<8xf32> to vector<1x8xf32>
    %108 = tpu.reciprocal %107 {approx = true} : vector<1x8xf32> -> vector<1x8xf32>
    %109 = vector.broadcast %108 : vector<1x8xf32> to vector<8x8xf32>
    %110 = arith.mulf %105, %109 : vector<8x8xf32>
    %111 = arith.truncf %110 : vector<8x8xf32> to vector<8x8xbf16>
    %112 = arith.truncf %95 : vector<8x32xf32> to vector<8x32xbf16>
    %cst_37 = arith.constant dense<0.000000e+00> : vector<8x32xf32>
    %113 = tpu.matmul %111, %112, %cst_37 {dimension_numbers = #tpu.dot_dimension_numbers<[1], [0], [0], [1], [0, 0, 1, 1], [], []>} : vector<8x8xbf16>, vector<8x32xbf16>, vector<8x32xf32> -> vector<8x32xf32>
    %114 = arith.addf %113, %12 : vector<8x32xf32>
    %cst_38 = arith.constant dense<0.000000e+00> : vector<8xf32>
    %115 = vector.multi_reduction <add>, %114, %cst_38 [1] : vector<8x32xf32> to vector<8xf32>
    %116 = vector.shape_cast %115 : vector<8xf32> to vector<8x1xf32>
    %cst_39 = arith.constant 3.200000e+01 : f32
    %117 = vector.broadcast %cst_39 : f32 to vector<8x1xf32>
    %118 = arith.divf %116, %117 : vector<8x1xf32>
    %119 = vector.broadcast %118 : vector<8x1xf32> to vector<8x32xf32>
    %120 = arith.subf %114, %119 : vector<8x32xf32>
    %121 = arith.mulf %120, %120 : vector<8x32xf32>
    %cst_40 = arith.constant dense<0.000000e+00> : vector<8xf32>
    %122 = vector.multi_reduction <add>, %121, %cst_40 [1] : vector<8x32xf32> to vector<8xf32>
    %123 = vector.shape_cast %122 : vector<8xf32> to vector<8x1xf32>
    %cst_41 = arith.constant 3.200000e+01 : f32
    %124 = vector.broadcast %cst_41 : f32 to vector<8x1xf32>
    %125 = arith.divf %123, %124 : vector<8x1xf32>
    %126 = vector.broadcast %118 : vector<8x1xf32> to vector<8x32xf32>
    %127 = arith.subf %114, %126 : vector<8x32xf32>
    %cst_42 = arith.constant 9.99999974E-6 : f32
    %128 = vector.broadcast %cst_42 : f32 to vector<8x1xf32>
    %129 = arith.addf %125, %128 : vector<8x1xf32>
    %130 = math.rsqrt %129 : vector<8x1xf32>
    %131 = vector.broadcast %130 : vector<8x1xf32> to vector<8x32xf32>
    %132 = arith.mulf %127, %131 : vector<8x32xf32>
    %133 = vector.extract_strided_slice %5 {offsets = [0, 24], sizes = [8, 8], strides = [1, 1]} : vector<24x32xf32> to vector<8x8xf32>
    %134 = vector.extract_strided_slice %8 {offsets = [0, 24], sizes = [8, 8], strides = [1, 1]} : vector<24x32xf32> to vector<8x8xf32>
    %135 = vector.extract_strided_slice %11 {offsets = [0, 96], sizes = [8, 32], strides = [1, 1]} : vector<24x128xf32> to vector<8x32xf32>
    %136 = arith.truncf %133 : vector<8x8xf32> to vector<8x8xbf16>
    %137 = arith.truncf %134 : vector<8x8xf32> to vector<8x8xbf16>
    %cst_43 = arith.constant dense<0.000000e+00> : vector<8x8xf32>
    %138 = tpu.matmul %136, %137, %cst_43 {dimension_numbers = #tpu.dot_dimension_numbers<[1], [1], [0], [0], [0, 0, 1, 0], [], []>} : vector<8x8xbf16>, vector<8x8xbf16>, vector<8x8xf32> -> vector<8x8xf32>
    %cst_44 = arith.constant 0.353553385 : f32
    %139 = vector.broadcast %cst_44 : f32 to vector<8x8xf32>
    %140 = arith.mulf %138, %139 : vector<8x8xf32>
    %cst_45 = arith.constant dense<0xFF800000> : vector<8xf32>
    %141 = vector.multi_reduction <maximumf>, %140, %cst_45 [0] : vector<8x8xf32> to vector<8xf32>
    %142 = vector.shape_cast %141 : vector<8xf32> to vector<1x8xf32>
    %143 = vector.broadcast %142 : vector<1x8xf32> to vector<8x8xf32>
    %144 = arith.subf %140, %143 : vector<8x8xf32>
    %145 = math.exp %144 : vector<8x8xf32>
    %cst_46 = arith.constant dense<0.000000e+00> : vector<8xf32>
    %146 = vector.multi_reduction <add>, %145, %cst_46 [0] : vector<8x8xf32> to vector<8xf32>
    %147 = vector.shape_cast %146 : vector<8xf32> to vector<1x8xf32>
    %148 = tpu.reciprocal %147 {approx = true} : vector<1x8xf32> -> vector<1x8xf32>
    %149 = vector.broadcast %148 : vector<1x8xf32> to vector<8x8xf32>
    %150 = arith.mulf %145, %149 : vector<8x8xf32>
    %151 = arith.truncf %150 : vector<8x8xf32> to vector<8x8xbf16>
    %152 = arith.truncf %135 : vector<8x32xf32> to vector<8x32xbf16>
    %cst_47 = arith.constant dense<0.000000e+00> : vector<8x32xf32>
    %153 = tpu.matmul %151, %152, %cst_47 {dimension_numbers = #tpu.dot_dimension_numbers<[1], [0], [0], [1], [0, 0, 1, 1], [], []>} : vector<8x8xbf16>, vector<8x32xbf16>, vector<8x32xf32> -> vector<8x32xf32>
    %154 = arith.addf %153, %12 : vector<8x32xf32>
    %cst_48 = arith.constant dense<0.000000e+00> : vector<8xf32>
    %155 = vector.multi_reduction <add>, %154, %cst_48 [1] : vector<8x32xf32> to vector<8xf32>
    %156 = vector.shape_cast %155 : vector<8xf32> to vector<8x1xf32>
    %cst_49 = arith.constant 3.200000e+01 : f32
    %157 = vector.broadcast %cst_49 : f32 to vector<8x1xf32>
    %158 = arith.divf %156, %157 : vector<8x1xf32>
    %159 = vector.broadcast %158 : vector<8x1xf32> to vector<8x32xf32>
    %160 = arith.subf %154, %159 : vector<8x32xf32>
    %161 = arith.mulf %160, %160 : vector<8x32xf32>
    %cst_50 = arith.constant dense<0.000000e+00> : vector<8xf32>
    %162 = vector.multi_reduction <add>, %161, %cst_50 [1] : vector<8x32xf32> to vector<8xf32>
    %163 = vector.shape_cast %162 : vector<8xf32> to vector<8x1xf32>
    %cst_51 = arith.constant 3.200000e+01 : f32
    %164 = vector.broadcast %cst_51 : f32 to vector<8x1xf32>
    %165 = arith.divf %163, %164 : vector<8x1xf32>
    %166 = vector.broadcast %158 : vector<8x1xf32> to vector<8x32xf32>
    %167 = arith.subf %154, %166 : vector<8x32xf32>
    %cst_52 = arith.constant 9.99999974E-6 : f32
    %168 = vector.broadcast %cst_52 : f32 to vector<8x1xf32>
    %169 = arith.addf %165, %168 : vector<8x1xf32>
    %170 = math.rsqrt %169 : vector<8x1xf32>
    %171 = vector.broadcast %170 : vector<8x1xf32> to vector<8x32xf32>
    %172 = arith.mulf %167, %171 : vector<8x32xf32>
    %173 = tpu.concatenate %52, %92, %132, %172 in 1 : vector<8x32xf32>, vector<8x32xf32>, vector<8x32xf32>, vector<8x32xf32> -> vector<8x128xf32>
    %c0_53 = arith.constant 0 : index
    %c0_54 = arith.constant 0 : index
    %174 = vector.load %arg7[%c0_53, %c0_54] : memref<24x128xf32, #tpu.memory_space<vmem>>, vector<8x128xf32>
    tpu.vector_store %arg7[%c0_53, %c0_54], %173 {strides = array<i32>} : memref<24x128xf32, #tpu.memory_space<vmem>>, vector<8x128xf32>,
    %175 = vector.extract_strided_slice %0 {offsets = [8, 0], sizes = [8, 32], strides = [1, 1]} : vector<24x32xf32> to vector<8x32xf32>
    %176 = vector.extract_strided_slice %5 {offsets = [8, 0], sizes = [8, 8], strides = [1, 1]} : vector<24x32xf32> to vector<8x8xf32>
    %177 = vector.extract_strided_slice %8 {offsets = [8, 0], sizes = [8, 8], strides = [1, 1]} : vector<24x32xf32> to vector<8x8xf32>
    %178 = vector.extract_strided_slice %11 {offsets = [8, 0], sizes = [8, 32], strides = [1, 1]} : vector<24x128xf32> to vector<8x32xf32>
    %179 = arith.truncf %176 : vector<8x8xf32> to vector<8x8xbf16>
    %180 = arith.truncf %177 : vector<8x8xf32> to vector<8x8xbf16>
    %cst_55 = arith.constant dense<0.000000e+00> : vector<8x8xf32>
    %181 = tpu.matmul %179, %180, %cst_55 {dimension_numbers = #tpu.dot_dimension_numbers<[1], [1], [0], [0], [0, 0, 1, 0], [], []>} : vector<8x8xbf16>, vector<8x8xbf16>, vector<8x8xf32> -> vector<8x8xf32>
    %cst_56 = arith.constant 0.353553385 : f32
    %182 = vector.broadcast %cst_56 : f32 to vector<8x8xf32>
    %183 = arith.mulf %181, %182 : vector<8x8xf32>
    %cst_57 = arith.constant dense<0xFF800000> : vector<8xf32>
    %184 = vector.multi_reduction <maximumf>, %183, %cst_57 [0] : vector<8x8xf32> to vector<8xf32>
    %185 = vector.shape_cast %184 : vector<8xf32> to vector<1x8xf32>
    %186 = vector.broadcast %185 : vector<1x8xf32> to vector<8x8xf32>
    %187 = arith.subf %183, %186 : vector<8x8xf32>
    %188 = math.exp %187 : vector<8x8xf32>
    %cst_58 = arith.constant dense<0.000000e+00> : vector<8xf32>
    %189 = vector.multi_reduction <add>, %188, %cst_58 [0] : vector<8x8xf32> to vector<8xf32>
    %190 = vector.shape_cast %189 : vector<8xf32> to vector<1x8xf32>
    %191 = tpu.reciprocal %190 {approx = true} : vector<1x8xf32> -> vector<1x8xf32>
    %192 = vector.broadcast %191 : vector<1x8xf32> to vector<8x8xf32>
    %193 = arith.mulf %188, %192 : vector<8x8xf32>
    %194 = arith.truncf %193 : vector<8x8xf32> to vector<8x8xbf16>
    %195 = arith.truncf %178 : vector<8x32xf32> to vector<8x32xbf16>
    %cst_59 = arith.constant dense<0.000000e+00> : vector<8x32xf32>
    %196 = tpu.matmul %194, %195, %cst_59 {dimension_numbers = #tpu.dot_dimension_numbers<[1], [0], [0], [1], [0, 0, 1, 1], [], []>} : vector<8x8xbf16>, vector<8x32xbf16>, vector<8x32xf32> -> vector<8x32xf32>
    %197 = arith.addf %196, %175 : vector<8x32xf32>
    %cst_60 = arith.constant dense<0.000000e+00> : vector<8xf32>
    %198 = vector.multi_reduction <add>, %197, %cst_60 [1] : vector<8x32xf32> to vector<8xf32>
    %199 = vector.shape_cast %198 : vector<8xf32> to vector<8x1xf32>
    %cst_61 = arith.constant 3.200000e+01 : f32
    %200 = vector.broadcast %cst_61 : f32 to vector<8x1xf32>
    %201 = arith.divf %199, %200 : vector<8x1xf32>
    %202 = vector.broadcast %201 : vector<8x1xf32> to vector<8x32xf32>
    %203 = arith.subf %197, %202 : vector<8x32xf32>
    %204 = arith.mulf %203, %203 : vector<8x32xf32>
    %cst_62 = arith.constant dense<0.000000e+00> : vector<8xf32>
    %205 = vector.multi_reduction <add>, %204, %cst_62 [1] : vector<8x32xf32> to vector<8xf32>
    %206 = vector.shape_cast %205 : vector<8xf32> to vector<8x1xf32>
    %cst_63 = arith.constant 3.200000e+01 : f32
    %207 = vector.broadcast %cst_63 : f32 to vector<8x1xf32>
    %208 = arith.divf %206, %207 : vector<8x1xf32>
    %209 = vector.broadcast %201 : vector<8x1xf32> to vector<8x32xf32>
    %210 = arith.subf %197, %209 : vector<8x32xf32>
    %cst_64 = arith.constant 9.99999974E-6 : f32
    %211 = vector.broadcast %cst_64 : f32 to vector<8x1xf32>
    %212 = arith.addf %208, %211 : vector<8x1xf32>
    %213 = math.rsqrt %212 : vector<8x1xf32>
    %214 = vector.broadcast %213 : vector<8x1xf32> to vector<8x32xf32>
    %215 = arith.mulf %210, %214 : vector<8x32xf32>
    %216 = vector.extract_strided_slice %5 {offsets = [8, 8], sizes = [8, 8], strides = [1, 1]} : vector<24x32xf32> to vector<8x8xf32>
    %217 = vector.extract_strided_slice %8 {offsets = [8, 8], sizes = [8, 8], strides = [1, 1]} : vector<24x32xf32> to vector<8x8xf32>
    %218 = vector.extract_strided_slice %11 {offsets = [8, 32], sizes = [8, 32], strides = [1, 1]} : vector<24x128xf32> to vector<8x32xf32>
    %219 = arith.truncf %216 : vector<8x8xf32> to vector<8x8xbf16>
    %220 = arith.truncf %217 : vector<8x8xf32> to vector<8x8xbf16>
    %cst_65 = arith.constant dense<0.000000e+00> : vector<8x8xf32>
    %221 = tpu.matmul %219, %220, %cst_65 {dimension_numbers = #tpu.dot_dimension_numbers<[1], [1], [0], [0], [0, 0, 1, 0], [], []>} : vector<8x8xbf16>, vector<8x8xbf16>, vector<8x8xf32> -> vector<8x8xf32>
    %cst_66 = arith.constant 0.353553385 : f32
    %222 = vector.broadcast %cst_66 : f32 to vector<8x8xf32>
    %223 = arith.mulf %221, %222 : vector<8x8xf32>
    %cst_67 = arith.constant dense<0xFF800000> : vector<8xf32>
    %224 = vector.multi_reduction <maximumf>, %223, %cst_67 [0] : vector<8x8xf32> to vector<8xf32>
    %225 = vector.shape_cast %224 : vector<8xf32> to vector<1x8xf32>
    %226 = vector.broadcast %225 : vector<1x8xf32> to vector<8x8xf32>
    %227 = arith.subf %223, %226 : vector<8x8xf32>
    %228 = math.exp %227 : vector<8x8xf32>
    %cst_68 = arith.constant dense<0.000000e+00> : vector<8xf32>
    %229 = vector.multi_reduction <add>, %228, %cst_68 [0] : vector<8x8xf32> to vector<8xf32>
    %230 = vector.shape_cast %229 : vector<8xf32> to vector<1x8xf32>
    %231 = tpu.reciprocal %230 {approx = true} : vector<1x8xf32> -> vector<1x8xf32>
    %232 = vector.broadcast %231 : vector<1x8xf32> to vector<8x8xf32>
    %233 = arith.mulf %228, %232 : vector<8x8xf32>
    %234 = arith.truncf %233 : vector<8x8xf32> to vector<8x8xbf16>
    %235 = arith.truncf %218 : vector<8x32xf32> to vector<8x32xbf16>
    %cst_69 = arith.constant dense<0.000000e+00> : vector<8x32xf32>
    %236 = tpu.matmul %234, %235, %cst_69 {dimension_numbers = #tpu.dot_dimension_numbers<[1], [0], [0], [1], [0, 0, 1, 1], [], []>} : vector<8x8xbf16>, vector<8x32xbf16>, vector<8x32xf32> -> vector<8x32xf32>
    %237 = arith.addf %236, %175 : vector<8x32xf32>
    %cst_70 = arith.constant dense<0.000000e+00> : vector<8xf32>
    %238 = vector.multi_reduction <add>, %237, %cst_70 [1] : vector<8x32xf32> to vector<8xf32>
    %239 = vector.shape_cast %238 : vector<8xf32> to vector<8x1xf32>
    %cst_71 = arith.constant 3.200000e+01 : f32
    %240 = vector.broadcast %cst_71 : f32 to vector<8x1xf32>
    %241 = arith.divf %239, %240 : vector<8x1xf32>
    %242 = vector.broadcast %241 : vector<8x1xf32> to vector<8x32xf32>
    %243 = arith.subf %237, %242 : vector<8x32xf32>
    %244 = arith.mulf %243, %243 : vector<8x32xf32>
    %cst_72 = arith.constant dense<0.000000e+00> : vector<8xf32>
    %245 = vector.multi_reduction <add>, %244, %cst_72 [1] : vector<8x32xf32> to vector<8xf32>
    %246 = vector.shape_cast %245 : vector<8xf32> to vector<8x1xf32>
    %cst_73 = arith.constant 3.200000e+01 : f32
    %247 = vector.broadcast %cst_73 : f32 to vector<8x1xf32>
    %248 = arith.divf %246, %247 : vector<8x1xf32>
    %249 = vector.broadcast %241 : vector<8x1xf32> to vector<8x32xf32>
    %250 = arith.subf %237, %249 : vector<8x32xf32>
    %cst_74 = arith.constant 9.99999974E-6 : f32
    %251 = vector.broadcast %cst_74 : f32 to vector<8x1xf32>
    %252 = arith.addf %248, %251 : vector<8x1xf32>
    %253 = math.rsqrt %252 : vector<8x1xf32>
    %254 = vector.broadcast %253 : vector<8x1xf32> to vector<8x32xf32>
    %255 = arith.mulf %250, %254 : vector<8x32xf32>
    %256 = vector.extract_strided_slice %5 {offsets = [8, 16], sizes = [8, 8], strides = [1, 1]} : vector<24x32xf32> to vector<8x8xf32>
    %257 = vector.extract_strided_slice %8 {offsets = [8, 16], sizes = [8, 8], strides = [1, 1]} : vector<24x32xf32> to vector<8x8xf32>
    %258 = vector.extract_strided_slice %11 {offsets = [8, 64], sizes = [8, 32], strides = [1, 1]} : vector<24x128xf32> to vector<8x32xf32>
    %259 = arith.truncf %256 : vector<8x8xf32> to vector<8x8xbf16>
    %260 = arith.truncf %257 : vector<8x8xf32> to vector<8x8xbf16>
    %cst_75 = arith.constant dense<0.000000e+00> : vector<8x8xf32>
    %261 = tpu.matmul %259, %260, %cst_75 {dimension_numbers = #tpu.dot_dimension_numbers<[1], [1], [0], [0], [0, 0, 1, 0], [], []>} : vector<8x8xbf16>, vector<8x8xbf16>, vector<8x8xf32> -> vector<8x8xf32>
    %cst_76 = arith.constant 0.353553385 : f32
    %262 = vector.broadcast %cst_76 : f32 to vector<8x8xf32>
    %263 = arith.mulf %261, %262 : vector<8x8xf32>
    %cst_77 = arith.constant dense<0xFF800000> : vector<8xf32>
    %264 = vector.multi_reduction <maximumf>, %263, %cst_77 [0] : vector<8x8xf32> to vector<8xf32>
    %265 = vector.shape_cast %264 : vector<8xf32> to vector<1x8xf32>
    %266 = vector.broadcast %265 : vector<1x8xf32> to vector<8x8xf32>
    %267 = arith.subf %263, %266 : vector<8x8xf32>
    %268 = math.exp %267 : vector<8x8xf32>
    %cst_78 = arith.constant dense<0.000000e+00> : vector<8xf32>
    %269 = vector.multi_reduction <add>, %268, %cst_78 [0] : vector<8x8xf32> to vector<8xf32>
    %270 = vector.shape_cast %269 : vector<8xf32> to vector<1x8xf32>
    %271 = tpu.reciprocal %270 {approx = true} : vector<1x8xf32> -> vector<1x8xf32>
    %272 = vector.broadcast %271 : vector<1x8xf32> to vector<8x8xf32>
    %273 = arith.mulf %268, %272 : vector<8x8xf32>
    %274 = arith.truncf %273 : vector<8x8xf32> to vector<8x8xbf16>
    %275 = arith.truncf %258 : vector<8x32xf32> to vector<8x32xbf16>
    %cst_79 = arith.constant dense<0.000000e+00> : vector<8x32xf32>
    %276 = tpu.matmul %274, %275, %cst_79 {dimension_numbers = #tpu.dot_dimension_numbers<[1], [0], [0], [1], [0, 0, 1, 1], [], []>} : vector<8x8xbf16>, vector<8x32xbf16>, vector<8x32xf32> -> vector<8x32xf32>
    %277 = arith.addf %276, %175 : vector<8x32xf32>
    %cst_80 = arith.constant dense<0.000000e+00> : vector<8xf32>
    %278 = vector.multi_reduction <add>, %277, %cst_80 [1] : vector<8x32xf32> to vector<8xf32>
    %279 = vector.shape_cast %278 : vector<8xf32> to vector<8x1xf32>
    %cst_81 = arith.constant 3.200000e+01 : f32
    %280 = vector.broadcast %cst_81 : f32 to vector<8x1xf32>
    %281 = arith.divf %279, %280 : vector<8x1xf32>
    %282 = vector.broadcast %281 : vector<8x1xf32> to vector<8x32xf32>
    %283 = arith.subf %277, %282 : vector<8x32xf32>
    %284 = arith.mulf %283, %283 : vector<8x32xf32>
    %cst_82 = arith.constant dense<0.000000e+00> : vector<8xf32>
    %285 = vector.multi_reduction <add>, %284, %cst_82 [1] : vector<8x32xf32> to vector<8xf32>
    %286 = vector.shape_cast %285 : vector<8xf32> to vector<8x1xf32>
    %cst_83 = arith.constant 3.200000e+01 : f32
    %287 = vector.broadcast %cst_83 : f32 to vector<8x1xf32>
    %288 = arith.divf %286, %287 : vector<8x1xf32>
    %289 = vector.broadcast %281 : vector<8x1xf32> to vector<8x32xf32>
    %290 = arith.subf %277, %289 : vector<8x32xf32>
    %cst_84 = arith.constant 9.99999974E-6 : f32
    %291 = vector.broadcast %cst_84 : f32 to vector<8x1xf32>
    %292 = arith.addf %288, %291 : vector<8x1xf32>
    %293 = math.rsqrt %292 : vector<8x1xf32>
    %294 = vector.broadcast %293 : vector<8x1xf32> to vector<8x32xf32>
    %295 = arith.mulf %290, %294 : vector<8x32xf32>
    %296 = vector.extract_strided_slice %5 {offsets = [8, 24], sizes = [8, 8], strides = [1, 1]} : vector<24x32xf32> to vector<8x8xf32>
    %297 = vector.extract_strided_slice %8 {offsets = [8, 24], sizes = [8, 8], strides = [1, 1]} : vector<24x32xf32> to vector<8x8xf32>
    %298 = vector.extract_strided_slice %11 {offsets = [8, 96], sizes = [8, 32], strides = [1, 1]} : vector<24x128xf32> to vector<8x32xf32>
    %299 = arith.truncf %296 : vector<8x8xf32> to vector<8x8xbf16>
    %300 = arith.truncf %297 : vector<8x8xf32> to vector<8x8xbf16>
    %cst_85 = arith.constant dense<0.000000e+00> : vector<8x8xf32>
    %301 = tpu.matmul %299, %300, %cst_85 {dimension_numbers = #tpu.dot_dimension_numbers<[1], [1], [0], [0], [0, 0, 1, 0], [], []>} : vector<8x8xbf16>, vector<8x8xbf16>, vector<8x8xf32> -> vector<8x8xf32>
    %cst_86 = arith.constant 0.353553385 : f32
    %302 = vector.broadcast %cst_86 : f32 to vector<8x8xf32>
    %303 = arith.mulf %301, %302 : vector<8x8xf32>
    %cst_87 = arith.constant dense<0xFF800000> : vector<8xf32>
    %304 = vector.multi_reduction <maximumf>, %303, %cst_87 [0] : vector<8x8xf32> to vector<8xf32>
    %305 = vector.shape_cast %304 : vector<8xf32> to vector<1x8xf32>
    %306 = vector.broadcast %305 : vector<1x8xf32> to vector<8x8xf32>
    %307 = arith.subf %303, %306 : vector<8x8xf32>
    %308 = math.exp %307 : vector<8x8xf32>
    %cst_88 = arith.constant dense<0.000000e+00> : vector<8xf32>
    %309 = vector.multi_reduction <add>, %308, %cst_88 [0] : vector<8x8xf32> to vector<8xf32>
    %310 = vector.shape_cast %309 : vector<8xf32> to vector<1x8xf32>
    %311 = tpu.reciprocal %310 {approx = true} : vector<1x8xf32> -> vector<1x8xf32>
    %312 = vector.broadcast %311 : vector<1x8xf32> to vector<8x8xf32>
    %313 = arith.mulf %308, %312 : vector<8x8xf32>
    %314 = arith.truncf %313 : vector<8x8xf32> to vector<8x8xbf16>
    %315 = arith.truncf %298 : vector<8x32xf32> to vector<8x32xbf16>
    %cst_89 = arith.constant dense<0.000000e+00> : vector<8x32xf32>
    %316 = tpu.matmul %314, %315, %cst_89 {dimension_numbers = #tpu.dot_dimension_numbers<[1], [0], [0], [1], [0, 0, 1, 1], [], []>} : vector<8x8xbf16>, vector<8x32xbf16>, vector<8x32xf32> -> vector<8x32xf32>
    %317 = arith.addf %316, %175 : vector<8x32xf32>
    %cst_90 = arith.constant dense<0.000000e+00> : vector<8xf32>
    %318 = vector.multi_reduction <add>, %317, %cst_90 [1] : vector<8x32xf32> to vector<8xf32>
    %319 = vector.shape_cast %318 : vector<8xf32> to vector<8x1xf32>
    %cst_91 = arith.constant 3.200000e+01 : f32
    %320 = vector.broadcast %cst_91 : f32 to vector<8x1xf32>
    %321 = arith.divf %319, %320 : vector<8x1xf32>
    %322 = vector.broadcast %321 : vector<8x1xf32> to vector<8x32xf32>
    %323 = arith.subf %317, %322 : vector<8x32xf32>
    %324 = arith.mulf %323, %323 : vector<8x32xf32>
    %cst_92 = arith.constant dense<0.000000e+00> : vector<8xf32>
    %325 = vector.multi_reduction <add>, %324, %cst_92 [1] : vector<8x32xf32> to vector<8xf32>
    %326 = vector.shape_cast %325 : vector<8xf32> to vector<8x1xf32>
    %cst_93 = arith.constant 3.200000e+01 : f32
    %327 = vector.broadcast %cst_93 : f32 to vector<8x1xf32>
    %328 = arith.divf %326, %327 : vector<8x1xf32>
    %329 = vector.broadcast %321 : vector<8x1xf32> to vector<8x32xf32>
    %330 = arith.subf %317, %329 : vector<8x32xf32>
    %cst_94 = arith.constant 9.99999974E-6 : f32
    %331 = vector.broadcast %cst_94 : f32 to vector<8x1xf32>
    %332 = arith.addf %328, %331 : vector<8x1xf32>
    %333 = math.rsqrt %332 : vector<8x1xf32>
    %334 = vector.broadcast %333 : vector<8x1xf32> to vector<8x32xf32>
    %335 = arith.mulf %330, %334 : vector<8x32xf32>
    %336 = tpu.concatenate %215, %255, %295, %335 in 1 : vector<8x32xf32>, vector<8x32xf32>, vector<8x32xf32>, vector<8x32xf32> -> vector<8x128xf32>
    %c8 = arith.constant 8 : index
    %c0_95 = arith.constant 0 : index
    %337 = vector.load %arg7[%c8, %c0_95] : memref<24x128xf32, #tpu.memory_space<vmem>>, vector<8x128xf32>
    tpu.vector_store %arg7[%c8, %c0_95], %336 {strides = array<i32>} : memref<24x128xf32, #tpu.memory_space<vmem>>, vector<8x128xf32>,
    %338 = vector.extract_strided_slice %0 {offsets = [16, 0], sizes = [8, 32], strides = [1, 1]} : vector<24x32xf32> to vector<8x32xf32>
    %339 = vector.extract_strided_slice %5 {offsets = [16, 0], sizes = [8, 8], strides = [1, 1]} : vector<24x32xf32> to vector<8x8xf32>
    %340 = vector.extract_strided_slice %8 {offsets = [16, 0], sizes = [8, 8], strides = [1, 1]} : vector<24x32xf32> to vector<8x8xf32>
    %341 = vector.extract_strided_slice %11 {offsets = [16, 0], sizes = [8, 32], strides = [1, 1]} : vector<24x128xf32> to vector<8x32xf32>
    %342 = arith.truncf %339 : vector<8x8xf32> to vector<8x8xbf16>
    %343 = arith.truncf %340 : vector<8x8xf32> to vector<8x8xbf16>
    %cst_96 = arith.constant dense<0.000000e+00> : vector<8x8xf32>
    %344 = tpu.matmul %342, %343, %cst_96 {dimension_numbers = #tpu.dot_dimension_numbers<[1], [1], [0], [0], [0, 0, 1, 0], [], []>} : vector<8x8xbf16>, vector<8x8xbf16>, vector<8x8xf32> -> vector<8x8xf32>
    %cst_97 = arith.constant 0.353553385 : f32
    %345 = vector.broadcast %cst_97 : f32 to vector<8x8xf32>
    %346 = arith.mulf %344, %345 : vector<8x8xf32>
    %cst_98 = arith.constant dense<0xFF800000> : vector<8xf32>
    %347 = vector.multi_reduction <maximumf>, %346, %cst_98 [0] : vector<8x8xf32> to vector<8xf32>
    %348 = vector.shape_cast %347 : vector<8xf32> to vector<1x8xf32>
    %349 = vector.broadcast %348 : vector<1x8xf32> to vector<8x8xf32>
    %350 = arith.subf %346, %349 : vector<8x8xf32>
    %351 = math.exp %350 : vector<8x8xf32>
    %cst_99 = arith.constant dense<0.000000e+00> : vector<8xf32>
    %352 = vector.multi_reduction <add>, %351, %cst_99 [0] : vector<8x8xf32> to vector<8xf32>
    %353 = vector.shape_cast %352 : vector<8xf32> to vector<1x8xf32>
    %354 = tpu.reciprocal %353 {approx = true} : vector<1x8xf32> -> vector<1x8xf32>
    %355 = vector.broadcast %354 : vector<1x8xf32> to vector<8x8xf32>
    %356 = arith.mulf %351, %355 : vector<8x8xf32>
    %357 = arith.truncf %356 : vector<8x8xf32> to vector<8x8xbf16>
    %358 = arith.truncf %341 : vector<8x32xf32> to vector<8x32xbf16>
    %cst_100 = arith.constant dense<0.000000e+00> : vector<8x32xf32>
    %359 = tpu.matmul %357, %358, %cst_100 {dimension_numbers = #tpu.dot_dimension_numbers<[1], [0], [0], [1], [0, 0, 1, 1], [], []>} : vector<8x8xbf16>, vector<8x32xbf16>, vector<8x32xf32> -> vector<8x32xf32>
    %360 = arith.addf %359, %338 : vector<8x32xf32>
    %cst_101 = arith.constant dense<0.000000e+00> : vector<8xf32>
    %361 = vector.multi_reduction <add>, %360, %cst_101 [1] : vector<8x32xf32> to vector<8xf32>
    %362 = vector.shape_cast %361 : vector<8xf32> to vector<8x1xf32>
    %cst_102 = arith.constant 3.200000e+01 : f32
    %363 = vector.broadcast %cst_102 : f32 to vector<8x1xf32>
    %364 = arith.divf %362, %363 : vector<8x1xf32>
    %365 = vector.broadcast %364 : vector<8x1xf32> to vector<8x32xf32>
    %366 = arith.subf %360, %365 : vector<8x32xf32>
    %367 = arith.mulf %366, %366 : vector<8x32xf32>
    %cst_103 = arith.constant dense<0.000000e+00> : vector<8xf32>
    %368 = vector.multi_reduction <add>, %367, %cst_103 [1] : vector<8x32xf32> to vector<8xf32>
    %369 = vector.shape_cast %368 : vector<8xf32> to vector<8x1xf32>
    %cst_104 = arith.constant 3.200000e+01 : f32
    %370 = vector.broadcast %cst_104 : f32 to vector<8x1xf32>
    %371 = arith.divf %369, %370 : vector<8x1xf32>
    %372 = vector.broadcast %364 : vector<8x1xf32> to vector<8x32xf32>
    %373 = arith.subf %360, %372 : vector<8x32xf32>
    %cst_105 = arith.constant 9.99999974E-6 : f32
    %374 = vector.broadcast %cst_105 : f32 to vector<8x1xf32>
    %375 = arith.addf %371, %374 : vector<8x1xf32>
    %376 = math.rsqrt %375 : vector<8x1xf32>
    %377 = vector.broadcast %376 : vector<8x1xf32> to vector<8x32xf32>
    %378 = arith.mulf %373, %377 : vector<8x32xf32>
    %379 = vector.extract_strided_slice %5 {offsets = [16, 8], sizes = [8, 8], strides = [1, 1]} : vector<24x32xf32> to vector<8x8xf32>
    %380 = vector.extract_strided_slice %8 {offsets = [16, 8], sizes = [8, 8], strides = [1, 1]} : vector<24x32xf32> to vector<8x8xf32>
    %381 = vector.extract_strided_slice %11 {offsets = [16, 32], sizes = [8, 32], strides = [1, 1]} : vector<24x128xf32> to vector<8x32xf32>
    %382 = arith.truncf %379 : vector<8x8xf32> to vector<8x8xbf16>
    %383 = arith.truncf %380 : vector<8x8xf32> to vector<8x8xbf16>
    %cst_106 = arith.constant dense<0.000000e+00> : vector<8x8xf32>
    %384 = tpu.matmul %382, %383, %cst_106 {dimension_numbers = #tpu.dot_dimension_numbers<[1], [1], [0], [0], [0, 0, 1, 0], [], []>} : vector<8x8xbf16>, vector<8x8xbf16>, vector<8x8xf32> -> vector<8x8xf32>
    %cst_107 = arith.constant 0.353553385 : f32
    %385 = vector.broadcast %cst_107 : f32 to vector<8x8xf32>
    %386 = arith.mulf %384, %385 : vector<8x8xf32>
    %cst_108 = arith.constant dense<0xFF800000> : vector<8xf32>
    %387 = vector.multi_reduction <maximumf>, %386, %cst_108 [0] : vector<8x8xf32> to vector<8xf32>
    %388 = vector.shape_cast %387 : vector<8xf32> to vector<1x8xf32>
    %389 = vector.broadcast %388 : vector<1x8xf32> to vector<8x8xf32>
    %390 = arith.subf %386, %389 : vector<8x8xf32>
    %391 = math.exp %390 : vector<8x8xf32>
    %cst_109 = arith.constant dense<0.000000e+00> : vector<8xf32>
    %392 = vector.multi_reduction <add>, %391, %cst_109 [0] : vector<8x8xf32> to vector<8xf32>
    %393 = vector.shape_cast %392 : vector<8xf32> to vector<1x8xf32>
    %394 = tpu.reciprocal %393 {approx = true} : vector<1x8xf32> -> vector<1x8xf32>
    %395 = vector.broadcast %394 : vector<1x8xf32> to vector<8x8xf32>
    %396 = arith.mulf %391, %395 : vector<8x8xf32>
    %397 = arith.truncf %396 : vector<8x8xf32> to vector<8x8xbf16>
    %398 = arith.truncf %381 : vector<8x32xf32> to vector<8x32xbf16>
    %cst_110 = arith.constant dense<0.000000e+00> : vector<8x32xf32>
    %399 = tpu.matmul %397, %398, %cst_110 {dimension_numbers = #tpu.dot_dimension_numbers<[1], [0], [0], [1], [0, 0, 1, 1], [], []>} : vector<8x8xbf16>, vector<8x32xbf16>, vector<8x32xf32> -> vector<8x32xf32>
    %400 = arith.addf %399, %338 : vector<8x32xf32>
    %cst_111 = arith.constant dense<0.000000e+00> : vector<8xf32>
    %401 = vector.multi_reduction <add>, %400, %cst_111 [1] : vector<8x32xf32> to vector<8xf32>
    %402 = vector.shape_cast %401 : vector<8xf32> to vector<8x1xf32>
    %cst_112 = arith.constant 3.200000e+01 : f32
    %403 = vector.broadcast %cst_112 : f32 to vector<8x1xf32>
    %404 = arith.divf %402, %403 : vector<8x1xf32>
    %405 = vector.broadcast %404 : vector<8x1xf32> to vector<8x32xf32>
    %406 = arith.subf %400, %405 : vector<8x32xf32>
    %407 = arith.mulf %406, %406 : vector<8x32xf32>
    %cst_113 = arith.constant dense<0.000000e+00> : vector<8xf32>
    %408 = vector.multi_reduction <add>, %407, %cst_113 [1] : vector<8x32xf32> to vector<8xf32>
    %409 = vector.shape_cast %408 : vector<8xf32> to vector<8x1xf32>
    %cst_114 = arith.constant 3.200000e+01 : f32
    %410 = vector.broadcast %cst_114 : f32 to vector<8x1xf32>
    %411 = arith.divf %409, %410 : vector<8x1xf32>
    %412 = vector.broadcast %404 : vector<8x1xf32> to vector<8x32xf32>
    %413 = arith.subf %400, %412 : vector<8x32xf32>
    %cst_115 = arith.constant 9.99999974E-6 : f32
    %414 = vector.broadcast %cst_115 : f32 to vector<8x1xf32>
    %415 = arith.addf %411, %414 : vector<8x1xf32>
    %416 = math.rsqrt %415 : vector<8x1xf32>
    %417 = vector.broadcast %416 : vector<8x1xf32> to vector<8x32xf32>
    %418 = arith.mulf %413, %417 : vector<8x32xf32>
    %419 = vector.extract_strided_slice %5 {offsets = [16, 16], sizes = [8, 8], strides = [1, 1]} : vector<24x32xf32> to vector<8x8xf32>
    %420 = vector.extract_strided_slice %8 {offsets = [16, 16], sizes = [8, 8], strides = [1, 1]} : vector<24x32xf32> to vector<8x8xf32>
    %421 = vector.extract_strided_slice %11 {offsets = [16, 64], sizes = [8, 32], strides = [1, 1]} : vector<24x128xf32> to vector<8x32xf32>
    %422 = arith.truncf %419 : vector<8x8xf32> to vector<8x8xbf16>
    %423 = arith.truncf %420 : vector<8x8xf32> to vector<8x8xbf16>
    %cst_116 = arith.constant dense<0.000000e+00> : vector<8x8xf32>
    %424 = tpu.matmul %422, %423, %cst_116 {dimension_numbers = #tpu.dot_dimension_numbers<[1], [1], [0], [0], [0, 0, 1, 0], [], []>} : vector<8x8xbf16>, vector<8x8xbf16>, vector<8x8xf32> -> vector<8x8xf32>
    %cst_117 = arith.constant 0.353553385 : f32
    %425 = vector.broadcast %cst_117 : f32 to vector<8x8xf32>
    %426 = arith.mulf %424, %425 : vector<8x8xf32>
    %cst_118 = arith.constant dense<0xFF800000> : vector<8xf32>
    %427 = vector.multi_reduction <maximumf>, %426, %cst_118 [0] : vector<8x8xf32> to vector<8xf32>
    %428 = vector.shape_cast %427 : vector<8xf32> to vector<1x8xf32>
    %429 = vector.broadcast %428 : vector<1x8xf32> to vector<8x8xf32>
    %430 = arith.subf %426, %429 : vector<8x8xf32>
    %431 = math.exp %430 : vector<8x8xf32>
    %cst_119 = arith.constant dense<0.000000e+00> : vector<8xf32>
    %432 = vector.multi_reduction <add>, %431, %cst_119 [0] : vector<8x8xf32> to vector<8xf32>
    %433 = vector.shape_cast %432 : vector<8xf32> to vector<1x8xf32>
    %434 = tpu.reciprocal %433 {approx = true} : vector<1x8xf32> -> vector<1x8xf32>
    %435 = vector.broadcast %434 : vector<1x8xf32> to vector<8x8xf32>
    %436 = arith.mulf %431, %435 : vector<8x8xf32>
    %437 = arith.truncf %436 : vector<8x8xf32> to vector<8x8xbf16>
    %438 = arith.truncf %421 : vector<8x32xf32> to vector<8x32xbf16>
    %cst_120 = arith.constant dense<0.000000e+00> : vector<8x32xf32>
    %439 = tpu.matmul %437, %438, %cst_120 {dimension_numbers = #tpu.dot_dimension_numbers<[1], [0], [0], [1], [0, 0, 1, 1], [], []>} : vector<8x8xbf16>, vector<8x32xbf16>, vector<8x32xf32> -> vector<8x32xf32>
    %440 = arith.addf %439, %338 : vector<8x32xf32>
    %cst_121 = arith.constant dense<0.000000e+00> : vector<8xf32>
    %441 = vector.multi_reduction <add>, %440, %cst_121 [1] : vector<8x32xf32> to vector<8xf32>
    %442 = vector.shape_cast %441 : vector<8xf32> to vector<8x1xf32>
    %cst_122 = arith.constant 3.200000e+01 : f32
    %443 = vector.broadcast %cst_122 : f32 to vector<8x1xf32>
    %444 = arith.divf %442, %443 : vector<8x1xf32>
    %445 = vector.broadcast %444 : vector<8x1xf32> to vector<8x32xf32>
    %446 = arith.subf %440, %445 : vector<8x32xf32>
    %447 = arith.mulf %446, %446 : vector<8x32xf32>
    %cst_123 = arith.constant dense<0.000000e+00> : vector<8xf32>
    %448 = vector.multi_reduction <add>, %447, %cst_123 [1] : vector<8x32xf32> to vector<8xf32>
    %449 = vector.shape_cast %448 : vector<8xf32> to vector<8x1xf32>
    %cst_124 = arith.constant 3.200000e+01 : f32
    %450 = vector.broadcast %cst_124 : f32 to vector<8x1xf32>
    %451 = arith.divf %449, %450 : vector<8x1xf32>
    %452 = vector.broadcast %444 : vector<8x1xf32> to vector<8x32xf32>
    %453 = arith.subf %440, %452 : vector<8x32xf32>
    %cst_125 = arith.constant 9.99999974E-6 : f32
    %454 = vector.broadcast %cst_125 : f32 to vector<8x1xf32>
    %455 = arith.addf %451, %454 : vector<8x1xf32>
    %456 = math.rsqrt %455 : vector<8x1xf32>
    %457 = vector.broadcast %456 : vector<8x1xf32> to vector<8x32xf32>
    %458 = arith.mulf %453, %457 : vector<8x32xf32>
    %459 = vector.extract_strided_slice %5 {offsets = [16, 24], sizes = [8, 8], strides = [1, 1]} : vector<24x32xf32> to vector<8x8xf32>
    %460 = vector.extract_strided_slice %8 {offsets = [16, 24], sizes = [8, 8], strides = [1, 1]} : vector<24x32xf32> to vector<8x8xf32>
    %461 = vector.extract_strided_slice %11 {offsets = [16, 96], sizes = [8, 32], strides = [1, 1]} : vector<24x128xf32> to vector<8x32xf32>
    %462 = arith.truncf %459 : vector<8x8xf32> to vector<8x8xbf16>
    %463 = arith.truncf %460 : vector<8x8xf32> to vector<8x8xbf16>
    %cst_126 = arith.constant dense<0.000000e+00> : vector<8x8xf32>
    %464 = tpu.matmul %462, %463, %cst_126 {dimension_numbers = #tpu.dot_dimension_numbers<[1], [1], [0], [0], [0, 0, 1, 0], [], []>} : vector<8x8xbf16>, vector<8x8xbf16>, vector<8x8xf32> -> vector<8x8xf32>
    %cst_127 = arith.constant 0.353553385 : f32
    %465 = vector.broadcast %cst_127 : f32 to vector<8x8xf32>
    %466 = arith.mulf %464, %465 : vector<8x8xf32>
    %cst_128 = arith.constant dense<0xFF800000> : vector<8xf32>
    %467 = vector.multi_reduction <maximumf>, %466, %cst_128 [0] : vector<8x8xf32> to vector<8xf32>
    %468 = vector.shape_cast %467 : vector<8xf32> to vector<1x8xf32>
    %469 = vector.broadcast %468 : vector<1x8xf32> to vector<8x8xf32>
    %470 = arith.subf %466, %469 : vector<8x8xf32>
    %471 = math.exp %470 : vector<8x8xf32>
    %cst_129 = arith.constant dense<0.000000e+00> : vector<8xf32>
    %472 = vector.multi_reduction <add>, %471, %cst_129 [0] : vector<8x8xf32> to vector<8xf32>
    %473 = vector.shape_cast %472 : vector<8xf32> to vector<1x8xf32>
    %474 = tpu.reciprocal %473 {approx = true} : vector<1x8xf32> -> vector<1x8xf32>
    %475 = vector.broadcast %474 : vector<1x8xf32> to vector<8x8xf32>
    %476 = arith.mulf %471, %475 : vector<8x8xf32>
    %477 = arith.truncf %476 : vector<8x8xf32> to vector<8x8xbf16>
    %478 = arith.truncf %461 : vector<8x32xf32> to vector<8x32xbf16>
    %cst_130 = arith.constant dense<0.000000e+00> : vector<8x32xf32>
    %479 = tpu.matmul %477, %478, %cst_130 {dimension_numbers = #tpu.dot_dimension_numbers<[1], [0], [0], [1], [0, 0, 1, 1], [], []>} : vector<8x8xbf16>, vector<8x32xbf16>, vector<8x32xf32> -> vector<8x32xf32>
    %480 = arith.addf %479, %338 : vector<8x32xf32>
    %cst_131 = arith.constant dense<0.000000e+00> : vector<8xf32>
    %481 = vector.multi_reduction <add>, %480, %cst_131 [1] : vector<8x32xf32> to vector<8xf32>
    %482 = vector.shape_cast %481 : vector<8xf32> to vector<8x1xf32>
    %cst_132 = arith.constant 3.200000e+01 : f32
    %483 = vector.broadcast %cst_132 : f32 to vector<8x1xf32>
    %484 = arith.divf %482, %483 : vector<8x1xf32>
    %485 = vector.broadcast %484 : vector<8x1xf32> to vector<8x32xf32>
    %486 = arith.subf %480, %485 : vector<8x32xf32>
    %487 = arith.mulf %486, %486 : vector<8x32xf32>
    %cst_133 = arith.constant dense<0.000000e+00> : vector<8xf32>
    %488 = vector.multi_reduction <add>, %487, %cst_133 [1] : vector<8x32xf32> to vector<8xf32>
    %489 = vector.shape_cast %488 : vector<8xf32> to vector<8x1xf32>
    %cst_134 = arith.constant 3.200000e+01 : f32
    %490 = vector.broadcast %cst_134 : f32 to vector<8x1xf32>
    %491 = arith.divf %489, %490 : vector<8x1xf32>
    %492 = vector.broadcast %484 : vector<8x1xf32> to vector<8x32xf32>
    %493 = arith.subf %480, %492 : vector<8x32xf32>
    %cst_135 = arith.constant 9.99999974E-6 : f32
    %494 = vector.broadcast %cst_135 : f32 to vector<8x1xf32>
    %495 = arith.addf %491, %494 : vector<8x1xf32>
    %496 = math.rsqrt %495 : vector<8x1xf32>
    %497 = vector.broadcast %496 : vector<8x1xf32> to vector<8x32xf32>
    %498 = arith.mulf %493, %497 : vector<8x32xf32>
    %499 = tpu.concatenate %378, %418, %458, %498 in 1 : vector<8x32xf32>, vector<8x32xf32>, vector<8x32xf32>, vector<8x32xf32> -> vector<8x128xf32>
    %c16 = arith.constant 16 : index
    %c0_136 = arith.constant 0 : index
    %500 = vector.load %arg7[%c16, %c0_136] : memref<24x128xf32, #tpu.memory_space<vmem>>, vector<8x128xf32>
    tpu.vector_store %arg7[%c16, %c0_136], %499 {strides = array<i32>} : memref<24x128xf32, #tpu.memory_space<vmem>>, vector<8x128xf32>,
    return
  }
  func.func @transform_0(%arg0: i32) -> (i32, i32) {
    %c0_i32 = arith.constant 0 : i32
    %c0_i32_0 = arith.constant 0 : i32
    return %arg0, %c0_i32 : i32, i32
  }
  func.func @transform_1(%arg0: i32) -> (i32, i32) {
    %c0_i32 = arith.constant 0 : i32
    %c0_i32_0 = arith.constant 0 : i32
    return %arg0, %c0_i32 : i32, i32
  }
  func.func @transform_2(%arg0: i32) -> (i32, i32) {
    %c0_i32 = arith.constant 0 : i32
    %c0_i32_0 = arith.constant 0 : i32
    return %arg0, %c0_i32 : i32, i32
  }
  func.func @transform_3(%arg0: i32) -> (i32, i32) {
    %c0_i32 = arith.constant 0 : i32
    %c0_i32_0 = arith.constant 0 : i32
    %c0_i32_1 = arith.constant 0 : i32
    return %c0_i32, %c0_i32_0 : i32, i32
  }
  func.func @transform_4(%arg0: i32) -> (i32, i32) {
    %c0_i32 = arith.constant 0 : i32
    %c0_i32_0 = arith.constant 0 : i32
    %c0_i32_1 = arith.constant 0 : i32
    return %c0_i32, %c0_i32_0 : i32, i32
  }
  func.func @transform_5(%arg0: i32) -> (i32, i32) {
    %c0_i32 = arith.constant 0 : i32
    %c0_i32_0 = arith.constant 0 : i32
    %c0_i32_1 = arith.constant 0 : i32
    return %c0_i32, %c0_i32_0 : i32, i32
  }
  func.func @transform_6(%arg0: i32) -> (i32, i32) {
    %c0_i32 = arith.constant 0 : i32
    %c0_i32_0 = arith.constant 0 : i32
    return %arg0, %c0_i32 : i32, i32
  }
}

</mosaic_0001>

<llo_original>
// kernel: tpu_custom_call.1
$region0: #{tpu_custom_call.1}
  #allocation0 [shape = 'u32[]', space=smem, size = 0x4, offset = 0x4, fixed_abs, tag = 'smem constant byte address 0x4 - core index']
  #allocation1 [shape = 'u32[144,128]{1,0:T(1,128)}', space=vmem, size = 0x12000, scoped, tag = 'internal scratch']
  %s0 = inlined_call_operand.vmem [shape: f32[48,32], index: 0, kind: input, shape index: {}]
  %s1 = inlined_call_operand.vmem [shape: f32[48,32], index: 1, kind: input, shape index: {}]
  %s2 = inlined_call_operand.vmem [shape: f32[48,32], index: 2, kind: input, shape index: {}]
  %s3 = inlined_call_operand.vmem [shape: bf16[32,32], index: 3, kind: input, shape index: {}]
  %s4 = inlined_call_operand.vmem [shape: bf16[32,32], index: 4, kind: input, shape index: {}]
  %s5 = inlined_call_operand.vmem [shape: bf16[32,128], index: 5, kind: input, shape index: {}]
  %s6 = inlined_call_operand.hbm [shape: f32[48,128], index: 6, kind: output, shape index: {}]
  %s7 = sld [smem:[#allocation0]]
  $region57: #{tpu_custom_call.1} parent=0
    _
  %s9 = ssub.s32 1, %s7
  %s10 = scalar_select 0, %s9, %s7
  $region1: #{tpu_custom_call.1} parent=0
    #allocation2 [shape = 'u8[24576]{0}', space=vmem, size = 0x6000, scoped, tag = 'output window, operand 0']
    #allocation3 [shape = 's32[2]{0}', space=sflag, size = 0x8, scoped, tag = 'scoped memory for tpu_custom_call.1']
    %11 = vsyncpa [#allocation3], 0
    %s12 = scalar_lea.sflag [#allocation3], 1
    %13 = vsyncpa %s12, 0
    loop: start=0, step=1, limit=4
    $region2: #{tpu_custom_call.1} parent=1 // loop_pre_header
      _
    $region3: #{tpu_custom_call.1} parent=1 // loop_header
      %s15 = sphi 0, %s19
      %p16 = scmp.ge.s32.totalorder %s15, 4
      %s25 = sphi 0, %s27
      %s28 = sphi 0, %s25
      %s29 = sphi 0, %s28
      %s45 = sphi 0, %s29
      %s51 = sphi 0, %s53
      %s54 = sphi 0, %s51
      %s55 = sphi 0, %s54
      %s71 = sphi 0, %s55
      %s77 = sphi 0, %s79
      %s80 = sphi 0, %s77
      %s81 = sphi 0, %s80
      %s97 = sphi 0, %s81
      %s101 = sphi 0, %s101
      %s103 = sphi 0, %s101
      %s104 = sphi 0, %s103
      %s118 = sphi 0, %s104
      %s122 = sphi 0, %s122
      %s124 = sphi 0, %s122
      %s125 = sphi 0, %s124
      %s139 = sphi 0, %s125
      %s143 = sphi 0, %s143
      %s145 = sphi 0, %s143
      %s146 = sphi 0, %s145
      %s160 = sphi 0, %s146
      %s166 = sphi 0, %s168
      %s169 = sphi 0, %s166
      %s170 = sphi 0, %s169
      %s186 = sphi 0, %s170
    $region4: #{tpu_custom_call.1} parent=1 // loop_header_branch
      %18 = sbr.rel (%p16) target = $region8
    $region5: #{tpu_custom_call.1} parent=1 // loop_body
      %s20 = ssub.s32 %s15, 1
      %s21 = ssub.s32 %s15, 2
      %s22 = sadd.s32 %s15, 1
      %s23 = ssub.s32 %s15, %s22
      %p24 = scmp.eq.s32.totalorder %s23, 0
      %s26 = sadd.s32 %s25, 1
      %s27 = scalar_select %p24, %s25, %s26
      %p30 = pneg %p24
      %p31 = scmp.eq.s32.totalorder %s15, 1
      %p32 = por %p30, %p31
      %p33 = scmp.ne.s32.totalorder %s25, %s28
      %p34 = scmp.eq.s32.totalorder %s15, 0
      %p35 = por %p33, %p34
      %p36 = scmp.ne.s32.totalorder %s25, %s28
      %p37 = scmp.eq.s32.totalorder %s20, 1
      %p38 = por %p36, %p37
      %p39 = scmp.ne.s32.totalorder %s28, %s29
      %p40 = scmp.eq.s32.totalorder %s20, 0
      %p41 = por %p39, %p40
      %p42 = scmp.ne.s32.totalorder %s28, %s29
      %p43 = scmp.eq.s32.totalorder %s21, 1
      %p44 = por %p42, %p43
      %p46 = scmp.ne.s32.totalorder %s29, %s45
      %p47 = scmp.eq.s32.totalorder %s21, 0
      %p48 = por %p46, %p47
      %s49 = ssub.s32 %s15, %s22
      %p50 = scmp.eq.s32.totalorder %s49, 0
      %s52 = sadd.s32 %s51, 1
      %s53 = scalar_select %p50, %s51, %s52
      %p56 = pneg %p50
      %p57 = scmp.eq.s32.totalorder %s15, 1
      %p58 = por %p56, %p57
      %p59 = scmp.ne.s32.totalorder %s51, %s54
      %p60 = scmp.eq.s32.totalorder %s15, 0
      %p61 = por %p59, %p60
      %p62 = scmp.ne.s32.totalorder %s51, %s54
      %p63 = scmp.eq.s32.totalorder %s20, 1
      %p64 = por %p62, %p63
      %p65 = scmp.ne.s32.totalorder %s54, %s55
      %p66 = scmp.eq.s32.totalorder %s20, 0
      %p67 = por %p65, %p66
      %p68 = scmp.ne.s32.totalorder %s54, %s55
      %p69 = scmp.eq.s32.totalorder %s21, 1
      %p70 = por %p68, %p69
      %p72 = scmp.ne.s32.totalorder %s55, %s71
      %p73 = scmp.eq.s32.totalorder %s21, 0
      %p74 = por %p72, %p73
      %s75 = ssub.s32 %s15, %s22
      %p76 = scmp.eq.s32.totalorder %s75, 0
      %s78 = sadd.s32 %s77, 1
      %s79 = scalar_select %p76, %s77, %s78
      %p82 = pneg %p76
      %p83 = scmp.eq.s32.totalorder %s15, 1
      %p84 = por %p82, %p83
      %p85 = scmp.ne.s32.totalorder %s77, %s80
      %p86 = scmp.eq.s32.totalorder %s15, 0
      %p87 = por %p85, %p86
      %p88 = scmp.ne.s32.totalorder %s77, %s80
      %p89 = scmp.eq.s32.totalorder %s20, 1
      %p90 = por %p88, %p89
      %p91 = scmp.ne.s32.totalorder %s80, %s81
      %p92 = scmp.eq.s32.totalorder %s20, 0
      %p93 = por %p91, %p92
      %p94 = scmp.ne.s32.totalorder %s80, %s81
      %p95 = scmp.eq.s32.totalorder %s21, 1
      %p96 = por %p94, %p95
      %p98 = scmp.ne.s32.totalorder %s81, %s97
      %p99 = scmp.eq.s32.totalorder %s21, 0
      %p100 = por %p98, %p99
      %s102 = sadd.s32 %s101, 1
      %p105 = scmp.eq.s32.totalorder %s15, 1
      %p106 = scmp.ne.s32.totalorder %s101, %s103
      %p107 = scmp.eq.s32.totalorder %s15, 0
      %p108 = por %p106, %p107
      %p109 = scmp.ne.s32.totalorder %s101, %s103
      %p110 = scmp.eq.s32.totalorder %s20, 1
      %p111 = por %p109, %p110
      %p112 = scmp.ne.s32.totalorder %s103, %s104
      %p113 = scmp.eq.s32.totalorder %s20, 0
      %p114 = por %p112, %p113
      %p115 = scmp.ne.s32.totalorder %s103, %s104
      %p116 = scmp.eq.s32.totalorder %s21, 1
      %p117 = por %p115, %p116
      %p119 = scmp.ne.s32.totalorder %s104, %s118
      %p120 = scmp.eq.s32.totalorder %s21, 0
      %p121 = por %p119, %p120
      %s123 = sadd.s32 %s122, 1
      %p126 = scmp.eq.s32.totalorder %s15, 1
      %p127 = scmp.ne.s32.totalorder %s122, %s124
      %p128 = scmp.eq.s32.totalorder %s15, 0
      %p129 = por %p127, %p128
      %p130 = scmp.ne.s32.totalorder %s122, %s124
      %p131 = scmp.eq.s32.totalorder %s20, 1
      %p132 = por %p130, %p131
      %p133 = scmp.ne.s32.totalorder %s124, %s125
      %p134 = scmp.eq.s32.totalorder %s20, 0
      %p135 = por %p133, %p134
      %p136 = scmp.ne.s32.totalorder %s124, %s125
      %p137 = scmp.eq.s32.totalorder %s21, 1
      %p138 = por %p136, %p137
      %p140 = scmp.ne.s32.totalorder %s125, %s139
      %p141 = scmp.eq.s32.totalorder %s21, 0
      %p142 = por %p140, %p141
      %s144 = sadd.s32 %s143, 1
      %p147 = scmp.eq.s32.totalorder %s15, 1
      %p148 = scmp.ne.s32.totalorder %s143, %s145
      %p149 = scmp.eq.s32.totalorder %s15, 0
      %p150 = por %p148, %p149
      %p151 = scmp.ne.s32.totalorder %s143, %s145
      %p152 = scmp.eq.s32.totalorder %s20, 1
      %p153 = por %p151, %p152
      %p154 = scmp.ne.s32.totalorder %s145, %s146
      %p155 = scmp.eq.s32.totalorder %s20, 0
      %p156 = por %p154, %p155
      %p157 = scmp.ne.s32.totalorder %s145, %s146
      %p158 = scmp.eq.s32.totalorder %s21, 1
      %p159 = por %p157, %p158
      %p161 = scmp.ne.s32.totalorder %s146, %s160
      %p162 = scmp.eq.s32.totalorder %s21, 0
      %p163 = por %p161, %p162
      %s164 = ssub.s32 %s15, %s22
      %p165 = scmp.eq.s32.totalorder %s164, 0
      %s167 = sadd.s32 %s166, 1
      %s168 = scalar_select %p165, %s166, %s167
      %p171 = pneg %p165
      %p172 = scmp.eq.s32.totalorder %s15, 1
      %p173 = por %p171, %p172
      %p174 = scmp.ne.s32.totalorder %s166, %s169
      %p175 = scmp.eq.s32.totalorder %s15, 0
      %p176 = por %p174, %p175
      %p177 = scmp.ne.s32.totalorder %s166, %s169
      %p178 = scmp.eq.s32.totalorder %s20, 1
      %p179 = por %p177, %p178
      %p180 = scmp.ne.s32.totalorder %s169, %s170
      %p181 = scmp.eq.s32.totalorder %s20, 0
      %p182 = por %p180, %p181
      %p183 = scmp.ne.s32.totalorder %s169, %s170
      %p184 = scmp.eq.s32.totalorder %s21, 1
      %p185 = por %p183, %p184
      %p187 = scmp.ne.s32.totalorder %s170, %s186
      %p188 = scmp.eq.s32.totalorder %s21, 0
      %p189 = por %p187, %p188
      %p190 = scmp.le.s32.totalorder 1, %s15
      %p191 = scmp.lt.s32.totalorder %s15, 3
      %p192 = pnand %p190, %p191
      %p193 = pneg %p192
      // Predicated region
      $region9: #{tpu_custom_call.1} parent=5 // pred_check
        _
      $region10: #{tpu_custom_call.1} parent=5 // pred_check_branch
        %195 = sbr.rel (%p192) target = $region12
      $region11: #{tpu_custom_call.1} parent=5 // pred_region
        %s196 = ssub.s32 %s15, 1
        // Predicated region
        $region13: #{tpu_custom_call.1} parent=11 // pred_check
          %p197 = pneg %p114
        $region14: #{tpu_custom_call.1} parent=11 // pred_check_branch
          %199 = sbr.rel (%p197) target = $region16
        $region15: #{tpu_custom_call.1} parent=11 // pred_region
          _
        $region16: #{tpu_custom_call.1} parent=11 // pred_fallthru
          _
        // Predicated region
        $region17: #{tpu_custom_call.1} parent=11 // pred_check
          %p200 = pneg %p135
        $region18: #{tpu_custom_call.1} parent=11 // pred_check_branch
          %202 = sbr.rel (%p200) target = $region20
        $region19: #{tpu_custom_call.1} parent=11 // pred_region
          _
        $region20: #{tpu_custom_call.1} parent=11 // pred_fallthru
          _
        // Predicated region
        $region21: #{tpu_custom_call.1} parent=11 // pred_check
          %p203 = pneg %p156
        $region22: #{tpu_custom_call.1} parent=11 // pred_check_branch
          %205 = sbr.rel (%p203) target = $region24
        $region23: #{tpu_custom_call.1} parent=11 // pred_region
          _
        $region24: #{tpu_custom_call.1} parent=11 // pred_fallthru
          _
      $region12: #{tpu_custom_call.1} parent=5 // pred_fallthru
        _
      %p206 = scmp.lt.s32.totalorder %s15, 2
      // Predicated region
      $region25: #{tpu_custom_call.1} parent=5 // pred_check
        %p207 = pneg %p206
      $region26: #{tpu_custom_call.1} parent=5 // pred_check_branch
        %209 = sbr.rel (%p207) target = $region28
      $region27: #{tpu_custom_call.1} parent=5 // pred_region
        // Predicated region
        $region29: #{tpu_custom_call.1} parent=27 // pred_check
          %p210 = pneg %p35
        $region30: #{tpu_custom_call.1} parent=27 // pred_check_branch
          %212 = sbr.rel (%p210) target = $region32
        $region31: #{tpu_custom_call.1} parent=27 // pred_region
          %s213 = smul.u32 3, %s15
          %p214 = scmp.lt.s32.totalorder %s213, 5
          %s215 = scalar_select %p214, %s213, 5
          %s216 = smul.addr %s215, 8
          %s217 = scalar_lea.vmem %s0, %s216
          %s218 = smul.u32 3, %s15
        $region32: #{tpu_custom_call.1} parent=27 // pred_fallthru
          _
        // Predicated region
        $region33: #{tpu_custom_call.1} parent=27 // pred_check
          %p219 = pneg %p61
        $region34: #{tpu_custom_call.1} parent=27 // pred_check_branch
          %221 = sbr.rel (%p219) target = $region36
        $region35: #{tpu_custom_call.1} parent=27 // pred_region
          %s222 = smul.u32 3, %s15
          %p223 = scmp.lt.s32.totalorder %s222, 5
          %s224 = scalar_select %p223, %s222, 5
          %s225 = smul.addr %s224, 8
          %s226 = scalar_lea.vmem %s1, %s225
          %s227 = smul.u32 3, %s15
        $region36: #{tpu_custom_call.1} parent=27 // pred_fallthru
          _
        // Predicated region
        $region37: #{tpu_custom_call.1} parent=27 // pred_check
          %p228 = pneg %p87
        $region38: #{tpu_custom_call.1} parent=27 // pred_check_branch
          %230 = sbr.rel (%p228) target = $region40
        $region39: #{tpu_custom_call.1} parent=27 // pred_region
          %s231 = smul.u32 3, %s15
          %p232 = scmp.lt.s32.totalorder %s231, 5
          %s233 = scalar_select %p232, %s231, 5
          %s234 = smul.addr %s233, 8
          %s235 = scalar_lea.vmem %s2, %s234
          %s236 = smul.u32 3, %s15
        $region40: #{tpu_custom_call.1} parent=27 // pred_fallthru
          _
      $region28: #{tpu_custom_call.1} parent=5 // pred_fallthru
        _
      %p237 = scmp.le.s32.totalorder 1, %s15
      %p238 = scmp.lt.s32.totalorder %s15, 3
      %p239 = pnand %p237, %p238
      %p240 = pneg %p239
      // Predicated region
      $region41: #{tpu_custom_call.1} parent=5 // pred_check
        _
      $region42: #{tpu_custom_call.1} parent=5 // pred_check_branch
        %242 = sbr.rel (%p239) target = $region44
      $region43: #{tpu_custom_call.1} parent=5 // pred_region
        %s243 = ssub.s32 %s15, 1
        %s244 = smul.u32 3, %s20
        %p245 = scmp.lt.s32.totalorder %s244, 5
        %s246 = scalar_select %p245, %s244, 5
        %s247 = smul.addr %s246, 8
        %s248 = scalar_lea.vmem %s0, %s247
        %p249 = pneg %p41
        %p250 = pneg %p38
        %s251 = smul.u32 3, %s20
        %p252 = scmp.lt.s32.totalorder %s251, 5
        %s253 = scalar_select %p252, %s251, 5
        %s254 = smul.addr %s253, 8
        %s255 = scalar_lea.vmem %s1, %s254
        %p256 = pneg %p67
        %p257 = pneg %p64
        %s258 = smul.u32 3, %s20
        %p259 = scmp.lt.s32.totalorder %s258, 5
        %s260 = scalar_select %p259, %s258, 5
        %s261 = smul.addr %s260, 8
        %s262 = scalar_lea.vmem %s2, %s261
        %p263 = pneg %p93
        %p264 = pneg %p90
        %p265 = pneg %p114
        %p266 = pneg %p111
        %p267 = pneg %p135
        %p268 = pneg %p132
        %p269 = pneg %p156
        %p270 = pneg %p153
        %p271 = pneg %p182
        %p272 = pneg %p179
        %s273 = sand.u32 %s169, 1
        %s274 = scalar_lea.sflag [#allocation3], %s273
        %s275 = sand.u32 %s169, 1
        %s276 = smul.addr %s275, 24
        %s277 = scalar_lea.vmem [#allocation2], %s276
        %s278 = smul.u32 3, %s20
        %p279 = scmp.lt.s32.totalorder %s278, 5
        %s280 = scalar_select %p279, %s278, 5
        %s281 = smul.addr %s280, 8
        %s282 = scalar_lea.vmem %s0, %s281
        %s283 = smul.u32 3, %s20
        %s284 = smul.u32 3, %s20
        %p285 = scmp.lt.s32.totalorder %s284, 5
        %s286 = scalar_select %p285, %s284, 5
        %s287 = smul.addr %s286, 8
        %s288 = scalar_lea.vmem %s1, %s287
        %s289 = smul.u32 3, %s20
        %s290 = smul.u32 3, %s20
        %p291 = scmp.lt.s32.totalorder %s290, 5
        %s292 = scalar_select %p291, %s290, 5
        %s293 = smul.addr %s292, 8
        %s294 = scalar_lea.vmem %s2, %s293
        %s295 = smul.u32 3, %s20
        %s296 = smul.u32 3, %s20
        %v298 = vld [vmem:[%s282] sm:$0xff]
        %v299 = vld [vmem:[%s282 + $0x8] sm:$0xff]
        %v300 = vld [vmem:[%s282 + $0x10] sm:$0xff]
        %v301 = vld [vmem:[%s288] sm:$0xff]
        %v302 = vld [vmem:[%s288 + $0x8] sm:$0xff]
        %v303 = vld [vmem:[%s288 + $0x10] sm:$0xff]
        %v304 = vld [vmem:[%s294] sm:$0xff]
        %v305 = vld [vmem:[%s294 + $0x8] sm:$0xff]
        %v306 = vld [vmem:[%s294 + $0x10] sm:$0xff]
        %v307 = vpack.c.bf16 %v299, %v298
        %v308 = vpack.c.bf16 %v300, %v300
        %v309 = vld [vmem:[%s3] sm:$0xf]
        %v310 = vld [vmem:[%s3 + $0x4] sm:$0xf]
        %v311 = vld [vmem:[%s3 + $0x8] sm:$0xf]
        %v312 = vld [vmem:[%s3 + $0xc] sm:$0xf]
        %v317 = vunpack.c.l.b16 %v309
        %v318 = vunpack.c.l.b16 %v310
        %v319 = vunpack.c.l.b16 %v311
        %v320 = vunpack.c.l.b16 %v312
        %v321 = vpack.c.b16 %v318, %v317
        %v322 = vpack.c.b16 %v320, %v319
        %vm325 = vcmask 261120
        %v327 = vsel %vm325, %v307, 0
        %v330 = vsel %vm325, %v308, 0
        %332 = vmatprep.subr.bf16.mxu0 0
        %333 = vmatpush1.bf16.msra.mxu0 %v321
        %334 = vmatprep.subr.bf16.mxu0 0
        %335 = vmatpush1.bf16.msra.mxu0 %v322
        %336 = vmatprep.subr.bf16.mxu0 0
        %337 = vmatpush1.bf16.msra.mxu0 0
        %338 = vmatprep.subr.bf16.mxu0 0
        %339 = vmatpush1.bf16.msra.mxu0 0
        %340 = vmatprep.subr.bf16.mxu0 0
        %341 = vmatpush1.bf16.msra.mxu0 0
        %342 = vmatprep.subr.bf16.mxu0 0
        %343 = vmatpush1.bf16.msra.mxu0 0
        %344 = vmatprep.subr.bf16.mxu0 0
        %345 = vmatpush1.bf16.msra.mxu0 0
        %346 = vmatprep.subr.bf16.mxu0 0
        %347 = vmatpush1.bf16.msra.mxu0 0
        %348 = vmatprep.subr.bf16.mxu0 0
        %349 = vmatpush1.bf16.msra.mxu0 0
        %350 = vmatprep.subr.bf16.mxu0 0
        %351 = vmatpush1.bf16.msra.mxu0 0
        %352 = vmatprep.subr.bf16.mxu0 0
        %353 = vmatpush1.bf16.msra.mxu0 0
        %354 = vmatprep.subr.bf16.mxu0 0
        %355 = vmatpush1.bf16.msra.mxu0 0
        %356 = vmatprep.subr.bf16.mxu0 0
        %357 = vmatpush1.bf16.msra.mxu0 0
        %358 = vmatprep.subr.bf16.mxu0 0
        %359 = vmatpush1.bf16.msra.mxu0 0
        %360 = vmatprep.subr.bf16.mxu0 0
        %361 = vmatpush1.bf16.msra.mxu0 0
        %362 = vmatprep.subr.bf16.mxu0 0
        %363 = vmatpush1.bf16.msra.mxu0 0
        %364 = vmatprep.mubr.bf16.mxu0 0
        %365 = vmatmul.mubr.bf16.gmra.mrb[0].mxu0 %v327
        %v366 = vpop.f32.mrb[0].mxu0
        %v367 = vadd.f32 0.0, %v366
        %v368 = vpop.f32.mrb[0].mxu0
        %v369 = vpop.f32.mrb[0].mxu0
        %v370 = vadd.f32 0.0, %v369
        %v371 = vpop.f32.mrb[0].mxu0
        %372 = vmatprep.mubr.bf16.mxu0 0
        %373 = vmatmul.mubr.bf16.gmra.mrb[0].mxu0 %v330
        %v374 = vpop.f32.mrb[0].mxu0
        %v375 = vadd.f32 0.0, %v374
        %v376 = vpop.f32.mrb[0].mxu0
        %v377 = vpop.f32.mrb[0].mxu0
        %v378 = vpop.f32.mrb[0].mxu0
        %379 = vdwg.mxu0
        %v380 = vpack.c.bf16 %v302, %v301
        %v381 = vpack.c.bf16 %v303, %v303
        %v382 = vld [vmem:[%s4] sm:$0xf]
        %v383 = vld [vmem:[%s4 + $0x4] sm:$0xf]
        %v384 = vld [vmem:[%s4 + $0x8] sm:$0xf]
        %v385 = vld [vmem:[%s4 + $0xc] sm:$0xf]
        %v390 = vunpack.c.l.b16 %v382
        %v391 = vunpack.c.l.b16 %v383
        %v392 = vunpack.c.l.b16 %v384
        %v393 = vunpack.c.l.b16 %v385
        %v394 = vpack.c.b16 %v391, %v390
        %v395 = vpack.c.b16 %v393, %v392
        %v399 = vsel %vm325, %v380, 0
        %v402 = vsel %vm325, %v381, 0
        %404 = vmatprep.subr.bf16.mxu0 0
        %405 = vmatpush1.bf16.msra.mxu0 %v394
        %406 = vmatprep.subr.bf16.mxu0 0
        %407 = vmatpush1.bf16.msra.mxu0 %v395
        %408 = vmatprep.subr.bf16.mxu0 0
        %409 = vmatpush1.bf16.msra.mxu0 0
        %410 = vmatprep.subr.bf16.mxu0 0
        %411 = vmatpush1.bf16.msra.mxu0 0
        %412 = vmatprep.subr.bf16.mxu0 0
        %413 = vmatpush1.bf16.msra.mxu0 0
        %414 = vmatprep.subr.bf16.mxu0 0
        %415 = vmatpush1.bf16.msra.mxu0 0
        %416 = vmatprep.subr.bf16.mxu0 0
        %417 = vmatpush1.bf16.msra.mxu0 0
        %418 = vmatprep.subr.bf16.mxu0 0
        %419 = vmatpush1.bf16.msra.mxu0 0
        %420 = vmatprep.subr.bf16.mxu0 0
        %421 = vmatpush1.bf16.msra.mxu0 0
        %422 = vmatprep.subr.bf16.mxu0 0
        %423 = vmatpush1.bf16.msra.mxu0 0
        %424 = vmatprep.subr.bf16.mxu0 0
        %425 = vmatpush1.bf16.msra.mxu0 0
        %426 = vmatprep.subr.bf16.mxu0 0
        %427 = vmatpush1.bf16.msra.mxu0 0
        %428 = vmatprep.subr.bf16.mxu0 0
        %429 = vmatpush1.bf16.msra.mxu0 0
        %430 = vmatprep.subr.bf16.mxu0 0
        %431 = vmatpush1.bf16.msra.mxu0 0
        %432 = vmatprep.subr.bf16.mxu0 0
        %433 = vmatpush1.bf16.msra.mxu0 0
        %434 = vmatprep.subr.bf16.mxu0 0
        %435 = vmatpush1.bf16.msra.mxu0 0
        %436 = vmatprep.mubr.bf16.mxu0 0
        %437 = vmatmul.mubr.bf16.gmra.mrb[0].mxu0 %v399
        %v438 = vpop.f32.mrb[0].mxu0
        %v439 = vadd.f32 0.0, %v438
        %v440 = vpop.f32.mrb[0].mxu0
        %v441 = vpop.f32.mrb[0].mxu0
        %v442 = vadd.f32 0.0, %v441
        %v443 = vpop.f32.mrb[0].mxu0
        %444 = vmatprep.mubr.bf16.mxu0 0
        %445 = vmatmul.mubr.bf16.gmra.mrb[0].mxu0 %v402
        %v446 = vpop.f32.mrb[0].mxu0
        %v447 = vadd.f32 0.0, %v446
        %v448 = vpop.f32.mrb[0].mxu0
        %v449 = vpop.f32.mrb[0].mxu0
        %v450 = vpop.f32.mrb[0].mxu0
        %451 = vdwg.mxu0
        %v452 = vpack.c.bf16 %v305, %v304
        %v453 = vpack.c.bf16 %v306, %v306
        %v454 = vld [vmem:[%s5] sm:$0xf]
        %v455 = vld [vmem:[%s5 + $0x4] sm:$0xf]
        %v456 = vld [vmem:[%s5 + $0x8] sm:$0xf]
        %v457 = vld [vmem:[%s5 + $0xc] sm:$0xf]
        %v462 = vunpack.c.l.b16 %v454
        %v463 = vunpack.c.l.b16 %v455
        %v464 = vunpack.c.l.b16 %v456
        %v465 = vunpack.c.l.b16 %v457
        %v466 = vpack.c.b16 %v463, %v462
        %v467 = vpack.c.b16 %v465, %v464
        %v471 = vsel %vm325, %v452, 0
        %v474 = vsel %vm325, %v453, 0
        %476 = vmatprep.subr.bf16.mxu0 0
        %477 = vmatpush1.bf16.msra.mxu0 %v466
        %478 = vmatprep.subr.bf16.mxu0 0
        %479 = vmatpush1.bf16.msra.mxu0 %v467
        %480 = vmatprep.subr.bf16.mxu0 0
        %481 = vmatpush1.bf16.msra.mxu0 0
        %482 = vmatprep.subr.bf16.mxu0 0
        %483 = vmatpush1.bf16.msra.mxu0 0
        %484 = vmatprep.subr.bf16.mxu0 0
        %485 = vmatpush1.bf16.msra.mxu0 0
        %486 = vmatprep.subr.bf16.mxu0 0
        %487 = vmatpush1.bf16.msra.mxu0 0
        %488 = vmatprep.subr.bf16.mxu0 0
        %489 = vmatpush1.bf16.msra.mxu0 0
        %490 = vmatprep.subr.bf16.mxu0 0
        %491 = vmatpush1.bf16.msra.mxu0 0
        %492 = vmatprep.subr.bf16.mxu0 0
        %493 = vmatpush1.bf16.msra.mxu0 0
        %494 = vmatprep.subr.bf16.mxu0 0
        %495 = vmatpush1.bf16.msra.mxu0 0
        %496 = vmatprep.subr.bf16.mxu0 0
        %497 = vmatpush1.bf16.msra.mxu0 0
        %498 = vmatprep.subr.bf16.mxu0 0
        %499 = vmatpush1.bf16.msra.mxu0 0
        %500 = vmatprep.subr.bf16.mxu0 0
        %501 = vmatpush1.bf16.msra.mxu0 0
        %502 = vmatprep.subr.bf16.mxu0 0
        %503 = vmatpush1.bf16.msra.mxu0 0
        %504 = vmatprep.subr.bf16.mxu0 0
        %505 = vmatpush1.bf16.msra.mxu0 0
        %506 = vmatprep.subr.bf16.mxu0 0
        %507 = vmatpush1.bf16.msra.mxu0 0
        %508 = vmatprep.mubr.bf16.mxu0 0
        %509 = vmatmul.mubr.bf16.gmra.mrb[0].mxu0 %v471
        %v510 = vpop.f32.mrb[0].mxu0
        %v511 = vadd.f32 0.0, %v510
        %v512 = vpop.f32.mrb[0].mxu0
        %v513 = vpop.f32.mrb[0].mxu0
        %v514 = vadd.f32 0.0, %v513
        %v515 = vpop.f32.mrb[0].mxu0
        %516 = vmatprep.mubr.bf16.mxu0 0
        %517 = vmatmul.mubr.bf16.gmra.mrb[0].mxu0 %v474
        %v518 = vpop.f32.mrb[0].mxu0
        %v519 = vadd.f32 0.0, %v518
        %v520 = vpop.f32.mrb[0].mxu0
        %v521 = vpop.f32.mrb[0].mxu0
        %v522 = vpop.f32.mrb[0].mxu0
        %523 = vdwg.mxu0
        %v524 = vpack.c.bf16 %v367, %v367
        %v525 = vpack.c.bf16 %v439, %v439
        %vm526 = vcmask 64512
        %v528 = vsel %vm526, %v524, 0
        %v531 = vsel %vm526, %v525, 0
        %533 = vmatprep.subr.bf16.mxu0 0
        %534 = vmatpush1.bf16.xpose.msra.mxu0 %v531
        %535 = vmatprep.subr.bf16.mxu0 0
        %536 = vmatpush1.bf16.xpose.msra.mxu0 0
        %537 = vmatprep.subr.bf16.mxu0 0
        %538 = vmatpush1.bf16.xpose.msra.mxu0 0
        %539 = vmatprep.subr.bf16.mxu0 0
        %540 = vmatpush1.bf16.xpose.msra.mxu0 0
        %541 = vmatprep.subr.bf16.mxu0 0
        %542 = vmatpush1.bf16.xpose.msra.mxu0 0
        %543 = vmatprep.subr.bf16.mxu0 0
        %544 = vmatpush1.bf16.xpose.msra.mxu0 0
        %545 = vmatprep.subr.bf16.mxu0 0
        %546 = vmatpush1.bf16.xpose.msra.mxu0 0
        %547 = vmatprep.subr.bf16.mxu0 0
        %548 = vmatpush1.bf16.xpose.msra.mxu0 0
        %549 = vmatprep.subr.bf16.mxu0 0
        %550 = vmatpush1.bf16.xpose.msra.mxu0 0
        %551 = vmatprep.subr.bf16.mxu0 0
        %552 = vmatpush1.bf16.xpose.msra.mxu0 0
        %553 = vmatprep.subr.bf16.mxu0 0
        %554 = vmatpush1.bf16.xpose.msra.mxu0 0
        %555 = vmatprep.subr.bf16.mxu0 0
        %556 = vmatpush1.bf16.xpose.msra.mxu0 0
        %557 = vmatprep.subr.bf16.mxu0 0
        %558 = vmatpush1.bf16.xpose.msra.mxu0 0
        %559 = vmatprep.subr.bf16.mxu0 0
        %560 = vmatpush1.bf16.xpose.msra.mxu0 0
        %561 = vmatprep.subr.bf16.mxu0 0
        %562 = vmatpush1.bf16.xpose.msra.mxu0 0
        %563 = vmatprep.subr.bf16.mxu0 0
        %564 = vmatpush1.bf16.xpose.msra.mxu0 0
        %565 = vmatprep.mubr.bf16.mxu0 0
        %566 = vmatmul.mubr.bf16.gmra.mrb[0].mxu0 %v528
        %v567 = vpop.f32.mrb[0].mxu0
        %v568 = vadd.f32 0.0, %v567
        %v569 = vpop.f32.mrb[0].mxu0
        %v570 = vpop.f32.mrb[0].mxu0
        %v571 = vpop.f32.mrb[0].mxu0
        %572 = vdwg.mxu0
        %v573 = vmul.f32 %v568, 0.35355338
        %v574 = vsel %vm526, %v573, -inf
        %v575 = vrot.slane %v574, 4
        %v576 = vmax.f32 %v574, %v575
        %v577 = vrot.slane %v576, 2
        %v578 = vmax.f32 %v576, %v577
        %v579 = vrot.slane %v578, 1
        %v580 = vmax.f32 %v578, %v579
        %v581 = vsub.f32 %v573, %v580
        %v582 = vmul.f32 %v581, 1.442695
        %v583 = vpow.pop %v582
        %v584 = vsel %vm526, %v583, 0.0
        %v585 = vrot.slane %v584, 4
        %v586 = vadd.f32 %v584, %v585
        %v587 = vrot.slane %v586, 2
        %v588 = vadd.f32 %v586, %v587
        %v589 = vrot.slane %v588, 1
        %v590 = vadd.f32 %v588, %v589
        %v591 = vrcp.pop %v590
        %v592 = vmul.f32 %v583, %v591
        %v593 = vpack.c.bf16 %v592, %v592
        %v594 = vpack.c.bf16 %v511, %v511
        %v596 = vsel %vm526, %v593, 0
        %vm598 = vcmask 1043456
        %v600 = vsel %vm598, %v594, 0
        %602 = vmatprep.subr.bf16.mxu0 0
        %603 = vmatpush1.bf16.msra.mxu0 %v600
        %604 = vmatprep.subr.bf16.mxu0 0
        %605 = vmatpush1.bf16.msra.mxu0 0
        %606 = vmatprep.subr.bf16.mxu0 0
        %607 = vmatpush1.bf16.msra.mxu0 0
        %608 = vmatprep.subr.bf16.mxu0 0
        %609 = vmatpush1.bf16.msra.mxu0 0
        %610 = vmatprep.subr.bf16.mxu0 0
        %611 = vmatpush1.bf16.msra.mxu0 0
        %612 = vmatprep.subr.bf16.mxu0 0
        %613 = vmatpush1.bf16.msra.mxu0 0
        %614 = vmatprep.subr.bf16.mxu0 0
        %615 = vmatpush1.bf16.msra.mxu0 0
        %616 = vmatprep.subr.bf16.mxu0 0
        %617 = vmatpush1.bf16.msra.mxu0 0
        %618 = vmatprep.subr.bf16.mxu0 0
        %619 = vmatpush1.bf16.msra.mxu0 0
        %620 = vmatprep.subr.bf16.mxu0 0
        %621 = vmatpush1.bf16.msra.mxu0 0
        %622 = vmatprep.subr.bf16.mxu0 0
        %623 = vmatpush1.bf16.msra.mxu0 0
        %624 = vmatprep.subr.bf16.mxu0 0
        %625 = vmatpush1.bf16.msra.mxu0 0
        %626 = vmatprep.subr.bf16.mxu0 0
        %627 = vmatpush1.bf16.msra.mxu0 0
        %628 = vmatprep.subr.bf16.mxu0 0
        %629 = vmatpush1.bf16.msra.mxu0 0
        %630 = vmatprep.subr.bf16.mxu0 0
        %631 = vmatpush1.bf16.msra.mxu0 0
        %632 = vmatprep.subr.bf16.mxu0 0
        %633 = vmatpush1.bf16.msra.mxu0 0
        %634 = vmatprep.mubr.bf16.mxu0 0
        %635 = vmatmul.mubr.bf16.gmra.mrb[0].mxu0 %v596
        %v636 = vpop.f32.mrb[0].mxu0
        %v637 = vadd.f32 %v298, %v636
        %v638 = vpop.f32.mrb[0].mxu0
        %v639 = vpop.f32.mrb[0].mxu0
        %v640 = vpop.f32.mrb[0].mxu0
        %641 = vdwg.mxu0
        %v642 = vsel %vm325, %v637, 0.0
        %643 = vadd.xlane.f32.xlu0 %v642
        %v644 = vpop.xlane.xlu0 %643
        %v645 = vrcp.pop 32.0
        %v646 = vmul.f32 %v644, %v645
        %v647 = vsub.f32 %v637, %v646
        %v648 = vmul.f32 %v647, %v647
        %v649 = vsel %vm325, %v648, 0.0
        %650 = vadd.xlane.f32.xlu0 %v649
        %v651 = vpop.xlane.xlu0 %650
        %v652 = vmul.f32 %v651, %v645
        %v653 = vadd.f32 %v652, 1e-05
        %v654 = vrsqrt.pop %v653
        %v655 = vmul.f32 %v647, %v654
        %657 = vrot.lane.b32.xlu0 %v524, 120
        %v658 = vpop.permute.xlu0 %657
        %660 = vrot.lane.b32.xlu0 %v525, 120
        %v661 = vpop.permute.xlu0 %660
        %v663 = vsel %vm526, %v658, 0
        %v666 = vsel %vm526, %v661, 0
        %668 = vmatprep.subr.bf16.mxu0 0
        %669 = vmatpush1.bf16.xpose.msra.mxu0 %v666
        %670 = vmatprep.subr.bf16.mxu0 0
        %671 = vmatpush1.bf16.xpose.msra.mxu0 0
        %672 = vmatprep.subr.bf16.mxu0 0
        %673 = vmatpush1.bf16.xpose.msra.mxu0 0
        %674 = vmatprep.subr.bf16.mxu0 0
        %675 = vmatpush1.bf16.xpose.msra.mxu0 0
        %676 = vmatprep.subr.bf16.mxu0 0
        %677 = vmatpush1.bf16.xpose.msra.mxu0 0
        %678 = vmatprep.subr.bf16.mxu0 0
        %679 = vmatpush1.bf16.xpose.msra.mxu0 0
        %680 = vmatprep.subr.bf16.mxu0 0
        %681 = vmatpush1.bf16.xpose.msra.mxu0 0
        %682 = vmatprep.subr.bf16.mxu0 0
        %683 = vmatpush1.bf16.xpose.msra.mxu0 0
        %684 = vmatprep.subr.bf16.mxu0 0
        %685 = vmatpush1.bf16.xpose.msra.mxu0 0
        %686 = vmatprep.subr.bf16.mxu0 0
        %687 = vmatpush1.bf16.xpose.msra.mxu0 0
        %688 = vmatprep.subr.bf16.mxu0 0
        %689 = vmatpush1.bf16.xpose.msra.mxu0 0
        %690 = vmatprep.subr.bf16.mxu0 0
        %691 = vmatpush1.bf16.xpose.msra.mxu0 0
        %692 = vmatprep.subr.bf16.mxu0 0
        %693 = vmatpush1.bf16.xpose.msra.mxu0 0
        %694 = vmatprep.subr.bf16.mxu0 0
        %695 = vmatpush1.bf16.xpose.msra.mxu0 0
        %696 = vmatprep.subr.bf16.mxu0 0
        %697 = vmatpush1.bf16.xpose.msra.mxu0 0
        %698 = vmatprep.subr.bf16.mxu0 0
        %699 = vmatpush1.bf16.xpose.msra.mxu0 0
        %700 = vmatprep.mubr.bf16.mxu0 0
        %701 = vmatmul.mubr.bf16.gmra.mrb[0].mxu0 %v663
        %v702 = vpop.f32.mrb[0].mxu0
        %v703 = vadd.f32 0.0, %v702
        %v704 = vpop.f32.mrb[0].mxu0
        %v705 = vpop.f32.mrb[0].mxu0
        %v706 = vpop.f32.mrb[0].mxu0
        %707 = vdwg.mxu0
        %v708 = vmul.f32 %v703, 0.35355338
        %v709 = vsel %vm526, %v708, -inf
        %v710 = vrot.slane %v709, 4
        %v711 = vmax.f32 %v709, %v710
        %v712 = vrot.slane %v711, 2
        %v713 = vmax.f32 %v711, %v712
        %v714 = vrot.slane %v713, 1
        %v715 = vmax.f32 %v713, %v714
        %v716 = vsub.f32 %v708, %v715
        %v717 = vmul.f32 %v716, 1.442695
        %v718 = vpow.pop %v717
        %v719 = vsel %vm526, %v718, 0.0
        %v720 = vrot.slane %v719, 4
        %v721 = vadd.f32 %v719, %v720
        %v722 = vrot.slane %v721, 2
        %v723 = vadd.f32 %v721, %v722
        %v724 = vrot.slane %v723, 1
        %v725 = vadd.f32 %v723, %v724
        %v726 = vrcp.pop %v725
        %v727 = vmul.f32 %v718, %v726
        %v728 = vpack.c.bf16 %v727, %v727
        %730 = vrot.lane.b32.xlu0 %v594, 96
        %v731 = vpop.permute.xlu0 %730
        %v733 = vsel %vm526, %v728, 0
        %v736 = vsel %vm598, %v731, 0
        %738 = vmatprep.subr.bf16.mxu0 0
        %739 = vmatpush1.bf16.msra.mxu0 %v736
        %740 = vmatprep.subr.bf16.mxu0 0
        %741 = vmatpush1.bf16.msra.mxu0 0
        %742 = vmatprep.subr.bf16.mxu0 0
        %743 = vmatpush1.bf16.msra.mxu0 0
        %744 = vmatprep.subr.bf16.mxu0 0
        %745 = vmatpush1.bf16.msra.mxu0 0
        %746 = vmatprep.subr.bf16.mxu0 0
        %747 = vmatpush1.bf16.msra.mxu0 0
        %748 = vmatprep.subr.bf16.mxu0 0
        %749 = vmatpush1.bf16.msra.mxu0 0
        %750 = vmatprep.subr.bf16.mxu0 0
        %751 = vmatpush1.bf16.msra.mxu0 0
        %752 = vmatprep.subr.bf16.mxu0 0
        %753 = vmatpush1.bf16.msra.mxu0 0
        %754 = vmatprep.subr.bf16.mxu0 0
        %755 = vmatpush1.bf16.msra.mxu0 0
        %756 = vmatprep.subr.bf16.mxu0 0
        %757 = vmatpush1.bf16.msra.mxu0 0
        %758 = vmatprep.subr.bf16.mxu0 0
        %759 = vmatpush1.bf16.msra.mxu0 0
        %760 = vmatprep.subr.bf16.mxu0 0
        %761 = vmatpush1.bf16.msra.mxu0 0
        %762 = vmatprep.subr.bf16.mxu0 0
        %763 = vmatpush1.bf16.msra.mxu0 0
        %764 = vmatprep.subr.bf16.mxu0 0
        %765 = vmatpush1.bf16.msra.mxu0 0
        %766 = vmatprep.subr.bf16.mxu0 0
        %767 = vmatpush1.bf16.msra.mxu0 0
        %768 = vmatprep.subr.bf16.mxu0 0
        %769 = vmatpush1.bf16.msra.mxu0 0
        %770 = vmatprep.mubr.bf16.mxu0 0
        %771 = vmatmul.mubr.bf16.gmra.mrb[0].mxu0 %v733
        %v772 = vpop.f32.mrb[0].mxu0
        %v773 = vadd.f32 %v298, %v772
        %v774 = vpop.f32.mrb[0].mxu0
        %v775 = vpop.f32.mrb[0].mxu0
        %v776 = vpop.f32.mrb[0].mxu0
        %777 = vdwg.mxu0
        %v778 = vsel %vm325, %v773, 0.0
        %779 = vadd.xlane.f32.xlu0 %v778
        %v780 = vpop.xlane.xlu0 %779
        %v781 = vmul.f32 %v780, %v645
        %v782 = vsub.f32 %v773, %v781
        %v783 = vmul.f32 %v782, %v782
        %v784 = vsel %vm325, %v783, 0.0
        %785 = vadd.xlane.f32.xlu0 %v784
        %v786 = vpop.xlane.xlu0 %785
        %v787 = vmul.f32 %v786, %v645
        %v788 = vadd.f32 %v787, 1e-05
        %v789 = vrsqrt.pop %v788
        %v790 = vmul.f32 %v782, %v789
        %791 = vrot.lane.b32.xlu0 %v524, 112
        %v792 = vpop.permute.xlu0 %791
        %793 = vrot.lane.b32.xlu0 %v525, 112
        %v794 = vpop.permute.xlu0 %793
        %v796 = vsel %vm526, %v792, 0
        %v799 = vsel %vm526, %v794, 0
        %801 = vmatprep.subr.bf16.mxu0 0
        %802 = vmatpush1.bf16.xpose.msra.mxu0 %v799
        %803 = vmatprep.subr.bf16.mxu0 0
        %804 = vmatpush1.bf16.xpose.msra.mxu0 0
        %805 = vmatprep.subr.bf16.mxu0 0
        %806 = vmatpush1.bf16.xpose.msra.mxu0 0
        %807 = vmatprep.subr.bf16.mxu0 0
        %808 = vmatpush1.bf16.xpose.msra.mxu0 0
        %809 = vmatprep.subr.bf16.mxu0 0
        %810 = vmatpush1.bf16.xpose.msra.mxu0 0
        %811 = vmatprep.subr.bf16.mxu0 0
        %812 = vmatpush1.bf16.xpose.msra.mxu0 0
        %813 = vmatprep.subr.bf16.mxu0 0
        %814 = vmatpush1.bf16.xpose.msra.mxu0 0
        %815 = vmatprep.subr.bf16.mxu0 0
        %816 = vmatpush1.bf16.xpose.msra.mxu0 0
        %817 = vmatprep.subr.bf16.mxu0 0
        %818 = vmatpush1.bf16.xpose.msra.mxu0 0
        %819 = vmatprep.subr.bf16.mxu0 0
        %820 = vmatpush1.bf16.xpose.msra.mxu0 0
        %821 = vmatprep.subr.bf16.mxu0 0
        %822 = vmatpush1.bf16.xpose.msra.mxu0 0
        %823 = vmatprep.subr.bf16.mxu0 0
        %824 = vmatpush1.bf16.xpose.msra.mxu0 0
        %825 = vmatprep.subr.bf16.mxu0 0
        %826 = vmatpush1.bf16.xpose.msra.mxu0 0
        %827 = vmatprep.subr.bf16.mxu0 0
        %828 = vmatpush1.bf16.xpose.msra.mxu0 0
        %829 = vmatprep.subr.bf16.mxu0 0
        %830 = vmatpush1.bf16.xpose.msra.mxu0 0
        %831 = vmatprep.subr.bf16.mxu0 0
        %832 = vmatpush1.bf16.xpose.msra.mxu0 0
        %833 = vmatprep.mubr.bf16.mxu0 0
        %834 = vmatmul.mubr.bf16.gmra.mrb[0].mxu0 %v796
        %v835 = vpop.f32.mrb[0].mxu0
        %v836 = vadd.f32 0.0, %v835
        %v837 = vpop.f32.mrb[0].mxu0
        %v838 = vpop.f32.mrb[0].mxu0
        %v839 = vpop.f32.mrb[0].mxu0
        %840 = vdwg.mxu0
        %v841 = vmul.f32 %v836, 0.35355338
        %v842 = vsel %vm526, %v841, -inf
        %v843 = vrot.slane %v842, 4
        %v844 = vmax.f32 %v842, %v843
        %v845 = vrot.slane %v844, 2
        %v846 = vmax.f32 %v844, %v845
        %v847 = vrot.slane %v846, 1
        %v848 = vmax.f32 %v846, %v847
        %v849 = vsub.f32 %v841, %v848
        %v850 = vmul.f32 %v849, 1.442695
        %v851 = vpow.pop %v850
        %v852 = vsel %vm526, %v851, 0.0
        %v853 = vrot.slane %v852, 4
        %v854 = vadd.f32 %v852, %v853
        %v855 = vrot.slane %v854, 2
        %v856 = vadd.f32 %v854, %v855
        %v857 = vrot.slane %v856, 1
        %v858 = vadd.f32 %v856, %v857
        %v859 = vrcp.pop %v858
        %v860 = vmul.f32 %v851, %v859
        %v861 = vpack.c.bf16 %v860, %v860
        %862 = vrot.lane.b32.xlu0 %v594, 64
        %v863 = vpop.permute.xlu0 %862
        %v865 = vsel %vm526, %v861, 0
        %v868 = vsel %vm598, %v863, 0
        %870 = vmatprep.subr.bf16.mxu0 0
        %871 = vmatpush1.bf16.msra.mxu0 %v868
        %872 = vmatprep.subr.bf16.mxu0 0
        %873 = vmatpush1.bf16.msra.mxu0 0
        %874 = vmatprep.subr.bf16.mxu0 0
        %875 = vmatpush1.bf16.msra.mxu0 0
        %876 = vmatprep.subr.bf16.mxu0 0
        %877 = vmatpush1.bf16.msra.mxu0 0
        %878 = vmatprep.subr.bf16.mxu0 0
        %879 = vmatpush1.bf16.msra.mxu0 0
        %880 = vmatprep.subr.bf16.mxu0 0
        %881 = vmatpush1.bf16.msra.mxu0 0
        %882 = vmatprep.subr.bf16.mxu0 0
        %883 = vmatpush1.bf16.msra.mxu0 0
        %884 = vmatprep.subr.bf16.mxu0 0
        %885 = vmatpush1.bf16.msra.mxu0 0
        %886 = vmatprep.subr.bf16.mxu0 0
        %887 = vmatpush1.bf16.msra.mxu0 0
        %888 = vmatprep.subr.bf16.mxu0 0
        %889 = vmatpush1.bf16.msra.mxu0 0
        %890 = vmatprep.subr.bf16.mxu0 0
        %891 = vmatpush1.bf16.msra.mxu0 0
        %892 = vmatprep.subr.bf16.mxu0 0
        %893 = vmatpush1.bf16.msra.mxu0 0
        %894 = vmatprep.subr.bf16.mxu0 0
        %895 = vmatpush1.bf16.msra.mxu0 0
        %896 = vmatprep.subr.bf16.mxu0 0
        %897 = vmatpush1.bf16.msra.mxu0 0
        %898 = vmatprep.subr.bf16.mxu0 0
        %899 = vmatpush1.bf16.msra.mxu0 0
        %900 = vmatprep.subr.bf16.mxu0 0
        %901 = vmatpush1.bf16.msra.mxu0 0
        %902 = vmatprep.mubr.bf16.mxu0 0
        %903 = vmatmul.mubr.bf16.gmra.mrb[0].mxu0 %v865
        %v904 = vpop.f32.mrb[0].mxu0
        %v905 = vadd.f32 %v298, %v904
        %v906 = vpop.f32.mrb[0].mxu0
        %v907 = vpop.f32.mrb[0].mxu0
        %v908 = vpop.f32.mrb[0].mxu0
        %909 = vdwg.mxu0
        %v910 = vsel %vm325, %v905, 0.0
        %911 = vadd.xlane.f32.xlu0 %v910
        %v912 = vpop.xlane.xlu0 %911
        %v913 = vmul.f32 %v912, %v645
        %v914 = vsub.f32 %v905, %v913
        %v915 = vmul.f32 %v914, %v914
        %v916 = vsel %vm325, %v915, 0.0
        %917 = vadd.xlane.f32.xlu0 %v916
        %v918 = vpop.xlane.xlu0 %917
        %v919 = vmul.f32 %v918, %v645
        %v920 = vadd.f32 %v919, 1e-05
        %v921 = vrsqrt.pop %v920
        %v922 = vmul.f32 %v914, %v921
        %923 = vrot.lane.b32.xlu0 %v524, 104
        %v924 = vpop.permute.xlu0 %923
        %925 = vrot.lane.b32.xlu0 %v525, 104
        %v926 = vpop.permute.xlu0 %925
        %v928 = vsel %vm526, %v924, 0
        %v931 = vsel %vm526, %v926, 0
        %933 = vmatprep.subr.bf16.mxu0 0
        %934 = vmatpush1.bf16.xpose.msra.mxu0 %v931
        %935 = vmatprep.subr.bf16.mxu0 0
        %936 = vmatpush1.bf16.xpose.msra.mxu0 0
        %937 = vmatprep.subr.bf16.mxu0 0
        %938 = vmatpush1.bf16.xpose.msra.mxu0 0
        %939 = vmatprep.subr.bf16.mxu0 0
        %940 = vmatpush1.bf16.xpose.msra.mxu0 0
        %941 = vmatprep.subr.bf16.mxu0 0
        %942 = vmatpush1.bf16.xpose.msra.mxu0 0
        %943 = vmatprep.subr.bf16.mxu0 0
        %944 = vmatpush1.bf16.xpose.msra.mxu0 0
        %945 = vmatprep.subr.bf16.mxu0 0
        %946 = vmatpush1.bf16.xpose.msra.mxu0 0
        %947 = vmatprep.subr.bf16.mxu0 0
        %948 = vmatpush1.bf16.xpose.msra.mxu0 0
        %949 = vmatprep.subr.bf16.mxu0 0
        %950 = vmatpush1.bf16.xpose.msra.mxu0 0
        %951 = vmatprep.subr.bf16.mxu0 0
        %952 = vmatpush1.bf16.xpose.msra.mxu0 0
        %953 = vmatprep.subr.bf16.mxu0 0
        %954 = vmatpush1.bf16.xpose.msra.mxu0 0
        %955 = vmatprep.subr.bf16.mxu0 0
        %956 = vmatpush1.bf16.xpose.msra.mxu0 0
        %957 = vmatprep.subr.bf16.mxu0 0
        %958 = vmatpush1.bf16.xpose.msra.mxu0 0
        %959 = vmatprep.subr.bf16.mxu0 0
        %960 = vmatpush1.bf16.xpose.msra.mxu0 0
        %961 = vmatprep.subr.bf16.mxu0 0
        %962 = vmatpush1.bf16.xpose.msra.mxu0 0
        %963 = vmatprep.subr.bf16.mxu0 0
        %964 = vmatpush1.bf16.xpose.msra.mxu0 0
        %965 = vmatprep.mubr.bf16.mxu0 0
        %966 = vmatmul.mubr.bf16.gmra.mrb[0].mxu0 %v928
        %v967 = vpop.f32.mrb[0].mxu0
        %v968 = vadd.f32 0.0, %v967
        %v969 = vpop.f32.mrb[0].mxu0
        %v970 = vpop.f32.mrb[0].mxu0
        %v971 = vpop.f32.mrb[0].mxu0
        %972 = vdwg.mxu0
        %v973 = vmul.f32 %v968, 0.35355338
        %v974 = vsel %vm526, %v973, -inf
        %v975 = vrot.slane %v974, 4
        %v976 = vmax.f32 %v974, %v975
        %v977 = vrot.slane %v976, 2
        %v978 = vmax.f32 %v976, %v977
        %v979 = vrot.slane %v978, 1
        %v980 = vmax.f32 %v978, %v979
        %v981 = vsub.f32 %v973, %v980
        %v982 = vmul.f32 %v981, 1.442695
        %v983 = vpow.pop %v982
        %v984 = vsel %vm526, %v983, 0.0
        %v985 = vrot.slane %v984, 4
        %v986 = vadd.f32 %v984, %v985
        %v987 = vrot.slane %v986, 2
        %v988 = vadd.f32 %v986, %v987
        %v989 = vrot.slane %v988, 1
        %v990 = vadd.f32 %v988, %v989
        %v991 = vrcp.pop %v990
        %v992 = vmul.f32 %v983, %v991
        %v993 = vpack.c.bf16 %v992, %v992
        %994 = vrot.lane.b32.xlu0 %v594, 32
        %v995 = vpop.permute.xlu0 %994
        %v997 = vsel %vm526, %v993, 0
        %v1000 = vsel %vm598, %v995, 0
        %1002 = vmatprep.subr.bf16.mxu0 0
        %1003 = vmatpush1.bf16.msra.mxu0 %v1000
        %1004 = vmatprep.subr.bf16.mxu0 0
        %1005 = vmatpush1.bf16.msra.mxu0 0
        %1006 = vmatprep.subr.bf16.mxu0 0
        %1007 = vmatpush1.bf16.msra.mxu0 0
        %1008 = vmatprep.subr.bf16.mxu0 0
        %1009 = vmatpush1.bf16.msra.mxu0 0
        %1010 = vmatprep.subr.bf16.mxu0 0
        %1011 = vmatpush1.bf16.msra.mxu0 0
        %1012 = vmatprep.subr.bf16.mxu0 0
        %1013 = vmatpush1.bf16.msra.mxu0 0
        %1014 = vmatprep.subr.bf16.mxu0 0
        %1015 = vmatpush1.bf16.msra.mxu0 0
        %1016 = vmatprep.subr.bf16.mxu0 0
        %1017 = vmatpush1.bf16.msra.mxu0 0
        %1018 = vmatprep.subr.bf16.mxu0 0
        %1019 = vmatpush1.bf16.msra.mxu0 0
        %1020 = vmatprep.subr.bf16.mxu0 0
        %1021 = vmatpush1.bf16.msra.mxu0 0
        %1022 = vmatprep.subr.bf16.mxu0 0
        %1023 = vmatpush1.bf16.msra.mxu0 0
        %1024 = vmatprep.subr.bf16.mxu0 0
        %1025 = vmatpush1.bf16.msra.mxu0 0
        %1026 = vmatprep.subr.bf16.mxu0 0
        %1027 = vmatpush1.bf16.msra.mxu0 0
        %1028 = vmatprep.subr.bf16.mxu0 0
        %1029 = vmatpush1.bf16.msra.mxu0 0
        %1030 = vmatprep.subr.bf16.mxu0 0
        %1031 = vmatpush1.bf16.msra.mxu0 0
        %1032 = vmatprep.subr.bf16.mxu0 0
        %1033 = vmatpush1.bf16.msra.mxu0 0
        %1034 = vmatprep.mubr.bf16.mxu0 0
        %1035 = vmatmul.mubr.bf16.gmra.mrb[0].mxu0 %v997
        %v1036 = vpop.f32.mrb[0].mxu0
        %v1037 = vadd.f32 %v298, %v1036
        %v1038 = vpop.f32.mrb[0].mxu0
        %v1039 = vpop.f32.mrb[0].mxu0
        %v1040 = vpop.f32.mrb[0].mxu0
        %1041 = vdwg.mxu0
        %v1042 = vsel %vm325, %v1037, 0.0
        %1043 = vadd.xlane.f32.xlu0 %v1042
        %v1044 = vpop.xlane.xlu0 %1043
        %v1045 = vmul.f32 %v1044, %v645
        %v1046 = vsub.f32 %v1037, %v1045
        %v1047 = vmul.f32 %v1046, %v1046
        %v1048 = vsel %vm325, %v1047, 0.0
        %1049 = vadd.xlane.f32.xlu0 %v1048
        %v1050 = vpop.xlane.xlu0 %1049
        %v1051 = vmul.f32 %v1050, %v645
        %v1052 = vadd.f32 %v1051, 1e-05
        %v1053 = vrsqrt.pop %v1052
        %v1054 = vmul.f32 %v1046, %v1053
        %1056 = vrot.lane.b32.xlu0 %v790, 32
        %v1057 = vpop.permute.xlu0 %1056
        %1060 = vrot.lane.b32.xlu0 %v922, 64
        %v1061 = vpop.permute.xlu0 %1060
        %1064 = vrot.lane.b32.xlu0 %v1054, 96
        %v1065 = vpop.permute.xlu0 %1064
        %v1067 = vsel %vm325, %v655, %v1057
        %vm1068 = vcmask 523264
        %v1069 = vsel %vm1068, %v1067, %v1061
        %vm1070 = vcmask 785408
        %v1071 = vsel %vm1070, %v1069, %v1065
        %1072 = vst [vmem:[%s277] sm:$0xff] %v1071
        %v1073 = vpack.c.bf16 %v370, %v370
        %v1074 = vpack.c.bf16 %v442, %v442
        %v1076 = vsel %vm526, %v1073, 0
        %v1079 = vsel %vm526, %v1074, 0
        %1081 = vmatprep.subr.bf16.mxu0 0
        %1082 = vmatpush1.bf16.xpose.msra.mxu0 %v1079
        %1083 = vmatprep.subr.bf16.mxu0 0
        %1084 = vmatpush1.bf16.xpose.msra.mxu0 0
        %1085 = vmatprep.subr.bf16.mxu0 0
        %1086 = vmatpush1.bf16.xpose.msra.mxu0 0
        %1087 = vmatprep.subr.bf16.mxu0 0
        %1088 = vmatpush1.bf16.xpose.msra.mxu0 0
        %1089 = vmatprep.subr.bf16.mxu0 0
        %1090 = vmatpush1.bf16.xpose.msra.mxu0 0
        %1091 = vmatprep.subr.bf16.mxu0 0
        %1092 = vmatpush1.bf16.xpose.msra.mxu0 0
        %1093 = vmatprep.subr.bf16.mxu0 0
        %1094 = vmatpush1.bf16.xpose.msra.mxu0 0
        %1095 = vmatprep.subr.bf16.mxu0 0
        %1096 = vmatpush1.bf16.xpose.msra.mxu0 0
        %1097 = vmatprep.subr.bf16.mxu0 0
        %1098 = vmatpush1.bf16.xpose.msra.mxu0 0
        %1099 = vmatprep.subr.bf16.mxu0 0
        %1100 = vmatpush1.bf16.xpose.msra.mxu0 0
        %1101 = vmatprep.subr.bf16.mxu0 0
        %1102 = vmatpush1.bf16.xpose.msra.mxu0 0
        %1103 = vmatprep.subr.bf16.mxu0 0
        %1104 = vmatpush1.bf16.xpose.msra.mxu0 0
        %1105 = vmatprep.subr.bf16.mxu0 0
        %1106 = vmatpush1.bf16.xpose.msra.mxu0 0
        %1107 = vmatprep.subr.bf16.mxu0 0
        %1108 = vmatpush1.bf16.xpose.msra.mxu0 0
        %1109 = vmatprep.subr.bf16.mxu0 0
        %1110 = vmatpush1.bf16.xpose.msra.mxu0 0
        %1111 = vmatprep.subr.bf16.mxu0 0
        %1112 = vmatpush1.bf16.xpose.msra.mxu0 0
        %1113 = vmatprep.mubr.bf16.mxu0 0
        %1114 = vmatmul.mubr.bf16.gmra.mrb[0].mxu0 %v1076
        %v1115 = vpop.f32.mrb[0].mxu0
        %v1116 = vadd.f32 0.0, %v1115
        %v1117 = vpop.f32.mrb[0].mxu0
        %v1118 = vpop.f32.mrb[0].mxu0
        %v1119 = vpop.f32.mrb[0].mxu0
        %1120 = vdwg.mxu0
        %v1121 = vmul.f32 %v1116, 0.35355338
        %v1122 = vsel %vm526, %v1121, -inf
        %v1123 = vrot.slane %v1122, 4
        %v1124 = vmax.f32 %v1122, %v1123
        %v1125 = vrot.slane %v1124, 2
        %v1126 = vmax.f32 %v1124, %v1125
        %v1127 = vrot.slane %v1126, 1
        %v1128 = vmax.f32 %v1126, %v1127
        %v1129 = vsub.f32 %v1121, %v1128
        %v1130 = vmul.f32 %v1129, 1.442695
        %v1131 = vpow.pop %v1130
        %v1132 = vsel %vm526, %v1131, 0.0
        %v1133 = vrot.slane %v1132, 4
        %v1134 = vadd.f32 %v1132, %v1133
        %v1135 = vrot.slane %v1134, 2
        %v1136 = vadd.f32 %v1134, %v1135
        %v1137 = vrot.slane %v1136, 1
        %v1138 = vadd.f32 %v1136, %v1137
        %v1139 = vrcp.pop %v1138
        %v1140 = vmul.f32 %v1131, %v1139
        %v1141 = vpack.c.bf16 %v1140, %v1140
        %v1142 = vpack.c.bf16 %v514, %v514
        %v1144 = vsel %vm526, %v1141, 0
        %v1147 = vsel %vm598, %v1142, 0
        %1149 = vmatprep.subr.bf16.mxu0 0
        %1150 = vmatpush1.bf16.msra.mxu0 %v1147
        %1151 = vmatprep.subr.bf16.mxu0 0
        %1152 = vmatpush1.bf16.msra.mxu0 0
        %1153 = vmatprep.subr.bf16.mxu0 0
        %1154 = vmatpush1.bf16.msra.mxu0 0
        %1155 = vmatprep.subr.bf16.mxu0 0
        %1156 = vmatpush1.bf16.msra.mxu0 0
        %1157 = vmatprep.subr.bf16.mxu0 0
        %1158 = vmatpush1.bf16.msra.mxu0 0
        %1159 = vmatprep.subr.bf16.mxu0 0
        %1160 = vmatpush1.bf16.msra.mxu0 0
        %1161 = vmatprep.subr.bf16.mxu0 0
        %1162 = vmatpush1.bf16.msra.mxu0 0
        %1163 = vmatprep.subr.bf16.mxu0 0
        %1164 = vmatpush1.bf16.msra.mxu0 0
        %1165 = vmatprep.subr.bf16.mxu0 0
        %1166 = vmatpush1.bf16.msra.mxu0 0
        %1167 = vmatprep.subr.bf16.mxu0 0
        %1168 = vmatpush1.bf16.msra.mxu0 0
        %1169 = vmatprep.subr.bf16.mxu0 0
        %1170 = vmatpush1.bf16.msra.mxu0 0
        %1171 = vmatprep.subr.bf16.mxu0 0
        %1172 = vmatpush1.bf16.msra.mxu0 0
        %1173 = vmatprep.subr.bf16.mxu0 0
        %1174 = vmatpush1.bf16.msra.mxu0 0
        %1175 = vmatprep.subr.bf16.mxu0 0
        %1176 = vmatpush1.bf16.msra.mxu0 0
        %1177 = vmatprep.subr.bf16.mxu0 0
        %1178 = vmatpush1.bf16.msra.mxu0 0
        %1179 = vmatprep.subr.bf16.mxu0 0
        %1180 = vmatpush1.bf16.msra.mxu0 0
        %1181 = vmatprep.mubr.bf16.mxu0 0
        %1182 = vmatmul.mubr.bf16.gmra.mrb[0].mxu0 %v1144
        %v1183 = vpop.f32.mrb[0].mxu0
        %v1184 = vadd.f32 %v299, %v1183
        %v1185 = vpop.f32.mrb[0].mxu0
        %v1186 = vpop.f32.mrb[0].mxu0
        %v1187 = vpop.f32.mrb[0].mxu0
        %1188 = vdwg.mxu0
        %v1189 = vsel %vm325, %v1184, 0.0
        %1190 = vadd.xlane.f32.xlu0 %v1189
        %v1191 = vpop.xlane.xlu0 %1190
        %v1192 = vmul.f32 %v1191, %v645
        %v1193 = vsub.f32 %v1184, %v1192
        %v1194 = vmul.f32 %v1193, %v1193
        %v1195 = vsel %vm325, %v1194, 0.0
        %1196 = vadd.xlane.f32.xlu0 %v1195
        %v1197 = vpop.xlane.xlu0 %1196
        %v1198 = vmul.f32 %v1197, %v645
        %v1199 = vadd.f32 %v1198, 1e-05
        %v1200 = vrsqrt.pop %v1199
        %v1201 = vmul.f32 %v1193, %v1200
        %1203 = vrot.lane.b32.xlu0 %v1073, 120
        %v1204 = vpop.permute.xlu0 %1203
        %1206 = vrot.lane.b32.xlu0 %v1074, 120
        %v1207 = vpop.permute.xlu0 %1206
        %v1209 = vsel %vm526, %v1204, 0
        %v1212 = vsel %vm526, %v1207, 0
        %1214 = vmatprep.subr.bf16.mxu0 0
        %1215 = vmatpush1.bf16.xpose.msra.mxu0 %v1212
        %1216 = vmatprep.subr.bf16.mxu0 0
        %1217 = vmatpush1.bf16.xpose.msra.mxu0 0
        %1218 = vmatprep.subr.bf16.mxu0 0
        %1219 = vmatpush1.bf16.xpose.msra.mxu0 0
        %1220 = vmatprep.subr.bf16.mxu0 0
        %1221 = vmatpush1.bf16.xpose.msra.mxu0 0
        %1222 = vmatprep.subr.bf16.mxu0 0
        %1223 = vmatpush1.bf16.xpose.msra.mxu0 0
        %1224 = vmatprep.subr.bf16.mxu0 0
        %1225 = vmatpush1.bf16.xpose.msra.mxu0 0
        %1226 = vmatprep.subr.bf16.mxu0 0
        %1227 = vmatpush1.bf16.xpose.msra.mxu0 0
        %1228 = vmatprep.subr.bf16.mxu0 0
        %1229 = vmatpush1.bf16.xpose.msra.mxu0 0
        %1230 = vmatprep.subr.bf16.mxu0 0
        %1231 = vmatpush1.bf16.xpose.msra.mxu0 0
        %1232 = vmatprep.subr.bf16.mxu0 0
        %1233 = vmatpush1.bf16.xpose.msra.mxu0 0
        %1234 = vmatprep.subr.bf16.mxu0 0
        %1235 = vmatpush1.bf16.xpose.msra.mxu0 0
        %1236 = vmatprep.subr.bf16.mxu0 0
        %1237 = vmatpush1.bf16.xpose.msra.mxu0 0
        %1238 = vmatprep.subr.bf16.mxu0 0
        %1239 = vmatpush1.bf16.xpose.msra.mxu0 0
        %1240 = vmatprep.subr.bf16.mxu0 0
        %1241 = vmatpush1.bf16.xpose.msra.mxu0 0
        %1242 = vmatprep.subr.bf16.mxu0 0
        %1243 = vmatpush1.bf16.xpose.msra.mxu0 0
        %1244 = vmatprep.subr.bf16.mxu0 0
        %1245 = vmatpush1.bf16.xpose.msra.mxu0 0
        %1246 = vmatprep.mubr.bf16.mxu0 0
        %1247 = vmatmul.mubr.bf16.gmra.mrb[0].mxu0 %v1209
        %v1248 = vpop.f32.mrb[0].mxu0
        %v1249 = vadd.f32 0.0, %v1248
        %v1250 = vpop.f32.mrb[0].mxu0
        %v1251 = vpop.f32.mrb[0].mxu0
        %v1252 = vpop.f32.mrb[0].mxu0
        %1253 = vdwg.mxu0
        %v1254 = vmul.f32 %v1249, 0.35355338
        %v1255 = vsel %vm526, %v1254, -inf
        %v1256 = vrot.slane %v1255, 4
        %v1257 = vmax.f32 %v1255, %v1256
        %v1258 = vrot.slane %v1257, 2
        %v1259 = vmax.f32 %v1257, %v1258
        %v1260 = vrot.slane %v1259, 1
        %v1261 = vmax.f32 %v1259, %v1260
        %v1262 = vsub.f32 %v1254, %v1261
        %v1263 = vmul.f32 %v1262, 1.442695
        %v1264 = vpow.pop %v1263
        %v1265 = vsel %vm526, %v1264, 0.0
        %v1266 = vrot.slane %v1265, 4
        %v1267 = vadd.f32 %v1265, %v1266
        %v1268 = vrot.slane %v1267, 2
        %v1269 = vadd.f32 %v1267, %v1268
        %v1270 = vrot.slane %v1269, 1
        %v1271 = vadd.f32 %v1269, %v1270
        %v1272 = vrcp.pop %v1271
        %v1273 = vmul.f32 %v1264, %v1272
        %v1274 = vpack.c.bf16 %v1273, %v1273
        %1276 = vrot.lane.b32.xlu0 %v1142, 96
        %v1277 = vpop.permute.xlu0 %1276
        %v1279 = vsel %vm526, %v1274, 0
        %v1282 = vsel %vm598, %v1277, 0
        %1284 = vmatprep.subr.bf16.mxu0 0
        %1285 = vmatpush1.bf16.msra.mxu0 %v1282
        %1286 = vmatprep.subr.bf16.mxu0 0
        %1287 = vmatpush1.bf16.msra.mxu0 0
        %1288 = vmatprep.subr.bf16.mxu0 0
        %1289 = vmatpush1.bf16.msra.mxu0 0
        %1290 = vmatprep.subr.bf16.mxu0 0
        %1291 = vmatpush1.bf16.msra.mxu0 0
        %1292 = vmatprep.subr.bf16.mxu0 0
        %1293 = vmatpush1.bf16.msra.mxu0 0
        %1294 = vmatprep.subr.bf16.mxu0 0
        %1295 = vmatpush1.bf16.msra.mxu0 0
        %1296 = vmatprep.subr.bf16.mxu0 0
        %1297 = vmatpush1.bf16.msra.mxu0 0
        %1298 = vmatprep.subr.bf16.mxu0 0
        %1299 = vmatpush1.bf16.msra.mxu0 0
        %1300 = vmatprep.subr.bf16.mxu0 0
        %1301 = vmatpush1.bf16.msra.mxu0 0
        %1302 = vmatprep.subr.bf16.mxu0 0
        %1303 = vmatpush1.bf16.msra.mxu0 0
        %1304 = vmatprep.subr.bf16.mxu0 0
        %1305 = vmatpush1.bf16.msra.mxu0 0
        %1306 = vmatprep.subr.bf16.mxu0 0
        %1307 = vmatpush1.bf16.msra.mxu0 0
        %1308 = vmatprep.subr.bf16.mxu0 0
        %1309 = vmatpush1.bf16.msra.mxu0 0
        %1310 = vmatprep.subr.bf16.mxu0 0
        %1311 = vmatpush1.bf16.msra.mxu0 0
        %1312 = vmatprep.subr.bf16.mxu0 0
        %1313 = vmatpush1.bf16.msra.mxu0 0
        %1314 = vmatprep.subr.bf16.mxu0 0
        %1315 = vmatpush1.bf16.msra.mxu0 0
        %1316 = vmatprep.mubr.bf16.mxu0 0
        %1317 = vmatmul.mubr.bf16.gmra.mrb[0].mxu0 %v1279
        %v1318 = vpop.f32.mrb[0].mxu0
        %v1319 = vadd.f32 %v299, %v1318
        %v1320 = vpop.f32.mrb[0].mxu0
        %v1321 = vpop.f32.mrb[0].mxu0
        %v1322 = vpop.f32.mrb[0].mxu0
        %1323 = vdwg.mxu0
        %v1324 = vsel %vm325, %v1319, 0.0
        %1325 = vadd.xlane.f32.xlu0 %v1324
        %v1326 = vpop.xlane.xlu0 %1325
        %v1327 = vmul.f32 %v1326, %v645
        %v1328 = vsub.f32 %v1319, %v1327
        %v1329 = vmul.f32 %v1328, %v1328
        %v1330 = vsel %vm325, %v1329, 0.0
        %1331 = vadd.xlane.f32.xlu0 %v1330
        %v1332 = vpop.xlane.xlu0 %1331
        %v1333 = vmul.f32 %v1332, %v645
        %v1334 = vadd.f32 %v1333, 1e-05
        %v1335 = vrsqrt.pop %v1334
        %v1336 = vmul.f32 %v1328, %v1335
        %1337 = vrot.lane.b32.xlu0 %v1073, 112
        %v1338 = vpop.permute.xlu0 %1337
        %1339 = vrot.lane.b32.xlu0 %v1074, 112
        %v1340 = vpop.permute.xlu0 %1339
        %v1342 = vsel %vm526, %v1338, 0
        %v1345 = vsel %vm526, %v1340, 0
        %1347 = vmatprep.subr.bf16.mxu0 0
        %1348 = vmatpush1.bf16.xpose.msra.mxu0 %v1345
        %1349 = vmatprep.subr.bf16.mxu0 0
        %1350 = vmatpush1.bf16.xpose.msra.mxu0 0
        %1351 = vmatprep.subr.bf16.mxu0 0
        %1352 = vmatpush1.bf16.xpose.msra.mxu0 0
        %1353 = vmatprep.subr.bf16.mxu0 0
        %1354 = vmatpush1.bf16.xpose.msra.mxu0 0
        %1355 = vmatprep.subr.bf16.mxu0 0
        %1356 = vmatpush1.bf16.xpose.msra.mxu0 0
        %1357 = vmatprep.subr.bf16.mxu0 0
        %1358 = vmatpush1.bf16.xpose.msra.mxu0 0
        %1359 = vmatprep.subr.bf16.mxu0 0
        %1360 = vmatpush1.bf16.xpose.msra.mxu0 0
        %1361 = vmatprep.subr.bf16.mxu0 0
        %1362 = vmatpush1.bf16.xpose.msra.mxu0 0
        %1363 = vmatprep.subr.bf16.mxu0 0
        %1364 = vmatpush1.bf16.xpose.msra.mxu0 0
        %1365 = vmatprep.subr.bf16.mxu0 0
        %1366 = vmatpush1.bf16.xpose.msra.mxu0 0
        %1367 = vmatprep.subr.bf16.mxu0 0
        %1368 = vmatpush1.bf16.xpose.msra.mxu0 0
        %1369 = vmatprep.subr.bf16.mxu0 0
        %1370 = vmatpush1.bf16.xpose.msra.mxu0 0
        %1371 = vmatprep.subr.bf16.mxu0 0
        %1372 = vmatpush1.bf16.xpose.msra.mxu0 0
        %1373 = vmatprep.subr.bf16.mxu0 0
        %1374 = vmatpush1.bf16.xpose.msra.mxu0 0
        %1375 = vmatprep.subr.bf16.mxu0 0
        %1376 = vmatpush1.bf16.xpose.msra.mxu0 0
        %1377 = vmatprep.subr.bf16.mxu0 0
        %1378 = vmatpush1.bf16.xpose.msra.mxu0 0
        %1379 = vmatprep.mubr.bf16.mxu0 0
        %1380 = vmatmul.mubr.bf16.gmra.mrb[0].mxu0 %v1342
        %v1381 = vpop.f32.mrb[0].mxu0
        %v1382 = vadd.f32 0.0, %v1381
        %v1383 = vpop.f32.mrb[0].mxu0
        %v1384 = vpop.f32.mrb[0].mxu0
        %v1385 = vpop.f32.mrb[0].mxu0
        %1386 = vdwg.mxu0
        %v1387 = vmul.f32 %v1382, 0.35355338
        %v1388 = vsel %vm526, %v1387, -inf
        %v1389 = vrot.slane %v1388, 4
        %v1390 = vmax.f32 %v1388, %v1389
        %v1391 = vrot.slane %v1390, 2
        %v1392 = vmax.f32 %v1390, %v1391
        %v1393 = vrot.slane %v1392, 1
        %v1394 = vmax.f32 %v1392, %v1393
        %v1395 = vsub.f32 %v1387, %v1394
        %v1396 = vmul.f32 %v1395, 1.442695
        %v1397 = vpow.pop %v1396
        %v1398 = vsel %vm526, %v1397, 0.0
        %v1399 = vrot.slane %v1398, 4
        %v1400 = vadd.f32 %v1398, %v1399
        %v1401 = vrot.slane %v1400, 2
        %v1402 = vadd.f32 %v1400, %v1401
        %v1403 = vrot.slane %v1402, 1
        %v1404 = vadd.f32 %v1402, %v1403
        %v1405 = vrcp.pop %v1404
        %v1406 = vmul.f32 %v1397, %v1405
        %v1407 = vpack.c.bf16 %v1406, %v1406
        %1408 = vrot.lane.b32.xlu0 %v1142, 64
        %v1409 = vpop.permute.xlu0 %1408
        %v1411 = vsel %vm526, %v1407, 0
        %v1414 = vsel %vm598, %v1409, 0
        %1416 = vmatprep.subr.bf16.mxu0 0
        %1417 = vmatpush1.bf16.msra.mxu0 %v1414
        %1418 = vmatprep.subr.bf16.mxu0 0
        %1419 = vmatpush1.bf16.msra.mxu0 0
        %1420 = vmatprep.subr.bf16.mxu0 0
        %1421 = vmatpush1.bf16.msra.mxu0 0
        %1422 = vmatprep.subr.bf16.mxu0 0
        %1423 = vmatpush1.bf16.msra.mxu0 0
        %1424 = vmatprep.subr.bf16.mxu0 0
        %1425 = vmatpush1.bf16.msra.mxu0 0
        %1426 = vmatprep.subr.bf16.mxu0 0
        %1427 = vmatpush1.bf16.msra.mxu0 0
        %1428 = vmatprep.subr.bf16.mxu0 0
        %1429 = vmatpush1.bf16.msra.mxu0 0
        %1430 = vmatprep.subr.bf16.mxu0 0
        %1431 = vmatpush1.bf16.msra.mxu0 0
        %1432 = vmatprep.subr.bf16.mxu0 0
        %1433 = vmatpush1.bf16.msra.mxu0 0
        %1434 = vmatprep.subr.bf16.mxu0 0
        %1435 = vmatpush1.bf16.msra.mxu0 0
        %1436 = vmatprep.subr.bf16.mxu0 0
        %1437 = vmatpush1.bf16.msra.mxu0 0
        %1438 = vmatprep.subr.bf16.mxu0 0
        %1439 = vmatpush1.bf16.msra.mxu0 0
        %1440 = vmatprep.subr.bf16.mxu0 0
        %1441 = vmatpush1.bf16.msra.mxu0 0
        %1442 = vmatprep.subr.bf16.mxu0 0
        %1443 = vmatpush1.bf16.msra.mxu0 0
        %1444 = vmatprep.subr.bf16.mxu0 0
        %1445 = vmatpush1.bf16.msra.mxu0 0
        %1446 = vmatprep.subr.bf16.mxu0 0
        %1447 = vmatpush1.bf16.msra.mxu0 0
        %1448 = vmatprep.mubr.bf16.mxu0 0
        %1449 = vmatmul.mubr.bf16.gmra.mrb[0].mxu0 %v1411
        %v1450 = vpop.f32.mrb[0].mxu0
        %v1451 = vadd.f32 %v299, %v1450
        %v1452 = vpop.f32.mrb[0].mxu0
        %v1453 = vpop.f32.mrb[0].mxu0
        %v1454 = vpop.f32.mrb[0].mxu0
        %1455 = vdwg.mxu0
        %v1456 = vsel %vm325, %v1451, 0.0
        %1457 = vadd.xlane.f32.xlu0 %v1456
        %v1458 = vpop.xlane.xlu0 %1457
        %v1459 = vmul.f32 %v1458, %v645
        %v1460 = vsub.f32 %v1451, %v1459
        %v1461 = vmul.f32 %v1460, %v1460
        %v1462 = vsel %vm325, %v1461, 0.0
        %1463 = vadd.xlane.f32.xlu0 %v1462
        %v1464 = vpop.xlane.xlu0 %1463
        %v1465 = vmul.f32 %v1464, %v645
        %v1466 = vadd.f32 %v1465, 1e-05
        %v1467 = vrsqrt.pop %v1466
        %v1468 = vmul.f32 %v1460, %v1467
        %1469 = vrot.lane.b32.xlu0 %v1073, 104
        %v1470 = vpop.permute.xlu0 %1469
        %1471 = vrot.lane.b32.xlu0 %v1074, 104
        %v1472 = vpop.permute.xlu0 %1471
        %v1474 = vsel %vm526, %v1470, 0
        %v1477 = vsel %vm526, %v1472, 0
        %1479 = vmatprep.subr.bf16.mxu0 0
        %1480 = vmatpush1.bf16.xpose.msra.mxu0 %v1477
        %1481 = vmatprep.subr.bf16.mxu0 0
        %1482 = vmatpush1.bf16.xpose.msra.mxu0 0
        %1483 = vmatprep.subr.bf16.mxu0 0
        %1484 = vmatpush1.bf16.xpose.msra.mxu0 0
        %1485 = vmatprep.subr.bf16.mxu0 0
        %1486 = vmatpush1.bf16.xpose.msra.mxu0 0
        %1487 = vmatprep.subr.bf16.mxu0 0
        %1488 = vmatpush1.bf16.xpose.msra.mxu0 0
        %1489 = vmatprep.subr.bf16.mxu0 0
        %1490 = vmatpush1.bf16.xpose.msra.mxu0 0
        %1491 = vmatprep.subr.bf16.mxu0 0
        %1492 = vmatpush1.bf16.xpose.msra.mxu0 0
        %1493 = vmatprep.subr.bf16.mxu0 0
        %1494 = vmatpush1.bf16.xpose.msra.mxu0 0
        %1495 = vmatprep.subr.bf16.mxu0 0
        %1496 = vmatpush1.bf16.xpose.msra.mxu0 0
        %1497 = vmatprep.subr.bf16.mxu0 0
        %1498 = vmatpush1.bf16.xpose.msra.mxu0 0
        %1499 = vmatprep.subr.bf16.mxu0 0
        %1500 = vmatpush1.bf16.xpose.msra.mxu0 0
        %1501 = vmatprep.subr.bf16.mxu0 0
        %1502 = vmatpush1.bf16.xpose.msra.mxu0 0
        %1503 = vmatprep.subr.bf16.mxu0 0
        %1504 = vmatpush1.bf16.xpose.msra.mxu0 0
        %1505 = vmatprep.subr.bf16.mxu0 0
        %1506 = vmatpush1.bf16.xpose.msra.mxu0 0
        %1507 = vmatprep.subr.bf16.mxu0 0
        %1508 = vmatpush1.bf16.xpose.msra.mxu0 0
        %1509 = vmatprep.subr.bf16.mxu0 0
        %1510 = vmatpush1.bf16.xpose.msra.mxu0 0
        %1511 = vmatprep.mubr.bf16.mxu0 0
        %1512 = vmatmul.mubr.bf16.gmra.mrb[0].mxu0 %v1474
        %v1513 = vpop.f32.mrb[0].mxu0
        %v1514 = vadd.f32 0.0, %v1513
        %v1515 = vpop.f32.mrb[0].mxu0
        %v1516 = vpop.f32.mrb[0].mxu0
        %v1517 = vpop.f32.mrb[0].mxu0
        %1518 = vdwg.mxu0
        %v1519 = vmul.f32 %v1514, 0.35355338
        %v1520 = vsel %vm526, %v1519, -inf
        %v1521 = vrot.slane %v1520, 4
        %v1522 = vmax.f32 %v1520, %v1521
        %v1523 = vrot.slane %v1522, 2
        %v1524 = vmax.f32 %v1522, %v1523
        %v1525 = vrot.slane %v1524, 1
        %v1526 = vmax.f32 %v1524, %v1525
        %v1527 = vsub.f32 %v1519, %v1526
        %v1528 = vmul.f32 %v1527, 1.442695
        %v1529 = vpow.pop %v1528
        %v1530 = vsel %vm526, %v1529, 0.0
        %v1531 = vrot.slane %v1530, 4
        %v1532 = vadd.f32 %v1530, %v1531
        %v1533 = vrot.slane %v1532, 2
        %v1534 = vadd.f32 %v1532, %v1533
        %v1535 = vrot.slane %v1534, 1
        %v1536 = vadd.f32 %v1534, %v1535
        %v1537 = vrcp.pop %v1536
        %v1538 = vmul.f32 %v1529, %v1537
        %v1539 = vpack.c.bf16 %v1538, %v1538
        %1540 = vrot.lane.b32.xlu0 %v1142, 32
        %v1541 = vpop.permute.xlu0 %1540
        %v1543 = vsel %vm526, %v1539, 0
        %v1546 = vsel %vm598, %v1541, 0
        %1548 = vmatprep.subr.bf16.mxu0 0
        %1549 = vmatpush1.bf16.msra.mxu0 %v1546
        %1550 = vmatprep.subr.bf16.mxu0 0
        %1551 = vmatpush1.bf16.msra.mxu0 0
        %1552 = vmatprep.subr.bf16.mxu0 0
        %1553 = vmatpush1.bf16.msra.mxu0 0
        %1554 = vmatprep.subr.bf16.mxu0 0
        %1555 = vmatpush1.bf16.msra.mxu0 0
        %1556 = vmatprep.subr.bf16.mxu0 0
        %1557 = vmatpush1.bf16.msra.mxu0 0
        %1558 = vmatprep.subr.bf16.mxu0 0
        %1559 = vmatpush1.bf16.msra.mxu0 0
        %1560 = vmatprep.subr.bf16.mxu0 0
        %1561 = vmatpush1.bf16.msra.mxu0 0
        %1562 = vmatprep.subr.bf16.mxu0 0
        %1563 = vmatpush1.bf16.msra.mxu0 0
        %1564 = vmatprep.subr.bf16.mxu0 0
        %1565 = vmatpush1.bf16.msra.mxu0 0
        %1566 = vmatprep.subr.bf16.mxu0 0
        %1567 = vmatpush1.bf16.msra.mxu0 0
        %1568 = vmatprep.subr.bf16.mxu0 0
        %1569 = vmatpush1.bf16.msra.mxu0 0
        %1570 = vmatprep.subr.bf16.mxu0 0
        %1571 = vmatpush1.bf16.msra.mxu0 0
        %1572 = vmatprep.subr.bf16.mxu0 0
        %1573 = vmatpush1.bf16.msra.mxu0 0
        %1574 = vmatprep.subr.bf16.mxu0 0
        %1575 = vmatpush1.bf16.msra.mxu0 0
        %1576 = vmatprep.subr.bf16.mxu0 0
        %1577 = vmatpush1.bf16.msra.mxu0 0
        %1578 = vmatprep.subr.bf16.mxu0 0
        %1579 = vmatpush1.bf16.msra.mxu0 0
        %1580 = vmatprep.mubr.bf16.mxu0 0
        %1581 = vmatmul.mubr.bf16.gmra.mrb[0].mxu0 %v1543
        %v1582 = vpop.f32.mrb[0].mxu0
        %v1583 = vadd.f32 %v299, %v1582
        %v1584 = vpop.f32.mrb[0].mxu0
        %v1585 = vpop.f32.mrb[0].mxu0
        %v1586 = vpop.f32.mrb[0].mxu0
        %1587 = vdwg.mxu0
        %v1588 = vsel %vm325, %v1583, 0.0
        %1589 = vadd.xlane.f32.xlu0 %v1588
        %v1590 = vpop.xlane.xlu0 %1589
        %v1591 = vmul.f32 %v1590, %v645
        %v1592 = vsub.f32 %v1583, %v1591
        %v1593 = vmul.f32 %v1592, %v1592
        %v1594 = vsel %vm325, %v1593, 0.0
        %1595 = vadd.xlane.f32.xlu0 %v1594
        %v1596 = vpop.xlane.xlu0 %1595
        %v1597 = vmul.f32 %v1596, %v645
        %v1598 = vadd.f32 %v1597, 1e-05
        %v1599 = vrsqrt.pop %v1598
        %v1600 = vmul.f32 %v1592, %v1599
        %1602 = vrot.lane.b32.xlu0 %v1336, 32
        %v1603 = vpop.permute.xlu0 %1602
        %1606 = vrot.lane.b32.xlu0 %v1468, 64
        %v1607 = vpop.permute.xlu0 %1606
        %1610 = vrot.lane.b32.xlu0 %v1600, 96
        %v1611 = vpop.permute.xlu0 %1610
        %v1613 = vsel %vm325, %v1201, %v1603
        %v1614 = vsel %vm1068, %v1613, %v1607
        %v1615 = vsel %vm1070, %v1614, %v1611
        %1616 = vst [vmem:[%s277 + $0x8] sm:$0xff] %v1615
        %v1617 = vpack.c.bf16 %v375, %v375
        %v1618 = vpack.c.bf16 %v447, %v447
        %v1620 = vsel %vm526, %v1617, 0
        %v1623 = vsel %vm526, %v1618, 0
        %1625 = vmatprep.subr.bf16.mxu0 0
        %1626 = vmatpush1.bf16.xpose.msra.mxu0 %v1623
        %1627 = vmatprep.subr.bf16.mxu0 0
        %1628 = vmatpush1.bf16.xpose.msra.mxu0 0
        %1629 = vmatprep.subr.bf16.mxu0 0
        %1630 = vmatpush1.bf16.xpose.msra.mxu0 0
        %1631 = vmatprep.subr.bf16.mxu0 0
        %1632 = vmatpush1.bf16.xpose.msra.mxu0 0
        %1633 = vmatprep.subr.bf16.mxu0 0
        %1634 = vmatpush1.bf16.xpose.msra.mxu0 0
        %1635 = vmatprep.subr.bf16.mxu0 0
        %1636 = vmatpush1.bf16.xpose.msra.mxu0 0
        %1637 = vmatprep.subr.bf16.mxu0 0
        %1638 = vmatpush1.bf16.xpose.msra.mxu0 0
        %1639 = vmatprep.subr.bf16.mxu0 0
        %1640 = vmatpush1.bf16.xpose.msra.mxu0 0
        %1641 = vmatprep.subr.bf16.mxu0 0
        %1642 = vmatpush1.bf16.xpose.msra.mxu0 0
        %1643 = vmatprep.subr.bf16.mxu0 0
        %1644 = vmatpush1.bf16.xpose.msra.mxu0 0
        %1645 = vmatprep.subr.bf16.mxu0 0
        %1646 = vmatpush1.bf16.xpose.msra.mxu0 0
        %1647 = vmatprep.subr.bf16.mxu0 0
        %1648 = vmatpush1.bf16.xpose.msra.mxu0 0
        %1649 = vmatprep.subr.bf16.mxu0 0
        %1650 = vmatpush1.bf16.xpose.msra.mxu0 0
        %1651 = vmatprep.subr.bf16.mxu0 0
        %1652 = vmatpush1.bf16.xpose.msra.mxu0 0
        %1653 = vmatprep.subr.bf16.mxu0 0
        %1654 = vmatpush1.bf16.xpose.msra.mxu0 0
        %1655 = vmatprep.subr.bf16.mxu0 0
        %1656 = vmatpush1.bf16.xpose.msra.mxu0 0
        %1657 = vmatprep.mubr.bf16.mxu0 0
        %1658 = vmatmul.mubr.bf16.gmra.mrb[0].mxu0 %v1620
        %v1659 = vpop.f32.mrb[0].mxu0
        %v1660 = vadd.f32 0.0, %v1659
        %v1661 = vpop.f32.mrb[0].mxu0
        %v1662 = vpop.f32.mrb[0].mxu0
        %v1663 = vpop.f32.mrb[0].mxu0
        %1664 = vdwg.mxu0
        %v1665 = vmul.f32 %v1660, 0.35355338
        %v1666 = vsel %vm526, %v1665, -inf
        %v1667 = vrot.slane %v1666, 4
        %v1668 = vmax.f32 %v1666, %v1667
        %v1669 = vrot.slane %v1668, 2
        %v1670 = vmax.f32 %v1668, %v1669
        %v1671 = vrot.slane %v1670, 1
        %v1672 = vmax.f32 %v1670, %v1671
        %v1673 = vsub.f32 %v1665, %v1672
        %v1674 = vmul.f32 %v1673, 1.442695
        %v1675 = vpow.pop %v1674
        %v1676 = vsel %vm526, %v1675, 0.0
        %v1677 = vrot.slane %v1676, 4
        %v1678 = vadd.f32 %v1676, %v1677
        %v1679 = vrot.slane %v1678, 2
        %v1680 = vadd.f32 %v1678, %v1679
        %v1681 = vrot.slane %v1680, 1
        %v1682 = vadd.f32 %v1680, %v1681
        %v1683 = vrcp.pop %v1682
        %v1684 = vmul.f32 %v1675, %v1683
        %v1685 = vpack.c.bf16 %v1684, %v1684
        %v1686 = vpack.c.bf16 %v519, %v519
        %v1688 = vsel %vm526, %v1685, 0
        %v1691 = vsel %vm598, %v1686, 0
        %1693 = vmatprep.subr.bf16.mxu0 0
        %1694 = vmatpush1.bf16.msra.mxu0 %v1691
        %1695 = vmatprep.subr.bf16.mxu0 0
        %1696 = vmatpush1.bf16.msra.mxu0 0
        %1697 = vmatprep.subr.bf16.mxu0 0
        %1698 = vmatpush1.bf16.msra.mxu0 0
        %1699 = vmatprep.subr.bf16.mxu0 0
        %1700 = vmatpush1.bf16.msra.mxu0 0
        %1701 = vmatprep.subr.bf16.mxu0 0
        %1702 = vmatpush1.bf16.msra.mxu0 0
        %1703 = vmatprep.subr.bf16.mxu0 0
        %1704 = vmatpush1.bf16.msra.mxu0 0
        %1705 = vmatprep.subr.bf16.mxu0 0
        %1706 = vmatpush1.bf16.msra.mxu0 0
        %1707 = vmatprep.subr.bf16.mxu0 0
        %1708 = vmatpush1.bf16.msra.mxu0 0
        %1709 = vmatprep.subr.bf16.mxu0 0
        %1710 = vmatpush1.bf16.msra.mxu0 0
        %1711 = vmatprep.subr.bf16.mxu0 0
        %1712 = vmatpush1.bf16.msra.mxu0 0
        %1713 = vmatprep.subr.bf16.mxu0 0
        %1714 = vmatpush1.bf16.msra.mxu0 0
        %1715 = vmatprep.subr.bf16.mxu0 0
        %1716 = vmatpush1.bf16.msra.mxu0 0
        %1717 = vmatprep.subr.bf16.mxu0 0
        %1718 = vmatpush1.bf16.msra.mxu0 0
        %1719 = vmatprep.subr.bf16.mxu0 0
        %1720 = vmatpush1.bf16.msra.mxu0 0
        %1721 = vmatprep.subr.bf16.mxu0 0
        %1722 = vmatpush1.bf16.msra.mxu0 0
        %1723 = vmatprep.subr.bf16.mxu0 0
        %1724 = vmatpush1.bf16.msra.mxu0 0
        %1725 = vmatprep.mubr.bf16.mxu0 0
        %1726 = vmatmul.mubr.bf16.gmra.mrb[0].mxu0 %v1688
        %v1727 = vpop.f32.mrb[0].mxu0
        %v1728 = vadd.f32 %v300, %v1727
        %v1729 = vpop.f32.mrb[0].mxu0
        %v1730 = vpop.f32.mrb[0].mxu0
        %v1731 = vpop.f32.mrb[0].mxu0
        %1732 = vdwg.mxu0
        %v1733 = vsel %vm325, %v1728, 0.0
        %1734 = vadd.xlane.f32.xlu0 %v1733
        %v1735 = vpop.xlane.xlu0 %1734
        %v1736 = vmul.f32 %v1735, %v645
        %v1737 = vsub.f32 %v1728, %v1736
        %v1738 = vmul.f32 %v1737, %v1737
        %v1739 = vsel %vm325, %v1738, 0.0
        %1740 = vadd.xlane.f32.xlu0 %v1739
        %v1741 = vpop.xlane.xlu0 %1740
        %v1742 = vmul.f32 %v1741, %v645
        %v1743 = vadd.f32 %v1742, 1e-05
        %v1744 = vrsqrt.pop %v1743
        %v1745 = vmul.f32 %v1737, %v1744
        %1747 = vrot.lane.b32.xlu0 %v1617, 120
        %v1748 = vpop.permute.xlu0 %1747
        %1750 = vrot.lane.b32.xlu0 %v1618, 120
        %v1751 = vpop.permute.xlu0 %1750
        %v1753 = vsel %vm526, %v1748, 0
        %v1756 = vsel %vm526, %v1751, 0
        %1758 = vmatprep.subr.bf16.mxu0 0
        %1759 = vmatpush1.bf16.xpose.msra.mxu0 %v1756
        %1760 = vmatprep.subr.bf16.mxu0 0
        %1761 = vmatpush1.bf16.xpose.msra.mxu0 0
        %1762 = vmatprep.subr.bf16.mxu0 0
        %1763 = vmatpush1.bf16.xpose.msra.mxu0 0
        %1764 = vmatprep.subr.bf16.mxu0 0
        %1765 = vmatpush1.bf16.xpose.msra.mxu0 0
        %1766 = vmatprep.subr.bf16.mxu0 0
        %1767 = vmatpush1.bf16.xpose.msra.mxu0 0
        %1768 = vmatprep.subr.bf16.mxu0 0
        %1769 = vmatpush1.bf16.xpose.msra.mxu0 0
        %1770 = vmatprep.subr.bf16.mxu0 0
        %1771 = vmatpush1.bf16.xpose.msra.mxu0 0
        %1772 = vmatprep.subr.bf16.mxu0 0
        %1773 = vmatpush1.bf16.xpose.msra.mxu0 0
        %1774 = vmatprep.subr.bf16.mxu0 0
        %1775 = vmatpush1.bf16.xpose.msra.mxu0 0
        %1776 = vmatprep.subr.bf16.mxu0 0
        %1777 = vmatpush1.bf16.xpose.msra.mxu0 0
        %1778 = vmatprep.subr.bf16.mxu0 0
        %1779 = vmatpush1.bf16.xpose.msra.mxu0 0
        %1780 = vmatprep.subr.bf16.mxu0 0
        %1781 = vmatpush1.bf16.xpose.msra.mxu0 0
        %1782 = vmatprep.subr.bf16.mxu0 0
        %1783 = vmatpush1.bf16.xpose.msra.mxu0 0
        %1784 = vmatprep.subr.bf16.mxu0 0
        %1785 = vmatpush1.bf16.xpose.msra.mxu0 0
        %1786 = vmatprep.subr.bf16.mxu0 0
        %1787 = vmatpush1.bf16.xpose.msra.mxu0 0
        %1788 = vmatprep.subr.bf16.mxu0 0
        %1789 = vmatpush1.bf16.xpose.msra.mxu0 0
        %1790 = vmatprep.mubr.bf16.mxu0 0
        %1791 = vmatmul.mubr.bf16.gmra.mrb[0].mxu0 %v1753
        %v1792 = vpop.f32.mrb[0].mxu0
        %v1793 = vadd.f32 0.0, %v1792
        %v1794 = vpop.f32.mrb[0].mxu0
        %v1795 = vpop.f32.mrb[0].mxu0
        %v1796 = vpop.f32.mrb[0].mxu0
        %1797 = vdwg.mxu0
        %v1798 = vmul.f32 %v1793, 0.35355338
        %v1799 = vsel %vm526, %v1798, -inf
        %v1800 = vrot.slane %v1799, 4
        %v1801 = vmax.f32 %v1799, %v1800
        %v1802 = vrot.slane %v1801, 2
        %v1803 = vmax.f32 %v1801, %v1802
        %v1804 = vrot.slane %v1803, 1
        %v1805 = vmax.f32 %v1803, %v1804
        %v1806 = vsub.f32 %v1798, %v1805
        %v1807 = vmul.f32 %v1806, 1.442695
        %v1808 = vpow.pop %v1807
        %v1809 = vsel %vm526, %v1808, 0.0
        %v1810 = vrot.slane %v1809, 4
        %v1811 = vadd.f32 %v1809, %v1810
        %v1812 = vrot.slane %v1811, 2
        %v1813 = vadd.f32 %v1811, %v1812
        %v1814 = vrot.slane %v1813, 1
        %v1815 = vadd.f32 %v1813, %v1814
        %v1816 = vrcp.pop %v1815
        %v1817 = vmul.f32 %v1808, %v1816
        %v1818 = vpack.c.bf16 %v1817, %v1817
        %1820 = vrot.lane.b32.xlu0 %v1686, 96
        %v1821 = vpop.permute.xlu0 %1820
        %v1823 = vsel %vm526, %v1818, 0
        %v1826 = vsel %vm598, %v1821, 0
        %1828 = vmatprep.subr.bf16.mxu0 0
        %1829 = vmatpush1.bf16.msra.mxu0 %v1826
        %1830 = vmatprep.subr.bf16.mxu0 0
        %1831 = vmatpush1.bf16.msra.mxu0 0
        %1832 = vmatprep.subr.bf16.mxu0 0
        %1833 = vmatpush1.bf16.msra.mxu0 0
        %1834 = vmatprep.subr.bf16.mxu0 0
        %1835 = vmatpush1.bf16.msra.mxu0 0
        %1836 = vmatprep.subr.bf16.mxu0 0
        %1837 = vmatpush1.bf16.msra.mxu0 0
        %1838 = vmatprep.subr.bf16.mxu0 0
        %1839 = vmatpush1.bf16.msra.mxu0 0
        %1840 = vmatprep.subr.bf16.mxu0 0
        %1841 = vmatpush1.bf16.msra.mxu0 0
        %1842 = vmatprep.subr.bf16.mxu0 0
        %1843 = vmatpush1.bf16.msra.mxu0 0
        %1844 = vmatprep.subr.bf16.mxu0 0
        %1845 = vmatpush1.bf16.msra.mxu0 0
        %1846 = vmatprep.subr.bf16.mxu0 0
        %1847 = vmatpush1.bf16.msra.mxu0 0
        %1848 = vmatprep.subr.bf16.mxu0 0
        %1849 = vmatpush1.bf16.msra.mxu0 0
        %1850 = vmatprep.subr.bf16.mxu0 0
        %1851 = vmatpush1.bf16.msra.mxu0 0
        %1852 = vmatprep.subr.bf16.mxu0 0
        %1853 = vmatpush1.bf16.msra.mxu0 0
        %1854 = vmatprep.subr.bf16.mxu0 0
        %1855 = vmatpush1.bf16.msra.mxu0 0
        %1856 = vmatprep.subr.bf16.mxu0 0
        %1857 = vmatpush1.bf16.msra.mxu0 0
        %1858 = vmatprep.subr.bf16.mxu0 0
        %1859 = vmatpush1.bf16.msra.mxu0 0
        %1860 = vmatprep.mubr.bf16.mxu0 0
        %1861 = vmatmul.mubr.bf16.gmra.mrb[0].mxu0 %v1823
        %v1862 = vpop.f32.mrb[0].mxu0
        %v1863 = vadd.f32 %v300, %v1862
        %v1864 = vpop.f32.mrb[0].mxu0
        %v1865 = vpop.f32.mrb[0].mxu0
        %v1866 = vpop.f32.mrb[0].mxu0
        %1867 = vdwg.mxu0
        %v1868 = vsel %vm325, %v1863, 0.0
        %1869 = vadd.xlane.f32.xlu0 %v1868
        %v1870 = vpop.xlane.xlu0 %1869
        %v1871 = vmul.f32 %v1870, %v645
        %v1872 = vsub.f32 %v1863, %v1871
        %v1873 = vmul.f32 %v1872, %v1872
        %v1874 = vsel %vm325, %v1873, 0.0
        %1875 = vadd.xlane.f32.xlu0 %v1874
        %v1876 = vpop.xlane.xlu0 %1875
        %v1877 = vmul.f32 %v1876, %v645
        %v1878 = vadd.f32 %v1877, 1e-05
        %v1879 = vrsqrt.pop %v1878
        %v1880 = vmul.f32 %v1872, %v1879
        %1881 = vrot.lane.b32.xlu0 %v1617, 112
        %v1882 = vpop.permute.xlu0 %1881
        %1883 = vrot.lane.b32.xlu0 %v1618, 112
        %v1884 = vpop.permute.xlu0 %1883
        %v1886 = vsel %vm526, %v1882, 0
        %v1889 = vsel %vm526, %v1884, 0
        %1891 = vmatprep.subr.bf16.mxu0 0
        %1892 = vmatpush1.bf16.xpose.msra.mxu0 %v1889
        %1893 = vmatprep.subr.bf16.mxu0 0
        %1894 = vmatpush1.bf16.xpose.msra.mxu0 0
        %1895 = vmatprep.subr.bf16.mxu0 0
        %1896 = vmatpush1.bf16.xpose.msra.mxu0 0
        %1897 = vmatprep.subr.bf16.mxu0 0
        %1898 = vmatpush1.bf16.xpose.msra.mxu0 0
        %1899 = vmatprep.subr.bf16.mxu0 0
        %1900 = vmatpush1.bf16.xpose.msra.mxu0 0
        %1901 = vmatprep.subr.bf16.mxu0 0
        %1902 = vmatpush1.bf16.xpose.msra.mxu0 0
        %1903 = vmatprep.subr.bf16.mxu0 0
        %1904 = vmatpush1.bf16.xpose.msra.mxu0 0
        %1905 = vmatprep.subr.bf16.mxu0 0
        %1906 = vmatpush1.bf16.xpose.msra.mxu0 0
        %1907 = vmatprep.subr.bf16.mxu0 0
        %1908 = vmatpush1.bf16.xpose.msra.mxu0 0
        %1909 = vmatprep.subr.bf16.mxu0 0
        %1910 = vmatpush1.bf16.xpose.msra.mxu0 0
        %1911 = vmatprep.subr.bf16.mxu0 0
        %1912 = vmatpush1.bf16.xpose.msra.mxu0 0
        %1913 = vmatprep.subr.bf16.mxu0 0
        %1914 = vmatpush1.bf16.xpose.msra.mxu0 0
        %1915 = vmatprep.subr.bf16.mxu0 0
        %1916 = vmatpush1.bf16.xpose.msra.mxu0 0
        %1917 = vmatprep.subr.bf16.mxu0 0
        %1918 = vmatpush1.bf16.xpose.msra.mxu0 0
        %1919 = vmatprep.subr.bf16.mxu0 0
        %1920 = vmatpush1.bf16.xpose.msra.mxu0 0
        %1921 = vmatprep.subr.bf16.mxu0 0
        %1922 = vmatpush1.bf16.xpose.msra.mxu0 0
        %1923 = vmatprep.mubr.bf16.mxu0 0
        %1924 = vmatmul.mubr.bf16.gmra.mrb[0].mxu0 %v1886
        %v1925 = vpop.f32.mrb[0].mxu0
        %v1926 = vadd.f32 0.0, %v1925
        %v1927 = vpop.f32.mrb[0].mxu0
        %v1928 = vpop.f32.mrb[0].mxu0
        %v1929 = vpop.f32.mrb[0].mxu0
        %1930 = vdwg.mxu0
        %v1931 = vmul.f32 %v1926, 0.35355338
        %v1932 = vsel %vm526, %v1931, -inf
        %v1933 = vrot.slane %v1932, 4
        %v1934 = vmax.f32 %v1932, %v1933
        %v1935 = vrot.slane %v1934, 2
        %v1936 = vmax.f32 %v1934, %v1935
        %v1937 = vrot.slane %v1936, 1
        %v1938 = vmax.f32 %v1936, %v1937
        %v1939 = vsub.f32 %v1931, %v1938
        %v1940 = vmul.f32 %v1939, 1.442695
        %v1941 = vpow.pop %v1940
        %v1942 = vsel %vm526, %v1941, 0.0
        %v1943 = vrot.slane %v1942, 4
        %v1944 = vadd.f32 %v1942, %v1943
        %v1945 = vrot.slane %v1944, 2
        %v1946 = vadd.f32 %v1944, %v1945
        %v1947 = vrot.slane %v1946, 1
        %v1948 = vadd.f32 %v1946, %v1947
        %v1949 = vrcp.pop %v1948
        %v1950 = vmul.f32 %v1941, %v1949
        %v1951 = vpack.c.bf16 %v1950, %v1950
        %1952 = vrot.lane.b32.xlu0 %v1686, 64
        %v1953 = vpop.permute.xlu0 %1952
        %v1955 = vsel %vm526, %v1951, 0
        %v1958 = vsel %vm598, %v1953, 0
        %1960 = vmatprep.subr.bf16.mxu0 0
        %1961 = vmatpush1.bf16.msra.mxu0 %v1958
        %1962 = vmatprep.subr.bf16.mxu0 0
        %1963 = vmatpush1.bf16.msra.mxu0 0
        %1964 = vmatprep.subr.bf16.mxu0 0
        %1965 = vmatpush1.bf16.msra.mxu0 0
        %1966 = vmatprep.subr.bf16.mxu0 0
        %1967 = vmatpush1.bf16.msra.mxu0 0
        %1968 = vmatprep.subr.bf16.mxu0 0
        %1969 = vmatpush1.bf16.msra.mxu0 0
        %1970 = vmatprep.subr.bf16.mxu0 0
        %1971 = vmatpush1.bf16.msra.mxu0 0
        %1972 = vmatprep.subr.bf16.mxu0 0
        %1973 = vmatpush1.bf16.msra.mxu0 0
        %1974 = vmatprep.subr.bf16.mxu0 0
        %1975 = vmatpush1.bf16.msra.mxu0 0
        %1976 = vmatprep.subr.bf16.mxu0 0
        %1977 = vmatpush1.bf16.msra.mxu0 0
        %1978 = vmatprep.subr.bf16.mxu0 0
        %1979 = vmatpush1.bf16.msra.mxu0 0
        %1980 = vmatprep.subr.bf16.mxu0 0
        %1981 = vmatpush1.bf16.msra.mxu0 0
        %1982 = vmatprep.subr.bf16.mxu0 0
        %1983 = vmatpush1.bf16.msra.mxu0 0
        %1984 = vmatprep.subr.bf16.mxu0 0
        %1985 = vmatpush1.bf16.msra.mxu0 0
        %1986 = vmatprep.subr.bf16.mxu0 0
        %1987 = vmatpush1.bf16.msra.mxu0 0
        %1988 = vmatprep.subr.bf16.mxu0 0
        %1989 = vmatpush1.bf16.msra.mxu0 0
        %1990 = vmatprep.subr.bf16.mxu0 0
        %1991 = vmatpush1.bf16.msra.mxu0 0
        %1992 = vmatprep.mubr.bf16.mxu0 0
        %1993 = vmatmul.mubr.bf16.gmra.mrb[0].mxu0 %v1955
        %v1994 = vpop.f32.mrb[0].mxu0
        %v1995 = vadd.f32 %v300, %v1994
        %v1996 = vpop.f32.mrb[0].mxu0
        %v1997 = vpop.f32.mrb[0].mxu0
        %v1998 = vpop.f32.mrb[0].mxu0
        %1999 = vdwg.mxu0
        %v2000 = vsel %vm325, %v1995, 0.0
        %2001 = vadd.xlane.f32.xlu0 %v2000
        %v2002 = vpop.xlane.xlu0 %2001
        %v2003 = vmul.f32 %v2002, %v645
        %v2004 = vsub.f32 %v1995, %v2003
        %v2005 = vmul.f32 %v2004, %v2004
        %v2006 = vsel %vm325, %v2005, 0.0
        %2007 = vadd.xlane.f32.xlu0 %v2006
        %v2008 = vpop.xlane.xlu0 %2007
        %v2009 = vmul.f32 %v2008, %v645
        %v2010 = vadd.f32 %v2009, 1e-05
        %v2011 = vrsqrt.pop %v2010
        %v2012 = vmul.f32 %v2004, %v2011
        %2013 = vrot.lane.b32.xlu0 %v1617, 104
        %v2014 = vpop.permute.xlu0 %2013
        %2015 = vrot.lane.b32.xlu0 %v1618, 104
        %v2016 = vpop.permute.xlu0 %2015
        %v2018 = vsel %vm526, %v2014, 0
        %v2021 = vsel %vm526, %v2016, 0
        %2023 = vmatprep.subr.bf16.mxu0 0
        %2024 = vmatpush1.bf16.xpose.msra.mxu0 %v2021
        %2025 = vmatprep.subr.bf16.mxu0 0
        %2026 = vmatpush1.bf16.xpose.msra.mxu0 0
        %2027 = vmatprep.subr.bf16.mxu0 0
        %2028 = vmatpush1.bf16.xpose.msra.mxu0 0
        %2029 = vmatprep.subr.bf16.mxu0 0
        %2030 = vmatpush1.bf16.xpose.msra.mxu0 0
        %2031 = vmatprep.subr.bf16.mxu0 0
        %2032 = vmatpush1.bf16.xpose.msra.mxu0 0
        %2033 = vmatprep.subr.bf16.mxu0 0
        %2034 = vmatpush1.bf16.xpose.msra.mxu0 0
        %2035 = vmatprep.subr.bf16.mxu0 0
        %2036 = vmatpush1.bf16.xpose.msra.mxu0 0
        %2037 = vmatprep.subr.bf16.mxu0 0
        %2038 = vmatpush1.bf16.xpose.msra.mxu0 0
        %2039 = vmatprep.subr.bf16.mxu0 0
        %2040 = vmatpush1.bf16.xpose.msra.mxu0 0
        %2041 = vmatprep.subr.bf16.mxu0 0
        %2042 = vmatpush1.bf16.xpose.msra.mxu0 0
        %2043 = vmatprep.subr.bf16.mxu0 0
        %2044 = vmatpush1.bf16.xpose.msra.mxu0 0
        %2045 = vmatprep.subr.bf16.mxu0 0
        %2046 = vmatpush1.bf16.xpose.msra.mxu0 0
        %2047 = vmatprep.subr.bf16.mxu0 0
        %2048 = vmatpush1.bf16.xpose.msra.mxu0 0
        %2049 = vmatprep.subr.bf16.mxu0 0
        %2050 = vmatpush1.bf16.xpose.msra.mxu0 0
        %2051 = vmatprep.subr.bf16.mxu0 0
        %2052 = vmatpush1.bf16.xpose.msra.mxu0 0
        %2053 = vmatprep.subr.bf16.mxu0 0
        %2054 = vmatpush1.bf16.xpose.msra.mxu0 0
        %2055 = vmatprep.mubr.bf16.mxu0 0
        %2056 = vmatmul.mubr.bf16.gmra.mrb[0].mxu0 %v2018
        %v2057 = vpop.f32.mrb[0].mxu0
        %v2058 = vadd.f32 0.0, %v2057
        %v2059 = vpop.f32.mrb[0].mxu0
        %v2060 = vpop.f32.mrb[0].mxu0
        %v2061 = vpop.f32.mrb[0].mxu0
        %2062 = vdwg.mxu0
        %v2063 = vmul.f32 %v2058, 0.35355338
        %v2064 = vsel %vm526, %v2063, -inf
        %v2065 = vrot.slane %v2064, 4
        %v2066 = vmax.f32 %v2064, %v2065
        %v2067 = vrot.slane %v2066, 2
        %v2068 = vmax.f32 %v2066, %v2067
        %v2069 = vrot.slane %v2068, 1
        %v2070 = vmax.f32 %v2068, %v2069
        %v2071 = vsub.f32 %v2063, %v2070
        %v2072 = vmul.f32 %v2071, 1.442695
        %v2073 = vpow.pop %v2072
        %v2074 = vsel %vm526, %v2073, 0.0
        %v2075 = vrot.slane %v2074, 4
        %v2076 = vadd.f32 %v2074, %v2075
        %v2077 = vrot.slane %v2076, 2
        %v2078 = vadd.f32 %v2076, %v2077
        %v2079 = vrot.slane %v2078, 1
        %v2080 = vadd.f32 %v2078, %v2079
        %v2081 = vrcp.pop %v2080
        %v2082 = vmul.f32 %v2073, %v2081
        %v2083 = vpack.c.bf16 %v2082, %v2082
        %2084 = vrot.lane.b32.xlu0 %v1686, 32
        %v2085 = vpop.permute.xlu0 %2084
        %v2087 = vsel %vm526, %v2083, 0
        %v2090 = vsel %vm598, %v2085, 0
        %2092 = vmatprep.subr.bf16.mxu0 0
        %2093 = vmatpush1.bf16.msra.mxu0 %v2090
        %2094 = vmatprep.subr.bf16.mxu0 0
        %2095 = vmatpush1.bf16.msra.mxu0 0
        %2096 = vmatprep.subr.bf16.mxu0 0
        %2097 = vmatpush1.bf16.msra.mxu0 0
        %2098 = vmatprep.subr.bf16.mxu0 0
        %2099 = vmatpush1.bf16.msra.mxu0 0
        %2100 = vmatprep.subr.bf16.mxu0 0
        %2101 = vmatpush1.bf16.msra.mxu0 0
        %2102 = vmatprep.subr.bf16.mxu0 0
        %2103 = vmatpush1.bf16.msra.mxu0 0
        %2104 = vmatprep.subr.bf16.mxu0 0
        %2105 = vmatpush1.bf16.msra.mxu0 0
        %2106 = vmatprep.subr.bf16.mxu0 0
        %2107 = vmatpush1.bf16.msra.mxu0 0
        %2108 = vmatprep.subr.bf16.mxu0 0
        %2109 = vmatpush1.bf16.msra.mxu0 0
        %2110 = vmatprep.subr.bf16.mxu0 0
        %2111 = vmatpush1.bf16.msra.mxu0 0
        %2112 = vmatprep.subr.bf16.mxu0 0
        %2113 = vmatpush1.bf16.msra.mxu0 0
        %2114 = vmatprep.subr.bf16.mxu0 0
        %2115 = vmatpush1.bf16.msra.mxu0 0
        %2116 = vmatprep.subr.bf16.mxu0 0
        %2117 = vmatpush1.bf16.msra.mxu0 0
        %2118 = vmatprep.subr.bf16.mxu0 0
        %2119 = vmatpush1.bf16.msra.mxu0 0
        %2120 = vmatprep.subr.bf16.mxu0 0
        %2121 = vmatpush1.bf16.msra.mxu0 0
        %2122 = vmatprep.subr.bf16.mxu0 0
        %2123 = vmatpush1.bf16.msra.mxu0 0
        %2124 = vmatprep.mubr.bf16.mxu0 0
        %2125 = vmatmul.mubr.bf16.gmra.mrb[0].mxu0 %v2087
        %v2126 = vpop.f32.mrb[0].mxu0
        %v2127 = vadd.f32 %v300, %v2126
        %v2128 = vpop.f32.mrb[0].mxu0
        %v2129 = vpop.f32.mrb[0].mxu0
        %v2130 = vpop.f32.mrb[0].mxu0
        %2131 = vdwg.mxu0
        %v2132 = vsel %vm325, %v2127, 0.0
        %2133 = vadd.xlane.f32.xlu0 %v2132
        %v2134 = vpop.xlane.xlu0 %2133
        %v2135 = vmul.f32 %v2134, %v645
        %v2136 = vsub.f32 %v2127, %v2135
        %v2137 = vmul.f32 %v2136, %v2136
        %v2138 = vsel %vm325, %v2137, 0.0
        %2139 = vadd.xlane.f32.xlu0 %v2138
        %v2140 = vpop.xlane.xlu0 %2139
        %v2141 = vmul.f32 %v2140, %v645
        %v2142 = vadd.f32 %v2141, 1e-05
        %v2143 = vrsqrt.pop %v2142
        %v2144 = vmul.f32 %v2136, %v2143
        %2146 = vrot.lane.b32.xlu0 %v1880, 32
        %v2147 = vpop.permute.xlu0 %2146
        %2150 = vrot.lane.b32.xlu0 %v2012, 64
        %v2151 = vpop.permute.xlu0 %2150
        %2154 = vrot.lane.b32.xlu0 %v2144, 96
        %v2155 = vpop.permute.xlu0 %2154
        %v2157 = vsel %vm325, %v1745, %v2147
        %v2158 = vsel %vm1068, %v2157, %v2151
        %v2159 = vsel %vm1070, %v2158, %v2155
        %2160 = vst [vmem:[%s277 + $0x10] sm:$0xff] %v2159
        %s2161 = sand.u32 %s169, 1
        %s2162 = scalar_lea.sflag [#allocation3], %s2161
        %s2163 = sand.u32 %s169, 1
        %s2164 = smul.addr %s2163, 24
        %s2165 = scalar_lea.vmem [#allocation2], %s2164
        // Predicated region
        $region45: #{tpu_custom_call.1} parent=43 // pred_check
          %p2166 = pneg %p179
        $region46: #{tpu_custom_call.1} parent=43 // pred_check_branch
          %2168 = sbr.rel (%p2166) target = $region48
        $region47: #{tpu_custom_call.1} parent=43 // pred_region
          %s2169 = smul.u32 3, %s20
          %s2171 = ssub.s32 384, 384
          %2172 = vsyncadd %s2162, %s2171
          %s2173 = smul.addr %s2169, 128
          %s2174 = scalar_lea.hbm %s6, %s2173
          %s2175 = sshll.u32 %s2165, 4
          %s2176 = int_to_ptr.vmem [resolvable:$true] %s2175
          %2181 = dma.vmem_to_hbm [thread:$0]  %s2176, 384, %s2174, %s2162, 128, 128, 8
        $region48: #{tpu_custom_call.1} parent=43 // pred_fallthru
          _
      $region44: #{tpu_custom_call.1} parent=5 // pred_fallthru
        _
      %p2182 = scmp.le.s32.totalorder 2, %s15
      // Predicated region
      $region49: #{tpu_custom_call.1} parent=5 // pred_check
        %p2183 = pneg %p2182
      $region50: #{tpu_custom_call.1} parent=5 // pred_check_branch
        %2185 = sbr.rel (%p2183) target = $region52
      $region51: #{tpu_custom_call.1} parent=5 // pred_region
        %s2186 = ssub.s32 %s15, 2
        // Predicated region
        $region53: #{tpu_custom_call.1} parent=51 // pred_check
          %p2187 = pneg %p185
        $region54: #{tpu_custom_call.1} parent=51 // pred_check_branch
          %2189 = sbr.rel (%p2187) target = $region56
        $region55: #{tpu_custom_call.1} parent=51 // pred_region
          %s2190 = sand.u32 %s170, 1
          %s2191 = scalar_lea.sflag [#allocation3], %s2190
          %s2192 = sand.u32 %s170, 1
          %s2193 = smul.addr %s2192, 24
          %s2194 = scalar_lea.vmem [#allocation2], %s2193
          %2195 = dma.done %s2191, 384
        $region56: #{tpu_custom_call.1} parent=51 // pred_fallthru
          _
      $region52: #{tpu_custom_call.1} parent=5 // pred_fallthru
        _
    $region6: #{tpu_custom_call.1} parent=1 // loop_footer
      %s19 = sadd.s32 1, %s15
    $region7: #{tpu_custom_call.1} parent=1 // loop_footer_branch
      %14 = sbr.rel target = $region3
    $region8: #{tpu_custom_call.1} parent=1 // loop_exit
      _
    %2196 = vsyncpa [#allocation3], 1
    %s2197 = scalar_lea.sflag [#allocation3], 1
    %2198 = vsyncpa %s2197, 1

</llo_original>
